<compile_context>
chip_gen: v7x
topology: tpu7x:2x2x1
jax: 0.10.0
libtpu: 0.0.40
codegen_flags: <defaults>
</compile_context>

<pallas_src>
import functools
import math

import jax
import jax.numpy as jnp
from jax.experimental import pallas as pl
from jax.experimental.pallas import tpu as pltpu


_VMEM_LIMIT = 64 * 1024 * 1024  # explicit scoped-VMEM budget (>= defaults on all gens)


def _divisor_tile(total, target):
    """Largest tile <= target that divides total (avoids uninitialized tail tiles)."""
    t = max(1, min(target, total))
    while total % t:
        t -= 1
    return t


# ----------------------------------------------------------------------------
# Kernel 1: fused Q/K/V projections (row-tiled), scale folded into Q.
#   q = (xq @ Wq + bq) / sqrt(d_k) ;  k = xk @ Wk + bk ;  v = xv @ Wv + bv
# Weights arrive already in bf16 (cast once in the wrapper) and stay resident
# in VMEM via constant index_map.
# ----------------------------------------------------------------------------
def qkv_proj_kernel(xq_ref, xk_ref, xv_ref, wq_ref, wk_ref, wv_ref,
                    bq_ref, bk_ref, bv_ref, qo_ref, ko_ref, vo_ref,
                    *, inv_scale):
    xq = xq_ref[...].astype(jnp.bfloat16)
    xk = xk_ref[...].astype(jnp.bfloat16)
    xv = xv_ref[...].astype(jnp.bfloat16)

    q = jnp.dot(xq, wq_ref[...], preferred_element_type=jnp.float32) + bq_ref[...]
    k = jnp.dot(xk, wk_ref[...], preferred_element_type=jnp.float32) + bk_ref[...]
    v = jnp.dot(xv, wv_ref[...], preferred_element_type=jnp.float32) + bv_ref[...]

    qo_ref[...] = (q * inv_scale).astype(qo_ref.dtype)   # exact for d_k=64 (0.125)
    ko_ref[...] = k.astype(ko_ref.dtype)
    vo_ref[...] = v.astype(vo_ref.dtype)


def qkv_projection(xq, xk, xv, wq, wk, wv, bq, bk, bv, d_k, row_tile):
    n, d_model = xq.shape
    hdk = wq.shape[1]
    hdv = wv.shape[1]
    grid = (pl.cdiv(n, row_tile),)

    def rows(cols):
        return pl.BlockSpec((row_tile, cols), lambda i: (i, 0))

    def resident(r, c):
        return pl.BlockSpec((r, c), lambda i: (0, 0))

    kern = functools.partial(qkv_proj_kernel,
                             inv_scale=1.0 / math.sqrt(float(d_k)))
    return pl.pallas_call(
        kern,
        grid=grid,
        in_specs=[
            rows(d_model), rows(d_model), rows(d_model),
            resident(d_model, hdk), resident(d_model, hdk), resident(d_model, hdv),
            resident(1, hdk), resident(1, hdk), resident(1, hdv),
        ],
        out_specs=(rows(hdk), rows(hdk), rows(hdv)),
        out_shape=(
            jax.ShapeDtypeStruct((n, hdk), jnp.bfloat16),
            jax.ShapeDtypeStruct((n, hdk), jnp.bfloat16),
            jax.ShapeDtypeStruct((n, hdv), jnp.bfloat16),
        ),
        compiler_params=pltpu.CompilerParams(
            dimension_semantics=("parallel",),
            vmem_limit_bytes=_VMEM_LIMIT),
    )(xq, xk, xv, wq, wk, wv, bq, bk, bv)


# ----------------------------------------------------------------------------
# Kernel 2: scaled dot-product attention.
#   Grid (batch, q_tile). Inputs are head-major (B, H, S, d): each per-head
#   view q_ref[h]/k_ref[h]/v_ref[h] has full (S, d) trailing dims (cheap
#   leading-dim offset views, no lane slicing). Q is pre-scaled by 1/sqrt(d_k).
#   Softmax math in f32; attn stored in attn_ref.dtype (bf16 by default);
#   context accumulated per head and stored once, lane-dense, as (TQ, H*d_v).
# ----------------------------------------------------------------------------
def attn_kernel(q_ref, k_ref, v_ref, m_ref, ctx_ref, attn_ref):
    n_heads = q_ref.shape[0]
    mask = m_ref[...]                                # (TQ, S) bool, True => masked
    ctx_parts = []
    for h in range(n_heads):                         # static loop -> offset views
        q = q_ref[h]                                 # (TQ, d_k) bf16 (pre-scaled)
        k = k_ref[h]                                 # (S,  d_k) bf16
        v = v_ref[h]                                 # (S,  d_v) bf16

        s = jax.lax.dot_general(                     # q @ k.T -> (TQ, S), f32 acc
            q, k, (((1,), (1,)), ((), ())),
            preferred_element_type=jnp.float32)
        s = jnp.where(mask, jnp.float32(-1e9), s)
        s = s - jnp.max(s, axis=-1, keepdims=True)
        e = jnp.exp(s)
        p = e * pl.reciprocal(jnp.sum(e, axis=-1, keepdims=True), approx=True)

        p = p.astype(attn_ref.dtype)                 # bf16 store: halves HBM write
        attn_ref[h] = p
        ctx_parts.append(jnp.dot(p.astype(v.dtype), v,
                                 preferred_element_type=jnp.float32))

    # single lane-dense (TQ, H*d_v) store instead of H masked 64-lane stores
    ctx_ref[...] = jnp.concatenate(ctx_parts, axis=-1).astype(ctx_ref.dtype)


def scaled_dot_product_attention(q4, k4, v4, mask, q_tile, attn_dtype):
    B, H, S, d_k = q4.shape
    d_v = v4.shape[-1]
    grid = (B, pl.cdiv(S, q_tile))
    ctx, attn = pl.pallas_call(
        attn_kernel,
        grid=grid,
        in_specs=[
            pl.BlockSpec((None, H, q_tile, d_k), lambda b, qi: (b, 0, qi, 0)),
            pl.BlockSpec((None, H, S, d_k), lambda b, qi: (b, 0, 0, 0)),
            pl.BlockSpec((None, H, S, d_v), lambda b, qi: (b, 0, 0, 0)),
            pl.BlockSpec((None, q_tile, S), lambda b, qi: (b, qi, 0)),
        ],
        out_specs=(
            pl.BlockSpec((None, q_tile, H * d_v), lambda b, qi: (b, qi, 0)),
            pl.BlockSpec((None, H, q_tile, S), lambda b, qi: (b, 0, qi, 0)),
        ),
        out_shape=(
            jax.ShapeDtypeStruct((B, S, H * d_v), jnp.bfloat16),
            jax.ShapeDtypeStruct((B, H, S, S), attn_dtype),
        ),
        compiler_params=pltpu.CompilerParams(
            dimension_semantics=("parallel", "parallel"),
            vmem_limit_bytes=_VMEM_LIMIT),
    )(q4, k4, v4, mask)
    return ctx, attn


# ----------------------------------------------------------------------------
# Kernel 3: output projection + residual add + LayerNorm (eps=1e-5, biased var)
# ----------------------------------------------------------------------------
def out_ln_kernel(ctx_ref, res_ref, wo_ref, bo_ref, g_ref, beta_ref, o_ref):
    y = jnp.dot(ctx_ref[...], wo_ref[...],
                preferred_element_type=jnp.float32) + bo_ref[...]
    y = y + res_ref[...]
    mu = jnp.mean(y, axis=-1, keepdims=True)
    var = jnp.mean(jnp.square(y - mu), axis=-1, keepdims=True)
    yn = (y - mu) * jax.lax.rsqrt(var + 1e-5)
    o_ref[...] = (yn * g_ref[...] + beta_ref[...]).astype(o_ref.dtype)


def out_proj_layernorm(ctx2d, res2d, w_o, b_o, gamma, beta, row_tile):
    n, hdv = ctx2d.shape
    d_model = w_o.shape[1]
    grid = (pl.cdiv(n, row_tile),)
    return pl.pallas_call(
        out_ln_kernel,
        grid=grid,
        in_specs=[
            pl.BlockSpec((row_tile, hdv), lambda i: (i, 0)),
            pl.BlockSpec((row_tile, d_model), lambda i: (i, 0)),
            pl.BlockSpec((hdv, d_model), lambda i: (0, 0)),
            pl.BlockSpec((1, d_model), lambda i: (0, 0)),
            pl.BlockSpec((1, d_model), lambda i: (0, 0)),
            pl.BlockSpec((1, d_model), lambda i: (0, 0)),
        ],
        out_specs=pl.BlockSpec((row_tile, d_model), lambda i: (i, 0)),
        out_shape=jax.ShapeDtypeStruct((n, d_model), jnp.float32),
        compiler_params=pltpu.CompilerParams(
            dimension_semantics=("parallel",),
            vmem_limit_bytes=_VMEM_LIMIT),
    )(ctx2d, res2d, w_o, b_o, gamma, beta)


# ----------------------------------------------------------------------------
# Full MultiHeadAttention forward
# ----------------------------------------------------------------------------
def multi_head_attention(Q, K, V, attn_mask, params, *, row_tile=512, q_tile=256,
                         attn_dtype=jnp.bfloat16):
    """Q, K, V: (B, S, d_model); attn_mask: (B, S, S), True/!=0 => masked.
    Returns (output (B,S,d_model) f32, attn (B,H,S,S) attn_dtype)."""
    B, S, d_model = Q.shape
    H, d_k, d_v = params["n_heads"], params["d_k"], params["d_v"]
    n = B * S
    row_tile = _divisor_tile(n, row_tile)
    q_tile = _divisor_tile(S, q_tile)

    # one-time bf16 weight casts (half-size resident VMEM copies, no per-step recast)
    wq = params["w_q"].astype(jnp.bfloat16)
    wk = params["w_k"].astype(jnp.bfloat16)
    wv = params["w_v"].astype(jnp.bfloat16)
    wo = params["w_o"].astype(jnp.bfloat16)

    q2, k2, v2 = qkv_projection(
        Q.reshape(n, d_model), K.reshape(n, d_model), V.reshape(n, d_model),
        wq, wk, wv, params["b_q"], params["b_k"], params["b_v"], d_k, row_tile)

    # head-major (B, H, S, d) layout: per-head kernel views cover full (S, d)
    # trailing dims (no 64-lane slices). Pure layout plumbing in XLA.
    q4 = q2.reshape(B, S, H, d_k).transpose(0, 2, 1, 3)
    k4 = k2.reshape(B, S, H, d_k).transpose(0, 2, 1, 3)
    v4 = v2.reshape(B, S, H, d_v).transpose(0, 2, 1, 3)

    mask = attn_mask if attn_mask.dtype == jnp.bool_ else (attn_mask != 0)

    ctx, attn = scaled_dot_product_attention(q4, k4, v4, mask, q_tile, attn_dtype)

    out2d = out_proj_layernorm(
        ctx.reshape(n, H * d_v), Q.reshape(n, d_model),
        wo, params["b_o"], params["ln_gamma"], params["ln_beta"], row_tile)
    return out2d.reshape(B, S, d_model), attn


# ----------------------------------------------------------------------------
# Deterministic parameter construction (synthetic; shapes from __init__/forward)
# ----------------------------------------------------------------------------
def make_params(key, n_heads, d_model, d_k):
    d_v = d_k
    keys = jax.random.split(key, 8)
    s = 0.02

    def w(k, shape):
        return jax.random.normal(k, shape, dtype=jnp.float32) * s

    return {
        "n_heads": n_heads, "d_k": d_k, "d_v": d_v,
        # stored as (in, out) so kernels compute x @ W directly
        "w_q": w(keys[0], (d_model, n_heads * d_k)),
        "b_q": w(keys[1], (1, n_heads * d_k)),
        "w_k": w(keys[2], (d_model, n_heads * d_k)),
        "b_k": w(keys[3], (1, n_heads * d_k)),
        "w_v": w(keys[4], (d_model, n_heads * d_v)),
        "b_v": w(keys[5], (1, n_heads * d_v)),
        # output Linear created inside forward() in the PyTorch module
        "w_o": w(keys[6], (n_heads * d_v, d_model)),
        "b_o": w(keys[7], (1, d_model)),
        # LayerNorm created inside forward(): default gamma=1, beta=0
        "ln_gamma": jnp.ones((1, d_model), jnp.float32),
        "ln_beta": jnp.zeros((1, d_model), jnp.float32),
    }


# ----------------------------------------------------------------------------
# Pure-JAX reference (f32) matching the PyTorch module's forward
# ----------------------------------------------------------------------------
def reference_mha(Q, K, V, attn_mask, params):
    B, S, d_model = Q.shape
    H, d_k, d_v = params["n_heads"], params["d_k"], params["d_v"]

    def proj(x, w, b):
        y = x.reshape(B * S, d_model) @ w + b
        return y.reshape(B, S, H, -1).transpose(0, 2, 1, 3)

    q = proj(Q, params["w_q"], params["b_q"])
    k = proj(K, params["w_k"], params["b_k"])
    v = proj(V, params["w_v"], params["b_v"])
    scores = jnp.einsum("bhqd,bhkd->bhqk", q, k) / math.sqrt(float(d_k))
    scores = jnp.where(attn_mask[:, None, :, :], jnp.float32(-1e9), scores)
    attn = jax.nn.softmax(scores, axis=-1)
    ctx = jnp.einsum("bhqk,bhkd->bhqd", attn, v)
    ctx = ctx.transpose(0, 2, 1, 3).reshape(B * S, H * d_v)
    y = ctx @ params["w_o"] + params["b_o"] + Q.reshape(B * S, d_model)
    mu = y.mean(-1, keepdims=True)
    var = jnp.mean(jnp.square(y - mu), -1, keepdims=True)
    out = (y - mu) * jax.lax.rsqrt(var + 1e-5) * params["ln_gamma"] + params["ln_beta"]
    return out.reshape(B, S, d_model), attn


if __name__ == "__main__":
    # module's real head/width config at a small sequence length
    B, S = 2, 16
    n_heads, d_model, d_k = 12, 768, 64

    key = jax.random.PRNGKey(0)
    kq, kk, kv, kp = jax.random.split(key, 4)

    Q = jax.random.normal(kq, (B, S, d_model), dtype=jnp.float32)
    K = jax.random.normal(kk, (B, S, d_model), dtype=jnp.float32)
    V = jax.random.normal(kv, (B, S, d_model), dtype=jnp.float32)

    # causal-style mask: True => masked
    attn_mask = jnp.repeat(jnp.triu(jnp.ones((S, S), dtype=bool), k=1)[None], B, axis=0)

    params = make_params(kp, n_heads, d_model, d_k)

    out, attn = multi_head_attention(Q, K, V, attn_mask, params)
    jax.block_until_ready(out)
    jax.block_until_ready(attn)

    out_ref, attn_ref = reference_mha(Q, K, V, attn_mask, params)
    assert out.shape == (B, S, d_model) and out.dtype == jnp.float32
    assert attn.shape == (B, n_heads, S, S)
    # tolerances account for bf16 MXU matmuls, bf16 attn storage, approx EUP reciprocal
    assert jnp.allclose(out, out_ref, atol=5e-2, rtol=5e-2)
    assert jnp.allclose(attn.astype(jnp.float32), attn_ref, atol=2e-2, rtol=5e-2)
    print("KERNEL_OK")
</pallas_src>

<mosaic_0001>
module attributes {stable_mosaic.version = 11 : i64} {
  func.func @qkv_proj_kernel(%arg0: i32, %arg1: memref<32x768xf32, #tpu.memory_space<vmem>>, %arg2: memref<32x768xf32, #tpu.memory_space<vmem>>, %arg3: memref<32x768xf32, #tpu.memory_space<vmem>>, %arg4: memref<768x768xbf16, #tpu.memory_space<vmem>>, %arg5: memref<768x768xbf16, #tpu.memory_space<vmem>>, %arg6: memref<768x768xbf16, #tpu.memory_space<vmem>>, %arg7: memref<1x768xf32, #tpu.memory_space<vmem>>, %arg8: memref<1x768xf32, #tpu.memory_space<vmem>>, %arg9: memref<1x768xf32, #tpu.memory_space<vmem>>, %arg10: memref<32x768xbf16, #tpu.memory_space<vmem>>, %arg11: memref<32x768xbf16, #tpu.memory_space<vmem>>, %arg12: memref<32x768xbf16, #tpu.memory_space<vmem>>) attributes {dimension_semantics = [#tpu.dimension_semantics<parallel>], iteration_bounds = array<i64: 1>, scalar_prefetch = 0 : i64, scratch_operands = 0 : i64, tpu.core_type = #tpu.core_type<tc>, window_params = [{transform_indices = @transform_0, window_bounds = array<i64: 32, 768>}, {transform_indices = @transform_1, window_bounds = array<i64: 32, 768>}, {transform_indices = @transform_2, window_bounds = array<i64: 32, 768>}, {pipeline_mode = #tpu.pipeline_mode<synchronous>, transform_indices = @transform_3, window_bounds = array<i64: 768, 768>}, {pipeline_mode = #tpu.pipeline_mode<synchronous>, transform_indices = @transform_4, window_bounds = array<i64: 768, 768>}, {pipeline_mode = #tpu.pipeline_mode<synchronous>, transform_indices = @transform_5, window_bounds = array<i64: 768, 768>}, {pipeline_mode = #tpu.pipeline_mode<synchronous>, transform_indices = @transform_6, window_bounds = array<i64: 1, 768>}, {pipeline_mode = #tpu.pipeline_mode<synchronous>, transform_indices = @transform_7, window_bounds = array<i64: 1, 768>}, {pipeline_mode = #tpu.pipeline_mode<synchronous>, transform_indices = @transform_8, window_bounds = array<i64: 1, 768>}, {transform_indices = @transform_9, window_bounds = array<i64: 32, 768>}, {transform_indices = @transform_10, window_bounds = array<i64: 32, 768>}, {transform_indices = @transform_11, window_bounds = array<i64: 32, 768>}]} {
    %c0 = arith.constant 0 : index
    %c0_0 = arith.constant 0 : index
    %0 = vector.load %arg1[%c0, %c0_0] : memref<32x768xf32, #tpu.memory_space<vmem>>, vector<32x768xf32>
    %1 = arith.truncf %0 : vector<32x768xf32> to vector<32x768xbf16>
    %c0_1 = arith.constant 0 : index
    %c0_2 = arith.constant 0 : index
    %2 = vector.load %arg2[%c0_1, %c0_2] : memref<32x768xf32, #tpu.memory_space<vmem>>, vector<32x768xf32>
    %3 = arith.truncf %2 : vector<32x768xf32> to vector<32x768xbf16>
    %c0_3 = arith.constant 0 : index
    %c0_4 = arith.constant 0 : index
    %4 = vector.load %arg3[%c0_3, %c0_4] : memref<32x768xf32, #tpu.memory_space<vmem>>, vector<32x768xf32>
    %5 = arith.truncf %4 : vector<32x768xf32> to vector<32x768xbf16>
    %c0_5 = arith.constant 0 : index
    %c0_6 = arith.constant 0 : index
    %6 = vector.load %arg4[%c0_5, %c0_6] : memref<768x768xbf16, #tpu.memory_space<vmem>>, vector<768x768xbf16>
    %cst = arith.constant dense<0.000000e+00> : vector<32x768xf32>
    %7 = tpu.matmul %1, %6, %cst {dimension_numbers = #tpu.dot_dimension_numbers<[1], [0], [0], [1], [0, 0, 1, 1], [], []>} : vector<32x768xbf16>, vector<768x768xbf16>, vector<32x768xf32> -> vector<32x768xf32>
    %c0_7 = arith.constant 0 : index
    %c0_8 = arith.constant 0 : index
    %8 = vector.load %arg7[%c0_7, %c0_8] : memref<1x768xf32, #tpu.memory_space<vmem>>, vector<1x768xf32>
    %9 = vector.broadcast %8 : vector<1x768xf32> to vector<32x768xf32>
    %10 = arith.addf %7, %9 : vector<32x768xf32>
    %c0_9 = arith.constant 0 : index
    %c0_10 = arith.constant 0 : index
    %11 = vector.load %arg5[%c0_9, %c0_10] : memref<768x768xbf16, #tpu.memory_space<vmem>>, vector<768x768xbf16>
    %cst_11 = arith.constant dense<0.000000e+00> : vector<32x768xf32>
    %12 = tpu.matmul %3, %11, %cst_11 {dimension_numbers = #tpu.dot_dimension_numbers<[1], [0], [0], [1], [0, 0, 1, 1], [], []>} : vector<32x768xbf16>, vector<768x768xbf16>, vector<32x768xf32> -> vector<32x768xf32>
    %c0_12 = arith.constant 0 : index
    %c0_13 = arith.constant 0 : index
    %13 = vector.load %arg8[%c0_12, %c0_13] : memref<1x768xf32, #tpu.memory_space<vmem>>, vector<1x768xf32>
    %14 = vector.broadcast %13 : vector<1x768xf32> to vector<32x768xf32>
    %15 = arith.addf %12, %14 : vector<32x768xf32>
    %c0_14 = arith.constant 0 : index
    %c0_15 = arith.constant 0 : index
    %16 = vector.load %arg6[%c0_14, %c0_15] : memref<768x768xbf16, #tpu.memory_space<vmem>>, vector<768x768xbf16>
    %cst_16 = arith.constant dense<0.000000e+00> : vector<32x768xf32>
    %17 = tpu.matmul %5, %16, %cst_16 {dimension_numbers = #tpu.dot_dimension_numbers<[1], [0], [0], [1], [0, 0, 1, 1], [], []>} : vector<32x768xbf16>, vector<768x768xbf16>, vector<32x768xf32> -> vector<32x768xf32>
    %c0_17 = arith.constant 0 : index
    %c0_18 = arith.constant 0 : index
    %18 = vector.load %arg9[%c0_17, %c0_18] : memref<1x768xf32, #tpu.memory_space<vmem>>, vector<1x768xf32>
    %19 = vector.broadcast %18 : vector<1x768xf32> to vector<32x768xf32>
    %20 = arith.addf %17, %19 : vector<32x768xf32>
    %cst_19 = arith.constant 1.250000e-01 : f32
    %21 = vector.broadcast %cst_19 : f32 to vector<32x768xf32>
    %22 = arith.mulf %10, %21 : vector<32x768xf32>
    %23 = arith.truncf %22 : vector<32x768xf32> to vector<32x768xbf16>
    %c0_20 = arith.constant 0 : index
    %c0_21 = arith.constant 0 : index
    %24 = vector.load %arg10[%c0_20, %c0_21] : memref<32x768xbf16, #tpu.memory_space<vmem>>, vector<32x768xbf16>
    tpu.vector_store %arg10[%c0_20, %c0_21], %23 {strides = array<i32>} : memref<32x768xbf16, #tpu.memory_space<vmem>>, vector<32x768xbf16>,
    %25 = arith.truncf %15 : vector<32x768xf32> to vector<32x768xbf16>
    %c0_22 = arith.constant 0 : index
    %c0_23 = arith.constant 0 : index
    %26 = vector.load %arg11[%c0_22, %c0_23] : memref<32x768xbf16, #tpu.memory_space<vmem>>, vector<32x768xbf16>
    tpu.vector_store %arg11[%c0_22, %c0_23], %25 {strides = array<i32>} : memref<32x768xbf16, #tpu.memory_space<vmem>>, vector<32x768xbf16>,
    %27 = arith.truncf %20 : vector<32x768xf32> to vector<32x768xbf16>
    %c0_24 = arith.constant 0 : index
    %c0_25 = arith.constant 0 : index
    %28 = vector.load %arg12[%c0_24, %c0_25] : memref<32x768xbf16, #tpu.memory_space<vmem>>, vector<32x768xbf16>
    tpu.vector_store %arg12[%c0_24, %c0_25], %27 {strides = array<i32>} : memref<32x768xbf16, #tpu.memory_space<vmem>>, vector<32x768xbf16>,
    return
  }
  func.func @transform_0(%arg0: i32) -> (i32, i32) {
    %c0_i32 = arith.constant 0 : i32
    %c0_i32_0 = arith.constant 0 : i32
    return %arg0, %c0_i32 : i32, i32
  }
  func.func @transform_1(%arg0: i32) -> (i32, i32) {
    %c0_i32 = arith.constant 0 : i32
    %c0_i32_0 = arith.constant 0 : i32
    return %arg0, %c0_i32 : i32, i32
  }
  func.func @transform_2(%arg0: i32) -> (i32, i32) {
    %c0_i32 = arith.constant 0 : i32
    %c0_i32_0 = arith.constant 0 : i32
    return %arg0, %c0_i32 : i32, i32
  }
  func.func @transform_3(%arg0: i32) -> (i32, i32) {
    %c0_i32 = arith.constant 0 : i32
    %c0_i32_0 = arith.constant 0 : i32
    %c0_i32_1 = arith.constant 0 : i32
    return %c0_i32, %c0_i32_0 : i32, i32
  }
  func.func @transform_4(%arg0: i32) -> (i32, i32) {
    %c0_i32 = arith.constant 0 : i32
    %c0_i32_0 = arith.constant 0 : i32
    %c0_i32_1 = arith.constant 0 : i32
    return %c0_i32, %c0_i32_0 : i32, i32
  }
  func.func @transform_5(%arg0: i32) -> (i32, i32) {
    %c0_i32 = arith.constant 0 : i32
    %c0_i32_0 = arith.constant 0 : i32
    %c0_i32_1 = arith.constant 0 : i32
    return %c0_i32, %c0_i32_0 : i32, i32
  }
  func.func @transform_6(%arg0: i32) -> (i32, i32) {
    %c0_i32 = arith.constant 0 : i32
    %c0_i32_0 = arith.constant 0 : i32
    %c0_i32_1 = arith.constant 0 : i32
    return %c0_i32, %c0_i32_0 : i32, i32
  }
  func.func @transform_7(%arg0: i32) -> (i32, i32) {
    %c0_i32 = arith.constant 0 : i32
    %c0_i32_0 = arith.constant 0 : i32
    %c0_i32_1 = arith.constant 0 : i32
    return %c0_i32, %c0_i32_0 : i32, i32
  }
  func.func @transform_8(%arg0: i32) -> (i32, i32) {
    %c0_i32 = arith.constant 0 : i32
    %c0_i32_0 = arith.constant 0 : i32
    %c0_i32_1 = arith.constant 0 : i32
    return %c0_i32, %c0_i32_0 : i32, i32
  }
  func.func @transform_9(%arg0: i32) -> (i32, i32) {
    %c0_i32 = arith.constant 0 : i32
    %c0_i32_0 = arith.constant 0 : i32
    return %arg0, %c0_i32 : i32, i32
  }
  func.func @transform_10(%arg0: i32) -> (i32, i32) {
    %c0_i32 = arith.constant 0 : i32
    %c0_i32_0 = arith.constant 0 : i32
    return %arg0, %c0_i32 : i32, i32
  }
  func.func @transform_11(%arg0: i32) -> (i32, i32) {
    %c0_i32 = arith.constant 0 : i32
    %c0_i32_0 = arith.constant 0 : i32
    return %arg0, %c0_i32 : i32, i32
  }
}

</mosaic_0001>

<llo_original>
// kernel: tpu_custom_call.1
$region0: #{tpu_custom_call.1}
  #allocation0 [shape = 'u32[]', space=smem, size = 0x4, offset = 0x4, fixed_abs, tag = 'smem constant byte address 0x4 - core index']
  #allocation1 [shape = 'u32[144,128]{1,0:T(1,128)}', space=vmem, size = 0x12000, scoped, tag = 'internal scratch']
  %s0 = inlined_call_operand.hbm [shape: f32[32,768], index: 0, kind: input, shape index: {}]
  %s1 = inlined_call_operand.hbm [shape: f32[32,768], index: 1, kind: input, shape index: {}]
  %s2 = inlined_call_operand.hbm [shape: f32[32,768], index: 2, kind: input, shape index: {}]
  %s3 = inlined_call_operand.hbm [shape: bf16[768,768], index: 3, kind: input, shape index: {}]
  %s4 = inlined_call_operand.hbm [shape: bf16[768,768], index: 4, kind: input, shape index: {}]
  %s5 = inlined_call_operand.hbm [shape: bf16[768,768], index: 5, kind: input, shape index: {}]
  %s6 = inlined_call_operand.hbm [shape: f32[1,768], index: 6, kind: input, shape index: {}]
  %s7 = inlined_call_operand.hbm [shape: f32[1,768], index: 7, kind: input, shape index: {}]
  %s8 = inlined_call_operand.hbm [shape: f32[1,768], index: 8, kind: input, shape index: {}]
  %s9 = inlined_call_operand.hbm [shape: bf16[32,768], index: 9, kind: output, shape index: {0}]
  %s10 = inlined_call_operand.hbm [shape: bf16[32,768], index: 10, kind: output, shape index: {1}]
  %s11 = inlined_call_operand.hbm [shape: bf16[32,768], index: 11, kind: output, shape index: {2}]
  %12 = xla_tuple %s9, %s10, %s11
  %s13 = sld [smem:[#allocation0]]
  $region98: #{tpu_custom_call.1} parent=0
    _
  %s15 = ssub.s32 1, %s13
  %s16 = scalar_select 0, %s15, %s13
  $region1: #{tpu_custom_call.1} parent=0
    #allocation2 [shape = 'u8[98304]{0}', space=vmem, size = 0x18000, scoped, tag = 'input window, operand 0, single buffered']
    #allocation3 [shape = 's32[1]{0}', space=sflag, size = 0x4, scoped, tag = 'scoped memory for tpu_custom_call.1']
    #allocation4 [shape = 's32[1]{0}', space=sflag, size = 0x4, scoped, tag = 'scoped memory for tpu_custom_call.1']
    #allocation5 [shape = 'u8[98304]{0}', space=vmem, size = 0x18000, scoped, tag = 'input window, operand 1, single buffered']
    #allocation6 [shape = 's32[1]{0}', space=sflag, size = 0x4, scoped, tag = 'scoped memory for tpu_custom_call.1']
    #allocation7 [shape = 'u8[98304]{0}', space=vmem, size = 0x18000, scoped, tag = 'input window, operand 2, single buffered']
    #allocation8 [shape = 'u8[1179648]{0}', space=vmem, size = 0x120000, scoped, tag = 'input window, operand 3, single buffered']
    #allocation9 [shape = 's32[1]{0}', space=sflag, size = 0x4, scoped, tag = 'scoped memory for tpu_custom_call.1']
    #allocation10 [shape = 'u8[1179648]{0}', space=vmem, size = 0x120000, scoped, tag = 'input window, operand 4, single buffered']
    #allocation11 [shape = 'u8[1179648]{0}', space=vmem, size = 0x120000, scoped, tag = 'input window, operand 5, single buffered']
    #allocation12 [shape = 's32[1]{0}', space=sflag, size = 0x4, scoped, tag = 'scoped memory for tpu_custom_call.1']
    #allocation13 [shape = 'u8[3072]{0}', space=vmem, size = 0xc00, scoped, tag = 'input window, operand 6, single buffered']
    #allocation14 [shape = 'u8[3072]{0}', space=vmem, size = 0xc00, scoped, tag = 'input window, operand 7, single buffered']
    #allocation15 [shape = 's32[1]{0}', space=sflag, size = 0x4, scoped, tag = 'scoped memory for tpu_custom_call.1']
    #allocation16 [shape = 'u8[3072]{0}', space=vmem, size = 0xc00, scoped, tag = 'input window, operand 8, single buffered']
    #allocation17 [shape = 'u8[49152]{0}', space=vmem, size = 0xc000, scoped, tag = 'output window, operand 0, single buffered']
    #allocation18 [shape = 'u8[49152]{0}', space=vmem, size = 0xc000, scoped, tag = 'output window, operand 1, single buffered']
    #allocation19 [shape = 's32[1]{0}', space=sflag, size = 0x4, scoped, tag = 'scoped memory for tpu_custom_call.1']
    #allocation20 [shape = 'u8[49152]{0}', space=vmem, size = 0xc000, scoped, tag = 'output window, operand 2, single buffered']
    %17 = vsyncpa [#allocation3], 0
    %18 = vsyncpa [#allocation6], 0
    %19 = vsyncpa [#allocation9], 0
    %20 = vsyncpa [#allocation12], 0
    %21 = vsyncpa [#allocation15], 0
    %22 = vsyncpa [#allocation4], 0
    %23 = vsyncpa [#allocation19], 0
    // Predicated region
    $region2: #{tpu_custom_call.1} parent=1 // pred_check
      _
    $region3: #{tpu_custom_call.1} parent=1 // pred_check_branch
      %25 = sbr.rel (0) target = $region5
    $region4: #{tpu_custom_call.1} parent=1 // pred_region
      %s27 = ssub.s32 3072, 3072
      %28 = vsyncadd [#allocation3], %s27
      %s29 = sshll.u32 [#allocation2], 4
      %s30 = int_to_ptr.vmem [resolvable:$true] %s29
      %35 = dma.hbm_to_vmem [thread:$0]  %s0, 3072, %s30, [#allocation3], 768, 768, 48
    $region5: #{tpu_custom_call.1} parent=1 // pred_fallthru
      _
    // Predicated region
    $region6: #{tpu_custom_call.1} parent=1 // pred_check
      _
    $region7: #{tpu_custom_call.1} parent=1 // pred_check_branch
      %37 = sbr.rel (0) target = $region9
    $region8: #{tpu_custom_call.1} parent=1 // pred_region
      %s39 = ssub.s32 3072, 3072
      %40 = vsyncadd [#allocation6], %s39
      %s41 = sshll.u32 [#allocation5], 4
      %s42 = int_to_ptr.vmem [resolvable:$true] %s41
      %47 = dma.hbm_to_vmem [thread:$0]  %s1, 3072, %s42, [#allocation6], 768, 768, 48
    $region9: #{tpu_custom_call.1} parent=1 // pred_fallthru
      _
    // Predicated region
    $region10: #{tpu_custom_call.1} parent=1 // pred_check
      _
    $region11: #{tpu_custom_call.1} parent=1 // pred_check_branch
      %49 = sbr.rel (0) target = $region13
    $region12: #{tpu_custom_call.1} parent=1 // pred_region
      %s51 = ssub.s32 3072, 3072
      %52 = vsyncadd [#allocation6], %s51
      %s53 = sshll.u32 [#allocation7], 4
      %s54 = int_to_ptr.vmem [resolvable:$true] %s53
      %59 = dma.hbm_to_vmem [thread:$0]  %s2, 3072, %s54, [#allocation6], 768, 768, 48
    $region13: #{tpu_custom_call.1} parent=1 // pred_fallthru
      _
    // Predicated region
    $region14: #{tpu_custom_call.1} parent=1 // pred_check
      _
    $region15: #{tpu_custom_call.1} parent=1 // pred_check_branch
      %61 = sbr.rel (0) target = $region17
    $region16: #{tpu_custom_call.1} parent=1 // pred_region
      %s63 = ssub.s32 36864, 36864
      %64 = vsyncadd [#allocation9], %s63
      %s65 = sshll.u32 [#allocation8], 4
      %s66 = int_to_ptr.vmem [resolvable:$true] %s65
      %71 = dma.hbm_to_vmem [thread:$0]  %s3, 36864, %s66, [#allocation9], 384, 384, 24
    $region17: #{tpu_custom_call.1} parent=1 // pred_fallthru
      _
    // Predicated region
    $region18: #{tpu_custom_call.1} parent=1 // pred_check
      _
    $region19: #{tpu_custom_call.1} parent=1 // pred_check_branch
      %73 = sbr.rel (0) target = $region21
    $region20: #{tpu_custom_call.1} parent=1 // pred_region
      %s75 = ssub.s32 36864, 36864
      %76 = vsyncadd [#allocation9], %s75
      %s77 = sshll.u32 [#allocation10], 4
      %s78 = int_to_ptr.vmem [resolvable:$true] %s77
      %83 = dma.hbm_to_vmem [thread:$0]  %s4, 36864, %s78, [#allocation9], 384, 384, 24
    $region21: #{tpu_custom_call.1} parent=1 // pred_fallthru
      _
    // Predicated region
    $region22: #{tpu_custom_call.1} parent=1 // pred_check
      _
    $region23: #{tpu_custom_call.1} parent=1 // pred_check_branch
      %85 = sbr.rel (0) target = $region25
    $region24: #{tpu_custom_call.1} parent=1 // pred_region
      %s87 = ssub.s32 36864, 36864
      %88 = vsyncadd [#allocation12], %s87
      %s89 = sshll.u32 [#allocation11], 4
      %s90 = int_to_ptr.vmem [resolvable:$true] %s89
      %95 = dma.hbm_to_vmem [thread:$0]  %s5, 36864, %s90, [#allocation12], 384, 384, 24
    $region25: #{tpu_custom_call.1} parent=1 // pred_fallthru
      _
    // Predicated region
    $region26: #{tpu_custom_call.1} parent=1 // pred_check
      _
    $region27: #{tpu_custom_call.1} parent=1 // pred_check_branch
      %97 = sbr.rel (0) target = $region29
    $region28: #{tpu_custom_call.1} parent=1 // pred_region
      %s99 = ssub.s32 96, 96
      %100 = vsyncadd [#allocation12], %s99
      %s102 = sshll.u32 [#allocation13], 4
      %s103 = int_to_ptr.vmem [resolvable:$true] %s102
      %105 = dma.hbm_to_vmem [thread:$0]  %s6, 96, %s103, [#allocation12]
    $region29: #{tpu_custom_call.1} parent=1 // pred_fallthru
      _
    // Predicated region
    $region30: #{tpu_custom_call.1} parent=1 // pred_check
      _
    $region31: #{tpu_custom_call.1} parent=1 // pred_check_branch
      %107 = sbr.rel (0) target = $region33
    $region32: #{tpu_custom_call.1} parent=1 // pred_region
      %s109 = ssub.s32 96, 96
      %110 = vsyncadd [#allocation15], %s109
      %s112 = sshll.u32 [#allocation14], 4
      %s113 = int_to_ptr.vmem [resolvable:$true] %s112
      %115 = dma.hbm_to_vmem [thread:$0]  %s7, 96, %s113, [#allocation15]
    $region33: #{tpu_custom_call.1} parent=1 // pred_fallthru
      _
    // Predicated region
    $region34: #{tpu_custom_call.1} parent=1 // pred_check
      _
    $region35: #{tpu_custom_call.1} parent=1 // pred_check_branch
      %117 = sbr.rel (0) target = $region37
    $region36: #{tpu_custom_call.1} parent=1 // pred_region
      %s119 = ssub.s32 96, 96
      %120 = vsyncadd [#allocation15], %s119
      %s122 = sshll.u32 [#allocation16], 4
      %s123 = int_to_ptr.vmem [resolvable:$true] %s122
      %125 = dma.hbm_to_vmem [thread:$0]  %s8, 96, %s123, [#allocation15]
    $region37: #{tpu_custom_call.1} parent=1 // pred_fallthru
      _
    // Predicated region
    $region38: #{tpu_custom_call.1} parent=1 // pred_check
      _
    $region39: #{tpu_custom_call.1} parent=1 // pred_check_branch
      %127 = sbr.rel (0) target = $region41
    $region40: #{tpu_custom_call.1} parent=1 // pred_region
      %128 = dma.done [#allocation3], 3072
    $region41: #{tpu_custom_call.1} parent=1 // pred_fallthru
      _
    // Predicated region
    $region42: #{tpu_custom_call.1} parent=1 // pred_check
      _
    $region43: #{tpu_custom_call.1} parent=1 // pred_check_branch
      %130 = sbr.rel (0) target = $region45
    $region44: #{tpu_custom_call.1} parent=1 // pred_region
      %131 = dma.done [#allocation6], 3072
    $region45: #{tpu_custom_call.1} parent=1 // pred_fallthru
      _
    // Predicated region
    $region46: #{tpu_custom_call.1} parent=1 // pred_check
      _
    $region47: #{tpu_custom_call.1} parent=1 // pred_check_branch
      %133 = sbr.rel (0) target = $region49
    $region48: #{tpu_custom_call.1} parent=1 // pred_region
      %134 = dma.done [#allocation6], 3072
    $region49: #{tpu_custom_call.1} parent=1 // pred_fallthru
      _
    // Predicated region
    $region50: #{tpu_custom_call.1} parent=1 // pred_check
      _
    $region51: #{tpu_custom_call.1} parent=1 // pred_check_branch
      %136 = sbr.rel (0) target = $region53
    $region52: #{tpu_custom_call.1} parent=1 // pred_region
      %137 = dma.done [#allocation9], 36864
    $region53: #{tpu_custom_call.1} parent=1 // pred_fallthru
      _
    // Predicated region
    $region54: #{tpu_custom_call.1} parent=1 // pred_check
      _
    $region55: #{tpu_custom_call.1} parent=1 // pred_check_branch
      %139 = sbr.rel (0) target = $region57
    $region56: #{tpu_custom_call.1} parent=1 // pred_region
      %140 = dma.done [#allocation9], 36864
    $region57: #{tpu_custom_call.1} parent=1 // pred_fallthru
      _
    // Predicated region
    $region58: #{tpu_custom_call.1} parent=1 // pred_check
      _
    $region59: #{tpu_custom_call.1} parent=1 // pred_check_branch
      %142 = sbr.rel (0) target = $region61
    $region60: #{tpu_custom_call.1} parent=1 // pred_region
      %143 = dma.done [#allocation12], 36864
    $region61: #{tpu_custom_call.1} parent=1 // pred_fallthru
      _
    // Predicated region
    $region62: #{tpu_custom_call.1} parent=1 // pred_check
      _
    $region63: #{tpu_custom_call.1} parent=1 // pred_check_branch
      %145 = sbr.rel (0) target = $region65
    $region64: #{tpu_custom_call.1} parent=1 // pred_region
      %146 = dma.done [#allocation12], 96
    $region65: #{tpu_custom_call.1} parent=1 // pred_fallthru
      _
    // Predicated region
    $region66: #{tpu_custom_call.1} parent=1 // pred_check
      _
    $region67: #{tpu_custom_call.1} parent=1 // pred_check_branch
      %148 = sbr.rel (0) target = $region69
    $region68: #{tpu_custom_call.1} parent=1 // pred_region
      %149 = dma.done [#allocation15], 96
    $region69: #{tpu_custom_call.1} parent=1 // pred_fallthru
      _
    // Predicated region
    $region70: #{tpu_custom_call.1} parent=1 // pred_check
      _
    $region71: #{tpu_custom_call.1} parent=1 // pred_check_branch
      %151 = sbr.rel (0) target = $region73
    $region72: #{tpu_custom_call.1} parent=1 // pred_region
      %152 = dma.done [#allocation15], 96
    $region73: #{tpu_custom_call.1} parent=1 // pred_fallthru
      _
    %v153 = vld [vmem:[#allocation2] sm:$0xff]
    %v154 = vld [vmem:[#allocation2 + $0x8] sm:$0xff]
    %v155 = vld [vmem:[#allocation2 + $0x10] sm:$0xff]
    %v156 = vld [vmem:[#allocation2 + $0x18] sm:$0xff]
    %v157 = vld [vmem:[#allocation2 + $0x20] sm:$0xff]
    %v158 = vld [vmem:[#allocation2 + $0x28] sm:$0xff]
    %v159 = vld [vmem:[#allocation2 + $0x30] sm:$0xff]
    %v160 = vld [vmem:[#allocation2 + $0x38] sm:$0xff]
    %v161 = vld [vmem:[#allocation2 + $0x40] sm:$0xff]
    %v162 = vld [vmem:[#allocation2 + $0x48] sm:$0xff]
    %v163 = vld [vmem:[#allocation2 + $0x50] sm:$0xff]
    %v164 = vld [vmem:[#allocation2 + $0x58] sm:$0xff]
    %v165 = vld [vmem:[#allocation2 + $0x60] sm:$0xff]
    %v166 = vld [vmem:[#allocation2 + $0x68] sm:$0xff]
    %v167 = vld [vmem:[#allocation2 + $0x70] sm:$0xff]
    %v168 = vld [vmem:[#allocation2 + $0x78] sm:$0xff]
    %v169 = vld [vmem:[#allocation2 + $0x80] sm:$0xff]
    %v170 = vld [vmem:[#allocation2 + $0x88] sm:$0xff]
    %v171 = vld [vmem:[#allocation2 + $0x90] sm:$0xff]
    %v172 = vld [vmem:[#allocation2 + $0x98] sm:$0xff]
    %v173 = vld [vmem:[#allocation2 + $0xa0] sm:$0xff]
    %v174 = vld [vmem:[#allocation2 + $0xa8] sm:$0xff]
    %v175 = vld [vmem:[#allocation2 + $0xb0] sm:$0xff]
    %v176 = vld [vmem:[#allocation2 + $0xb8] sm:$0xff]
    %v177 = vpack.c.bf16 %v159, %v153
    %v178 = vpack.c.bf16 %v160, %v154
    %v179 = vpack.c.bf16 %v161, %v155
    %v180 = vpack.c.bf16 %v162, %v156
    %v181 = vpack.c.bf16 %v163, %v157
    %v182 = vpack.c.bf16 %v164, %v158
    %v183 = vpack.c.bf16 %v171, %v165
    %v184 = vpack.c.bf16 %v172, %v166
    %v185 = vpack.c.bf16 %v173, %v167
    %v186 = vpack.c.bf16 %v174, %v168
    %v187 = vpack.c.bf16 %v175, %v169
    %v188 = vpack.c.bf16 %v176, %v170
    %v189 = vld [vmem:[#allocation5] sm:$0xff]
    %v190 = vld [vmem:[#allocation5 + $0x8] sm:$0xff]
    %v191 = vld [vmem:[#allocation5 + $0x10] sm:$0xff]
    %v192 = vld [vmem:[#allocation5 + $0x18] sm:$0xff]
    %v193 = vld [vmem:[#allocation5 + $0x20] sm:$0xff]
    %v194 = vld [vmem:[#allocation5 + $0x28] sm:$0xff]
    %v195 = vld [vmem:[#allocation5 + $0x30] sm:$0xff]
    %v196 = vld [vmem:[#allocation5 + $0x38] sm:$0xff]
    %v197 = vld [vmem:[#allocation5 + $0x40] sm:$0xff]
    %v198 = vld [vmem:[#allocation5 + $0x48] sm:$0xff]
    %v199 = vld [vmem:[#allocation5 + $0x50] sm:$0xff]
    %v200 = vld [vmem:[#allocation5 + $0x58] sm:$0xff]
    %v201 = vld [vmem:[#allocation5 + $0x60] sm:$0xff]
    %v202 = vld [vmem:[#allocation5 + $0x68] sm:$0xff]
    %v203 = vld [vmem:[#allocation5 + $0x70] sm:$0xff]
    %v204 = vld [vmem:[#allocation5 + $0x78] sm:$0xff]
    %v205 = vld [vmem:[#allocation5 + $0x80] sm:$0xff]
    %v206 = vld [vmem:[#allocation5 + $0x88] sm:$0xff]
    %v207 = vld [vmem:[#allocation5 + $0x90] sm:$0xff]
    %v208 = vld [vmem:[#allocation5 + $0x98] sm:$0xff]
    %v209 = vld [vmem:[#allocation5 + $0xa0] sm:$0xff]
    %v210 = vld [vmem:[#allocation5 + $0xa8] sm:$0xff]
    %v211 = vld [vmem:[#allocation5 + $0xb0] sm:$0xff]
    %v212 = vld [vmem:[#allocation5 + $0xb8] sm:$0xff]
    %v213 = vpack.c.bf16 %v195, %v189
    %v214 = vpack.c.bf16 %v196, %v190
    %v215 = vpack.c.bf16 %v197, %v191
    %v216 = vpack.c.bf16 %v198, %v192
    %v217 = vpack.c.bf16 %v199, %v193
    %v218 = vpack.c.bf16 %v200, %v194
    %v219 = vpack.c.bf16 %v207, %v201
    %v220 = vpack.c.bf16 %v208, %v202
    %v221 = vpack.c.bf16 %v209, %v203
    %v222 = vpack.c.bf16 %v210, %v204
    %v223 = vpack.c.bf16 %v211, %v205
    %v224 = vpack.c.bf16 %v212, %v206
    %v225 = vld [vmem:[#allocation7] sm:$0xff]
    %v226 = vld [vmem:[#allocation7 + $0x8] sm:$0xff]
    %v227 = vld [vmem:[#allocation7 + $0x10] sm:$0xff]
    %v228 = vld [vmem:[#allocation7 + $0x18] sm:$0xff]
    %v229 = vld [vmem:[#allocation7 + $0x20] sm:$0xff]
    %v230 = vld [vmem:[#allocation7 + $0x28] sm:$0xff]
    %v231 = vld [vmem:[#allocation7 + $0x30] sm:$0xff]
    %v232 = vld [vmem:[#allocation7 + $0x38] sm:$0xff]
    %v233 = vld [vmem:[#allocation7 + $0x40] sm:$0xff]
    %v234 = vld [vmem:[#allocation7 + $0x48] sm:$0xff]
    %v235 = vld [vmem:[#allocation7 + $0x50] sm:$0xff]
    %v236 = vld [vmem:[#allocation7 + $0x58] sm:$0xff]
    %v237 = vld [vmem:[#allocation7 + $0x60] sm:$0xff]
    %v238 = vld [vmem:[#allocation7 + $0x68] sm:$0xff]
    %v239 = vld [vmem:[#allocation7 + $0x70] sm:$0xff]
    %v240 = vld [vmem:[#allocation7 + $0x78] sm:$0xff]
    %v241 = vld [vmem:[#allocation7 + $0x80] sm:$0xff]
    %v242 = vld [vmem:[#allocation7 + $0x88] sm:$0xff]
    %v243 = vld [vmem:[#allocation7 + $0x90] sm:$0xff]
    %v244 = vld [vmem:[#allocation7 + $0x98] sm:$0xff]
    %v245 = vld [vmem:[#allocation7 + $0xa0] sm:$0xff]
    %v246 = vld [vmem:[#allocation7 + $0xa8] sm:$0xff]
    %v247 = vld [vmem:[#allocation7 + $0xb0] sm:$0xff]
    %v248 = vld [vmem:[#allocation7 + $0xb8] sm:$0xff]
    %v249 = vpack.c.bf16 %v231, %v225
    %v250 = vpack.c.bf16 %v232, %v226
    %v251 = vpack.c.bf16 %v233, %v227
    %v252 = vpack.c.bf16 %v234, %v228
    %v253 = vpack.c.bf16 %v235, %v229
    %v254 = vpack.c.bf16 %v236, %v230
    %v255 = vpack.c.bf16 %v243, %v237
    %v256 = vpack.c.bf16 %v244, %v238
    %v257 = vpack.c.bf16 %v245, %v239
    %v258 = vpack.c.bf16 %v246, %v240
    %v259 = vpack.c.bf16 %v247, %v241
    %v260 = vpack.c.bf16 %v248, %v242
    %v261 = vld [vmem:[#allocation8] sm:$0xff]
    %v262 = vld [vmem:[#allocation8 + $0x8] sm:$0xff]
    %v263 = vld [vmem:[#allocation8 + $0x10] sm:$0xff]
    %v264 = vld [vmem:[#allocation8 + $0x18] sm:$0xff]
    %v265 = vld [vmem:[#allocation8 + $0x20] sm:$0xff]
    %v266 = vld [vmem:[#allocation8 + $0x28] sm:$0xff]
    %v267 = vld [vmem:[#allocation8 + $0x30] sm:$0xff]
    %v268 = vld [vmem:[#allocation8 + $0x38] sm:$0xff]
    %v269 = vld [vmem:[#allocation8 + $0x40] sm:$0xff]
    %v270 = vld [vmem:[#allocation8 + $0x48] sm:$0xff]
    %v271 = vld [vmem:[#allocation8 + $0x50] sm:$0xff]
    %v272 = vld [vmem:[#allocation8 + $0x58] sm:$0xff]
    %v273 = vld [vmem:[#allocation8 + $0x60] sm:$0xff]
    %v274 = vld [vmem:[#allocation8 + $0x68] sm:$0xff]
    %v275 = vld [vmem:[#allocation8 + $0x70] sm:$0xff]
    %v276 = vld [vmem:[#allocation8 + $0x78] sm:$0xff]
    %v277 = vld [vmem:[#allocation8 + $0x80] sm:$0xff]
    %v278 = vld [vmem:[#allocation8 + $0x88] sm:$0xff]
    %v279 = vld [vmem:[#allocation8 + $0x90] sm:$0xff]
    %v280 = vld [vmem:[#allocation8 + $0x98] sm:$0xff]
    %v281 = vld [vmem:[#allocation8 + $0xa0] sm:$0xff]
    %v282 = vld [vmem:[#allocation8 + $0xa8] sm:$0xff]
    %v283 = vld [vmem:[#allocation8 + $0xb0] sm:$0xff]
    %v284 = vld [vmem:[#allocation8 + $0xb8] sm:$0xff]
    %v285 = vld [vmem:[#allocation8 + $0xc0] sm:$0xff]
    %v286 = vld [vmem:[#allocation8 + $0xc8] sm:$0xff]
    %v287 = vld [vmem:[#allocation8 + $0xd0] sm:$0xff]
    %v288 = vld [vmem:[#allocation8 + $0xd8] sm:$0xff]
    %v289 = vld [vmem:[#allocation8 + $0xe0] sm:$0xff]
    %v290 = vld [vmem:[#allocation8 + $0xe8] sm:$0xff]
    %v291 = vld [vmem:[#allocation8 + $0xf0] sm:$0xff]
    %v292 = vld [vmem:[#allocation8 + $0xf8] sm:$0xff]
    %v293 = vld [vmem:[#allocation8 + $0x100] sm:$0xff]
    %v294 = vld [vmem:[#allocation8 + $0x108] sm:$0xff]
    %v295 = vld [vmem:[#allocation8 + $0x110] sm:$0xff]
    %v296 = vld [vmem:[#allocation8 + $0x118] sm:$0xff]
    %v297 = vld [vmem:[#allocation8 + $0x120] sm:$0xff]
    %v298 = vld [vmem:[#allocation8 + $0x128] sm:$0xff]
    %v299 = vld [vmem:[#allocation8 + $0x130] sm:$0xff]
    %v300 = vld [vmem:[#allocation8 + $0x138] sm:$0xff]
    %v301 = vld [vmem:[#allocation8 + $0x140] sm:$0xff]
    %v302 = vld [vmem:[#allocation8 + $0x148] sm:$0xff]
    %v303 = vld [vmem:[#allocation8 + $0x150] sm:$0xff]
    %v304 = vld [vmem:[#allocation8 + $0x158] sm:$0xff]
    %v305 = vld [vmem:[#allocation8 + $0x160] sm:$0xff]
    %v306 = vld [vmem:[#allocation8 + $0x168] sm:$0xff]
    %v307 = vld [vmem:[#allocation8 + $0x170] sm:$0xff]
    %v308 = vld [vmem:[#allocation8 + $0x178] sm:$0xff]
    %v309 = vld [vmem:[#allocation8 + $0x180] sm:$0xff]
    %v310 = vld [vmem:[#allocation8 + $0x188] sm:$0xff]
    %v311 = vld [vmem:[#allocation8 + $0x190] sm:$0xff]
    %v312 = vld [vmem:[#allocation8 + $0x198] sm:$0xff]
    %v313 = vld [vmem:[#allocation8 + $0x1a0] sm:$0xff]
    %v314 = vld [vmem:[#allocation8 + $0x1a8] sm:$0xff]
    %v315 = vld [vmem:[#allocation8 + $0x1b0] sm:$0xff]
    %v316 = vld [vmem:[#allocation8 + $0x1b8] sm:$0xff]
    %v317 = vld [vmem:[#allocation8 + $0x1c0] sm:$0xff]
    %v318 = vld [vmem:[#allocation8 + $0x1c8] sm:$0xff]
    %v319 = vld [vmem:[#allocation8 + $0x1d0] sm:$0xff]
    %v320 = vld [vmem:[#allocation8 + $0x1d8] sm:$0xff]
    %v321 = vld [vmem:[#allocation8 + $0x1e0] sm:$0xff]
    %v322 = vld [vmem:[#allocation8 + $0x1e8] sm:$0xff]
    %v323 = vld [vmem:[#allocation8 + $0x1f0] sm:$0xff]
    %v324 = vld [vmem:[#allocation8 + $0x1f8] sm:$0xff]
    %v325 = vld [vmem:[#allocation8 + $0x200] sm:$0xff]
    %v326 = vld [vmem:[#allocation8 + $0x208] sm:$0xff]
    %v327 = vld [vmem:[#allocation8 + $0x210] sm:$0xff]
    %v328 = vld [vmem:[#allocation8 + $0x218] sm:$0xff]
    %v329 = vld [vmem:[#allocation8 + $0x220] sm:$0xff]
    %v330 = vld [vmem:[#allocation8 + $0x228] sm:$0xff]
    %v331 = vld [vmem:[#allocation8 + $0x230] sm:$0xff]
    %v332 = vld [vmem:[#allocation8 + $0x238] sm:$0xff]
    %v333 = vld [vmem:[#allocation8 + $0x240] sm:$0xff]
    %v334 = vld [vmem:[#allocation8 + $0x248] sm:$0xff]
    %v335 = vld [vmem:[#allocation8 + $0x250] sm:$0xff]
    %v336 = vld [vmem:[#allocation8 + $0x258] sm:$0xff]
    %v337 = vld [vmem:[#allocation8 + $0x260] sm:$0xff]
    %v338 = vld [vmem:[#allocation8 + $0x268] sm:$0xff]
    %v339 = vld [vmem:[#allocation8 + $0x270] sm:$0xff]
    %v340 = vld [vmem:[#allocation8 + $0x278] sm:$0xff]
    %v341 = vld [vmem:[#allocation8 + $0x280] sm:$0xff]
    %v342 = vld [vmem:[#allocation8 + $0x288] sm:$0xff]
    %v343 = vld [vmem:[#allocation8 + $0x290] sm:$0xff]
    %v344 = vld [vmem:[#allocation8 + $0x298] sm:$0xff]
    %v345 = vld [vmem:[#allocation8 + $0x2a0] sm:$0xff]
    %v346 = vld [vmem:[#allocation8 + $0x2a8] sm:$0xff]
    %v347 = vld [vmem:[#allocation8 + $0x2b0] sm:$0xff]
    %v348 = vld [vmem:[#allocation8 + $0x2b8] sm:$0xff]
    %v349 = vld [vmem:[#allocation8 + $0x2c0] sm:$0xff]
    %v350 = vld [vmem:[#allocation8 + $0x2c8] sm:$0xff]
    %v351 = vld [vmem:[#allocation8 + $0x2d0] sm:$0xff]
    %v352 = vld [vmem:[#allocation8 + $0x2d8] sm:$0xff]
    %v353 = vld [vmem:[#allocation8 + $0x2e0] sm:$0xff]
    %v354 = vld [vmem:[#allocation8 + $0x2e8] sm:$0xff]
    %v355 = vld [vmem:[#allocation8 + $0x2f0] sm:$0xff]
    %v356 = vld [vmem:[#allocation8 + $0x2f8] sm:$0xff]
    %v357 = vld [vmem:[#allocation8 + $0x300] sm:$0xff]
    %v358 = vld [vmem:[#allocation8 + $0x308] sm:$0xff]
    %v359 = vld [vmem:[#allocation8 + $0x310] sm:$0xff]
    %v360 = vld [vmem:[#allocation8 + $0x318] sm:$0xff]
    %v361 = vld [vmem:[#allocation8 + $0x320] sm:$0xff]
    %v362 = vld [vmem:[#allocation8 + $0x328] sm:$0xff]
    %v363 = vld [vmem:[#allocation8 + $0x330] sm:$0xff]
    %v364 = vld [vmem:[#allocation8 + $0x338] sm:$0xff]
    %v365 = vld [vmem:[#allocation8 + $0x340] sm:$0xff]
    %v366 = vld [vmem:[#allocation8 + $0x348] sm:$0xff]
    %v367 = vld [vmem:[#allocation8 + $0x350] sm:$0xff]
    %v368 = vld [vmem:[#allocation8 + $0x358] sm:$0xff]
    %v369 = vld [vmem:[#allocation8 + $0x360] sm:$0xff]
    %v370 = vld [vmem:[#allocation8 + $0x368] sm:$0xff]
    %v371 = vld [vmem:[#allocation8 + $0x370] sm:$0xff]
    %v372 = vld [vmem:[#allocation8 + $0x378] sm:$0xff]
    %v373 = vld [vmem:[#allocation8 + $0x380] sm:$0xff]
    %v374 = vld [vmem:[#allocation8 + $0x388] sm:$0xff]
    %v375 = vld [vmem:[#allocation8 + $0x390] sm:$0xff]
    %v376 = vld [vmem:[#allocation8 + $0x398] sm:$0xff]
    %v377 = vld [vmem:[#allocation8 + $0x3a0] sm:$0xff]
    %v378 = vld [vmem:[#allocation8 + $0x3a8] sm:$0xff]
    %v379 = vld [vmem:[#allocation8 + $0x3b0] sm:$0xff]
    %v380 = vld [vmem:[#allocation8 + $0x3b8] sm:$0xff]
    %v381 = vld [vmem:[#allocation8 + $0x3c0] sm:$0xff]
    %v382 = vld [vmem:[#allocation8 + $0x3c8] sm:$0xff]
    %v383 = vld [vmem:[#allocation8 + $0x3d0] sm:$0xff]
    %v384 = vld [vmem:[#allocation8 + $0x3d8] sm:$0xff]
    %v385 = vld [vmem:[#allocation8 + $0x3e0] sm:$0xff]
    %v386 = vld [vmem:[#allocation8 + $0x3e8] sm:$0xff]
    %v387 = vld [vmem:[#allocation8 + $0x3f0] sm:$0xff]
    %v388 = vld [vmem:[#allocation8 + $0x3f8] sm:$0xff]
    %v389 = vld [vmem:[#allocation8 + $0x400] sm:$0xff]
    %v390 = vld [vmem:[#allocation8 + $0x408] sm:$0xff]
    %v391 = vld [vmem:[#allocation8 + $0x410] sm:$0xff]
    %v392 = vld [vmem:[#allocation8 + $0x418] sm:$0xff]
    %v393 = vld [vmem:[#allocation8 + $0x420] sm:$0xff]
    %v394 = vld [vmem:[#allocation8 + $0x428] sm:$0xff]
    %v395 = vld [vmem:[#allocation8 + $0x430] sm:$0xff]
    %v396 = vld [vmem:[#allocation8 + $0x438] sm:$0xff]
    %v397 = vld [vmem:[#allocation8 + $0x440] sm:$0xff]
    %v398 = vld [vmem:[#allocation8 + $0x448] sm:$0xff]
    %v399 = vld [vmem:[#allocation8 + $0x450] sm:$0xff]
    %v400 = vld [vmem:[#allocation8 + $0x458] sm:$0xff]
    %v401 = vld [vmem:[#allocation8 + $0x460] sm:$0xff]
    %v402 = vld [vmem:[#allocation8 + $0x468] sm:$0xff]
    %v403 = vld [vmem:[#allocation8 + $0x470] sm:$0xff]
    %v404 = vld [vmem:[#allocation8 + $0x478] sm:$0xff]
    %v405 = vld [vmem:[#allocation8 + $0x480] sm:$0xff]
    %v406 = vld [vmem:[#allocation8 + $0x488] sm:$0xff]
    %v407 = vld [vmem:[#allocation8 + $0x490] sm:$0xff]
    %v408 = vld [vmem:[#allocation8 + $0x498] sm:$0xff]
    %v409 = vld [vmem:[#allocation8 + $0x4a0] sm:$0xff]
    %v410 = vld [vmem:[#allocation8 + $0x4a8] sm:$0xff]
    %v411 = vld [vmem:[#allocation8 + $0x4b0] sm:$0xff]
    %v412 = vld [vmem:[#allocation8 + $0x4b8] sm:$0xff]
    %v413 = vld [vmem:[#allocation8 + $0x4c0] sm:$0xff]
    %v414 = vld [vmem:[#allocation8 + $0x4c8] sm:$0xff]
    %v415 = vld [vmem:[#allocation8 + $0x4d0] sm:$0xff]
    %v416 = vld [vmem:[#allocation8 + $0x4d8] sm:$0xff]
    %v417 = vld [vmem:[#allocation8 + $0x4e0] sm:$0xff]
    %v418 = vld [vmem:[#allocation8 + $0x4e8] sm:$0xff]
    %v419 = vld [vmem:[#allocation8 + $0x4f0] sm:$0xff]
    %v420 = vld [vmem:[#allocation8 + $0x4f8] sm:$0xff]
    %v421 = vld [vmem:[#allocation8 + $0x500] sm:$0xff]
    %v422 = vld [vmem:[#allocation8 + $0x508] sm:$0xff]
    %v423 = vld [vmem:[#allocation8 + $0x510] sm:$0xff]
    %v424 = vld [vmem:[#allocation8 + $0x518] sm:$0xff]
    %v425 = vld [vmem:[#allocation8 + $0x520] sm:$0xff]
    %v426 = vld [vmem:[#allocation8 + $0x528] sm:$0xff]
    %v427 = vld [vmem:[#allocation8 + $0x530] sm:$0xff]
    %v428 = vld [vmem:[#allocation8 + $0x538] sm:$0xff]
    %v429 = vld [vmem:[#allocation8 + $0x540] sm:$0xff]
    %v430 = vld [vmem:[#allocation8 + $0x548] sm:$0xff]
    %v431 = vld [vmem:[#allocation8 + $0x550] sm:$0xff]
    %v432 = vld [vmem:[#allocation8 + $0x558] sm:$0xff]
    %v433 = vld [vmem:[#allocation8 + $0x560] sm:$0xff]
    %v434 = vld [vmem:[#allocation8 + $0x568] sm:$0xff]
    %v435 = vld [vmem:[#allocation8 + $0x570] sm:$0xff]
    %v436 = vld [vmem:[#allocation8 + $0x578] sm:$0xff]
    %v437 = vld [vmem:[#allocation8 + $0x580] sm:$0xff]
    %v438 = vld [vmem:[#allocation8 + $0x588] sm:$0xff]
    %v439 = vld [vmem:[#allocation8 + $0x590] sm:$0xff]
    %v440 = vld [vmem:[#allocation8 + $0x598] sm:$0xff]
    %v441 = vld [vmem:[#allocation8 + $0x5a0] sm:$0xff]
    %v442 = vld [vmem:[#allocation8 + $0x5a8] sm:$0xff]
    %v443 = vld [vmem:[#allocation8 + $0x5b0] sm:$0xff]
    %v444 = vld [vmem:[#allocation8 + $0x5b8] sm:$0xff]
    %v445 = vld [vmem:[#allocation8 + $0x5c0] sm:$0xff]
    %v446 = vld [vmem:[#allocation8 + $0x5c8] sm:$0xff]
    %v447 = vld [vmem:[#allocation8 + $0x5d0] sm:$0xff]
    %v448 = vld [vmem:[#allocation8 + $0x5d8] sm:$0xff]
    %v449 = vld [vmem:[#allocation8 + $0x5e0] sm:$0xff]
    %v450 = vld [vmem:[#allocation8 + $0x5e8] sm:$0xff]
    %v451 = vld [vmem:[#allocation8 + $0x5f0] sm:$0xff]
    %v452 = vld [vmem:[#allocation8 + $0x5f8] sm:$0xff]
    %v453 = vld [vmem:[#allocation8 + $0x600] sm:$0xff]
    %v454 = vld [vmem:[#allocation8 + $0x608] sm:$0xff]
    %v455 = vld [vmem:[#allocation8 + $0x610] sm:$0xff]
    %v456 = vld [vmem:[#allocation8 + $0x618] sm:$0xff]
    %v457 = vld [vmem:[#allocation8 + $0x620] sm:$0xff]
    %v458 = vld [vmem:[#allocation8 + $0x628] sm:$0xff]
    %v459 = vld [vmem:[#allocation8 + $0x630] sm:$0xff]
    %v460 = vld [vmem:[#allocation8 + $0x638] sm:$0xff]
    %v461 = vld [vmem:[#allocation8 + $0x640] sm:$0xff]
    %v462 = vld [vmem:[#allocation8 + $0x648] sm:$0xff]
    %v463 = vld [vmem:[#allocation8 + $0x650] sm:$0xff]
    %v464 = vld [vmem:[#allocation8 + $0x658] sm:$0xff]
    %v465 = vld [vmem:[#allocation8 + $0x660] sm:$0xff]
    %v466 = vld [vmem:[#allocation8 + $0x668] sm:$0xff]
    %v467 = vld [vmem:[#allocation8 + $0x670] sm:$0xff]
    %v468 = vld [vmem:[#allocation8 + $0x678] sm:$0xff]
    %v469 = vld [vmem:[#allocation8 + $0x680] sm:$0xff]
    %v470 = vld [vmem:[#allocation8 + $0x688] sm:$0xff]
    %v471 = vld [vmem:[#allocation8 + $0x690] sm:$0xff]
    %v472 = vld [vmem:[#allocation8 + $0x698] sm:$0xff]
    %v473 = vld [vmem:[#allocation8 + $0x6a0] sm:$0xff]
    %v474 = vld [vmem:[#allocation8 + $0x6a8] sm:$0xff]
    %v475 = vld [vmem:[#allocation8 + $0x6b0] sm:$0xff]
    %v476 = vld [vmem:[#allocation8 + $0x6b8] sm:$0xff]
    %v477 = vld [vmem:[#allocation8 + $0x6c0] sm:$0xff]
    %v478 = vld [vmem:[#allocation8 + $0x6c8] sm:$0xff]
    %v479 = vld [vmem:[#allocation8 + $0x6d0] sm:$0xff]
    %v480 = vld [vmem:[#allocation8 + $0x6d8] sm:$0xff]
    %v481 = vld [vmem:[#allocation8 + $0x6e0] sm:$0xff]
    %v482 = vld [vmem:[#allocation8 + $0x6e8] sm:$0xff]
    %v483 = vld [vmem:[#allocation8 + $0x6f0] sm:$0xff]
    %v484 = vld [vmem:[#allocation8 + $0x6f8] sm:$0xff]
    %v485 = vld [vmem:[#allocation8 + $0x700] sm:$0xff]
    %v486 = vld [vmem:[#allocation8 + $0x708] sm:$0xff]
    %v487 = vld [vmem:[#allocation8 + $0x710] sm:$0xff]
    %v488 = vld [vmem:[#allocation8 + $0x718] sm:$0xff]
    %v489 = vld [vmem:[#allocation8 + $0x720] sm:$0xff]
    %v490 = vld [vmem:[#allocation8 + $0x728] sm:$0xff]
    %v491 = vld [vmem:[#allocation8 + $0x730] sm:$0xff]
    %v492 = vld [vmem:[#allocation8 + $0x738] sm:$0xff]
    %v493 = vld [vmem:[#allocation8 + $0x740] sm:$0xff]
    %v494 = vld [vmem:[#allocation8 + $0x748] sm:$0xff]
    %v495 = vld [vmem:[#allocation8 + $0x750] sm:$0xff]
    %v496 = vld [vmem:[#allocation8 + $0x758] sm:$0xff]
    %v497 = vld [vmem:[#allocation8 + $0x760] sm:$0xff]
    %v498 = vld [vmem:[#allocation8 + $0x768] sm:$0xff]
    %v499 = vld [vmem:[#allocation8 + $0x770] sm:$0xff]
    %v500 = vld [vmem:[#allocation8 + $0x778] sm:$0xff]
    %v501 = vld [vmem:[#allocation8 + $0x780] sm:$0xff]
    %v502 = vld [vmem:[#allocation8 + $0x788] sm:$0xff]
    %v503 = vld [vmem:[#allocation8 + $0x790] sm:$0xff]
    %v504 = vld [vmem:[#allocation8 + $0x798] sm:$0xff]
    %v505 = vld [vmem:[#allocation8 + $0x7a0] sm:$0xff]
    %v506 = vld [vmem:[#allocation8 + $0x7a8] sm:$0xff]
    %v507 = vld [vmem:[#allocation8 + $0x7b0] sm:$0xff]
    %v508 = vld [vmem:[#allocation8 + $0x7b8] sm:$0xff]
    %v509 = vld [vmem:[#allocation8 + $0x7c0] sm:$0xff]
    %v510 = vld [vmem:[#allocation8 + $0x7c8] sm:$0xff]
    %v511 = vld [vmem:[#allocation8 + $0x7d0] sm:$0xff]
    %v512 = vld [vmem:[#allocation8 + $0x7d8] sm:$0xff]
    %v513 = vld [vmem:[#allocation8 + $0x7e0] sm:$0xff]
    %v514 = vld [vmem:[#allocation8 + $0x7e8] sm:$0xff]
    %v515 = vld [vmem:[#allocation8 + $0x7f0] sm:$0xff]
    %v516 = vld [vmem:[#allocation8 + $0x7f8] sm:$0xff]
    %v517 = vld [vmem:[#allocation8 + $0x800] sm:$0xff]
    %v518 = vld [vmem:[#allocation8 + $0x808] sm:$0xff]
    %v519 = vld [vmem:[#allocation8 + $0x810] sm:$0xff]
    %v520 = vld [vmem:[#allocation8 + $0x818] sm:$0xff]
    %v521 = vld [vmem:[#allocation8 + $0x820] sm:$0xff]
    %v522 = vld [vmem:[#allocation8 + $0x828] sm:$0xff]
    %v523 = vld [vmem:[#allocation8 + $0x830] sm:$0xff]
    %v524 = vld [vmem:[#allocation8 + $0x838] sm:$0xff]
    %v525 = vld [vmem:[#allocation8 + $0x840] sm:$0xff]
    %v526 = vld [vmem:[#allocation8 + $0x848] sm:$0xff]
    %v527 = vld [vmem:[#allocation8 + $0x850] sm:$0xff]
    %v528 = vld [vmem:[#allocation8 + $0x858] sm:$0xff]
    %v529 = vld [vmem:[#allocation8 + $0x860] sm:$0xff]
    %v530 = vld [vmem:[#allocation8 + $0x868] sm:$0xff]
    %v531 = vld [vmem:[#allocation8 + $0x870] sm:$0xff]
    %v532 = vld [vmem:[#allocation8 + $0x878] sm:$0xff]
    %v533 = vld [vmem:[#allocation8 + $0x880] sm:$0xff]
    %v534 = vld [vmem:[#allocation8 + $0x888] sm:$0xff]
    %v535 = vld [vmem:[#allocation8 + $0x890] sm:$0xff]
    %v536 = vld [vmem:[#allocation8 + $0x898] sm:$0xff]
    %v537 = vld [vmem:[#allocation8 + $0x8a0] sm:$0xff]
    %v538 = vld [vmem:[#allocation8 + $0x8a8] sm:$0xff]
    %v539 = vld [vmem:[#allocation8 + $0x8b0] sm:$0xff]
    %v540 = vld [vmem:[#allocation8 + $0x8b8] sm:$0xff]
    %v541 = vld [vmem:[#allocation8 + $0x8c0] sm:$0xff]
    %v542 = vld [vmem:[#allocation8 + $0x8c8] sm:$0xff]
    %v543 = vld [vmem:[#allocation8 + $0x8d0] sm:$0xff]
    %v544 = vld [vmem:[#allocation8 + $0x8d8] sm:$0xff]
    %v545 = vld [vmem:[#allocation8 + $0x8e0] sm:$0xff]
    %v546 = vld [vmem:[#allocation8 + $0x8e8] sm:$0xff]
    %v547 = vld [vmem:[#allocation8 + $0x8f0] sm:$0xff]
    %v548 = vld [vmem:[#allocation8 + $0x8f8] sm:$0xff]
    %v549 = vld [vmem:[#allocation13] sm:$0x3f]
    %v551 = vlaneseq
    %v552 = vshrl.u32 %v551, 7
    %v553 = vsub.s32 0, %v552
    %v554 = vrot.slane %v549, %v553
    %v555 = vlaneseq
    %v556 = vshrl.u32 %v555, 7
    %v557 = vsub.s32 1, %v556
    %v558 = vrot.slane %v549, %v557
    %v559 = vlaneseq
    %v560 = vshrl.u32 %v559, 7
    %v561 = vsub.s32 2, %v560
    %v562 = vrot.slane %v549, %v561
    %v563 = vlaneseq
    %v564 = vshrl.u32 %v563, 7
    %v565 = vsub.s32 3, %v564
    %v566 = vrot.slane %v549, %v565
    %v567 = vlaneseq
    %v568 = vshrl.u32 %v567, 7
    %v569 = vsub.s32 4, %v568
    %v570 = vrot.slane %v549, %v569
    %v571 = vlaneseq
    %v572 = vshrl.u32 %v571, 7
    %v573 = vsub.s32 5, %v572
    %v574 = vrot.slane %v549, %v573
    %v869 = vunpack.c.l.b16 %v261
    %v870 = vunpack.c.h.b16 %v261
    %v871 = vunpack.c.l.b16 %v262
    %v872 = vunpack.c.h.b16 %v262
    %v873 = vunpack.c.l.b16 %v263
    %v874 = vunpack.c.h.b16 %v263
    %v875 = vunpack.c.l.b16 %v264
    %v876 = vunpack.c.h.b16 %v264
    %v877 = vunpack.c.l.b16 %v265
    %v878 = vunpack.c.h.b16 %v265
    %v879 = vunpack.c.l.b16 %v266
    %v880 = vunpack.c.h.b16 %v266
    %v881 = vunpack.c.l.b16 %v267
    %v882 = vunpack.c.h.b16 %v267
    %v883 = vunpack.c.l.b16 %v268
    %v884 = vunpack.c.h.b16 %v268
    %v885 = vunpack.c.l.b16 %v269
    %v886 = vunpack.c.h.b16 %v269
    %v887 = vunpack.c.l.b16 %v270
    %v888 = vunpack.c.h.b16 %v270
    %v889 = vunpack.c.l.b16 %v271
    %v890 = vunpack.c.h.b16 %v271
    %v891 = vunpack.c.l.b16 %v272
    %v892 = vunpack.c.h.b16 %v272
    %v893 = vunpack.c.l.b16 %v273
    %v894 = vunpack.c.h.b16 %v273
    %v895 = vunpack.c.l.b16 %v274
    %v896 = vunpack.c.h.b16 %v274
    %v897 = vunpack.c.l.b16 %v275
    %v898 = vunpack.c.h.b16 %v275
    %v899 = vunpack.c.l.b16 %v276
    %v900 = vunpack.c.h.b16 %v276
    %v901 = vunpack.c.l.b16 %v277
    %v902 = vunpack.c.h.b16 %v277
    %v903 = vunpack.c.l.b16 %v278
    %v904 = vunpack.c.h.b16 %v278
    %v905 = vunpack.c.l.b16 %v279
    %v906 = vunpack.c.h.b16 %v279
    %v907 = vunpack.c.l.b16 %v280
    %v908 = vunpack.c.h.b16 %v280
    %v909 = vunpack.c.l.b16 %v281
    %v910 = vunpack.c.h.b16 %v281
    %v911 = vunpack.c.l.b16 %v282
    %v912 = vunpack.c.h.b16 %v282
    %v913 = vunpack.c.l.b16 %v283
    %v914 = vunpack.c.h.b16 %v283
    %v915 = vunpack.c.l.b16 %v284
    %v916 = vunpack.c.h.b16 %v284
    %v917 = vunpack.c.l.b16 %v285
    %v918 = vunpack.c.h.b16 %v285
    %v919 = vunpack.c.l.b16 %v286
    %v920 = vunpack.c.h.b16 %v286
    %v921 = vunpack.c.l.b16 %v287
    %v922 = vunpack.c.h.b16 %v287
    %v923 = vunpack.c.l.b16 %v288
    %v924 = vunpack.c.h.b16 %v288
    %v925 = vunpack.c.l.b16 %v289
    %v926 = vunpack.c.h.b16 %v289
    %v927 = vunpack.c.l.b16 %v290
    %v928 = vunpack.c.h.b16 %v290
    %v929 = vunpack.c.l.b16 %v291
    %v930 = vunpack.c.h.b16 %v291
    %v931 = vunpack.c.l.b16 %v292
    %v932 = vunpack.c.h.b16 %v292
    %v933 = vunpack.c.l.b16 %v293
    %v934 = vunpack.c.h.b16 %v293
    %v935 = vunpack.c.l.b16 %v294
    %v936 = vunpack.c.h.b16 %v294
    %v937 = vunpack.c.l.b16 %v295
    %v938 = vunpack.c.h.b16 %v295
    %v939 = vunpack.c.l.b16 %v296
    %v940 = vunpack.c.h.b16 %v296
    %v941 = vunpack.c.l.b16 %v297
    %v942 = vunpack.c.h.b16 %v297
    %v943 = vunpack.c.l.b16 %v298
    %v944 = vunpack.c.h.b16 %v298
    %v945 = vunpack.c.l.b16 %v299
    %v946 = vunpack.c.h.b16 %v299
    %v947 = vunpack.c.l.b16 %v300
    %v948 = vunpack.c.h.b16 %v300
    %v949 = vunpack.c.l.b16 %v301
    %v950 = vunpack.c.h.b16 %v301
    %v951 = vunpack.c.l.b16 %v302
    %v952 = vunpack.c.h.b16 %v302
    %v953 = vunpack.c.l.b16 %v303
    %v954 = vunpack.c.h.b16 %v303
    %v955 = vunpack.c.l.b16 %v304
    %v956 = vunpack.c.h.b16 %v304
    %v957 = vunpack.c.l.b16 %v305
    %v958 = vunpack.c.h.b16 %v305
    %v959 = vunpack.c.l.b16 %v306
    %v960 = vunpack.c.h.b16 %v306
    %v961 = vunpack.c.l.b16 %v307
    %v962 = vunpack.c.h.b16 %v307
    %v963 = vunpack.c.l.b16 %v308
    %v964 = vunpack.c.h.b16 %v308
    %v965 = vunpack.c.l.b16 %v309
    %v966 = vunpack.c.h.b16 %v309
    %v967 = vunpack.c.l.b16 %v310
    %v968 = vunpack.c.h.b16 %v310
    %v969 = vunpack.c.l.b16 %v311
    %v970 = vunpack.c.h.b16 %v311
    %v971 = vunpack.c.l.b16 %v312
    %v972 = vunpack.c.h.b16 %v312
    %v973 = vunpack.c.l.b16 %v313
    %v974 = vunpack.c.h.b16 %v313
    %v975 = vunpack.c.l.b16 %v314
    %v976 = vunpack.c.h.b16 %v314
    %v977 = vunpack.c.l.b16 %v315
    %v978 = vunpack.c.h.b16 %v315
    %v979 = vunpack.c.l.b16 %v316
    %v980 = vunpack.c.h.b16 %v316
    %v981 = vunpack.c.l.b16 %v317
    %v982 = vunpack.c.h.b16 %v317
    %v983 = vunpack.c.l.b16 %v318
    %v984 = vunpack.c.h.b16 %v318
    %v985 = vunpack.c.l.b16 %v319
    %v986 = vunpack.c.h.b16 %v319
    %v987 = vunpack.c.l.b16 %v320
    %v988 = vunpack.c.h.b16 %v320
    %v989 = vunpack.c.l.b16 %v321
    %v990 = vunpack.c.h.b16 %v321
    %v991 = vunpack.c.l.b16 %v322
    %v992 = vunpack.c.h.b16 %v322
    %v993 = vunpack.c.l.b16 %v323
    %v994 = vunpack.c.h.b16 %v323
    %v995 = vunpack.c.l.b16 %v324
    %v996 = vunpack.c.h.b16 %v324
    %v997 = vunpack.c.l.b16 %v325
    %v998 = vunpack.c.h.b16 %v325
    %v999 = vunpack.c.l.b16 %v326
    %v1000 = vunpack.c.h.b16 %v326
    %v1001 = vunpack.c.l.b16 %v327
    %v1002 = vunpack.c.h.b16 %v327
    %v1003 = vunpack.c.l.b16 %v328
    %v1004 = vunpack.c.h.b16 %v328
    %v1005 = vunpack.c.l.b16 %v329
    %v1006 = vunpack.c.h.b16 %v329
    %v1007 = vunpack.c.l.b16 %v330
    %v1008 = vunpack.c.h.b16 %v330
    %v1009 = vunpack.c.l.b16 %v331
    %v1010 = vunpack.c.h.b16 %v331
    %v1011 = vunpack.c.l.b16 %v332
    %v1012 = vunpack.c.h.b16 %v332
    %v1013 = vunpack.c.l.b16 %v333
    %v1014 = vunpack.c.h.b16 %v333
    %v1015 = vunpack.c.l.b16 %v334
    %v1016 = vunpack.c.h.b16 %v334
    %v1017 = vunpack.c.l.b16 %v335
    %v1018 = vunpack.c.h.b16 %v335
    %v1019 = vunpack.c.l.b16 %v336
    %v1020 = vunpack.c.h.b16 %v336
    %v1021 = vunpack.c.l.b16 %v337
    %v1022 = vunpack.c.h.b16 %v337
    %v1023 = vunpack.c.l.b16 %v338
    %v1024 = vunpack.c.h.b16 %v338
    %v1025 = vunpack.c.l.b16 %v339
    %v1026 = vunpack.c.h.b16 %v339
    %v1027 = vunpack.c.l.b16 %v340
    %v1028 = vunpack.c.h.b16 %v340
    %v1029 = vunpack.c.l.b16 %v341
    %v1030 = vunpack.c.h.b16 %v341
    %v1031 = vunpack.c.l.b16 %v342
    %v1032 = vunpack.c.h.b16 %v342
    %v1033 = vunpack.c.l.b16 %v343
    %v1034 = vunpack.c.h.b16 %v343
    %v1035 = vunpack.c.l.b16 %v344
    %v1036 = vunpack.c.h.b16 %v344
    %v1037 = vunpack.c.l.b16 %v345
    %v1038 = vunpack.c.h.b16 %v345
    %v1039 = vunpack.c.l.b16 %v346
    %v1040 = vunpack.c.h.b16 %v346
    %v1041 = vunpack.c.l.b16 %v347
    %v1042 = vunpack.c.h.b16 %v347
    %v1043 = vunpack.c.l.b16 %v348
    %v1044 = vunpack.c.h.b16 %v348
    %v1045 = vunpack.c.l.b16 %v349
    %v1046 = vunpack.c.h.b16 %v349
    %v1047 = vunpack.c.l.b16 %v350
    %v1048 = vunpack.c.h.b16 %v350
    %v1049 = vunpack.c.l.b16 %v351
    %v1050 = vunpack.c.h.b16 %v351
    %v1051 = vunpack.c.l.b16 %v352
    %v1052 = vunpack.c.h.b16 %v352
    %v1053 = vunpack.c.l.b16 %v353
    %v1054 = vunpack.c.h.b16 %v353
    %v1055 = vunpack.c.l.b16 %v354
    %v1056 = vunpack.c.h.b16 %v354
    %v1057 = vunpack.c.l.b16 %v355
    %v1058 = vunpack.c.h.b16 %v355
    %v1059 = vunpack.c.l.b16 %v356
    %v1060 = vunpack.c.h.b16 %v356
    %v1061 = vunpack.c.l.b16 %v357
    %v1062 = vunpack.c.h.b16 %v357
    %v1063 = vunpack.c.l.b16 %v358
    %v1064 = vunpack.c.h.b16 %v358
    %v1065 = vunpack.c.l.b16 %v359
    %v1066 = vunpack.c.h.b16 %v359
    %v1067 = vunpack.c.l.b16 %v360
    %v1068 = vunpack.c.h.b16 %v360
    %v1069 = vunpack.c.l.b16 %v361
    %v1070 = vunpack.c.h.b16 %v361
    %v1071 = vunpack.c.l.b16 %v362
    %v1072 = vunpack.c.h.b16 %v362
    %v1073 = vunpack.c.l.b16 %v363
    %v1074 = vunpack.c.h.b16 %v363
    %v1075 = vunpack.c.l.b16 %v364
    %v1076 = vunpack.c.h.b16 %v364
    %v1077 = vunpack.c.l.b16 %v365
    %v1078 = vunpack.c.h.b16 %v365
    %v1079 = vunpack.c.l.b16 %v366
    %v1080 = vunpack.c.h.b16 %v366
    %v1081 = vunpack.c.l.b16 %v367
    %v1082 = vunpack.c.h.b16 %v367
    %v1083 = vunpack.c.l.b16 %v368
    %v1084 = vunpack.c.h.b16 %v368
    %v1085 = vunpack.c.l.b16 %v369
    %v1086 = vunpack.c.h.b16 %v369
    %v1087 = vunpack.c.l.b16 %v370
    %v1088 = vunpack.c.h.b16 %v370
    %v1089 = vunpack.c.l.b16 %v371
    %v1090 = vunpack.c.h.b16 %v371
    %v1091 = vunpack.c.l.b16 %v372
    %v1092 = vunpack.c.h.b16 %v372
    %v1093 = vunpack.c.l.b16 %v373
    %v1094 = vunpack.c.h.b16 %v373
    %v1095 = vunpack.c.l.b16 %v374
    %v1096 = vunpack.c.h.b16 %v374
    %v1097 = vunpack.c.l.b16 %v375
    %v1098 = vunpack.c.h.b16 %v375
    %v1099 = vunpack.c.l.b16 %v376
    %v1100 = vunpack.c.h.b16 %v376
    %v1101 = vunpack.c.l.b16 %v377
    %v1102 = vunpack.c.h.b16 %v377
    %v1103 = vunpack.c.l.b16 %v378
    %v1104 = vunpack.c.h.b16 %v378
    %v1105 = vunpack.c.l.b16 %v379
    %v1106 = vunpack.c.h.b16 %v379
    %v1107 = vunpack.c.l.b16 %v380
    %v1108 = vunpack.c.h.b16 %v380
    %v1109 = vunpack.c.l.b16 %v381
    %v1110 = vunpack.c.h.b16 %v381
    %v1111 = vunpack.c.l.b16 %v382
    %v1112 = vunpack.c.h.b16 %v382
    %v1113 = vunpack.c.l.b16 %v383
    %v1114 = vunpack.c.h.b16 %v383
    %v1115 = vunpack.c.l.b16 %v384
    %v1116 = vunpack.c.h.b16 %v384
    %v1117 = vunpack.c.l.b16 %v385
    %v1118 = vunpack.c.h.b16 %v385
    %v1119 = vunpack.c.l.b16 %v386
    %v1120 = vunpack.c.h.b16 %v386
    %v1121 = vunpack.c.l.b16 %v387
    %v1122 = vunpack.c.h.b16 %v387
    %v1123 = vunpack.c.l.b16 %v388
    %v1124 = vunpack.c.h.b16 %v388
    %v1125 = vunpack.c.l.b16 %v389
    %v1126 = vunpack.c.h.b16 %v389
    %v1127 = vunpack.c.l.b16 %v390
    %v1128 = vunpack.c.h.b16 %v390
    %v1129 = vunpack.c.l.b16 %v391
    %v1130 = vunpack.c.h.b16 %v391
    %v1131 = vunpack.c.l.b16 %v392
    %v1132 = vunpack.c.h.b16 %v392
    %v1133 = vunpack.c.l.b16 %v393
    %v1134 = vunpack.c.h.b16 %v393
    %v1135 = vunpack.c.l.b16 %v394
    %v1136 = vunpack.c.h.b16 %v394
    %v1137 = vunpack.c.l.b16 %v395
    %v1138 = vunpack.c.h.b16 %v395
    %v1139 = vunpack.c.l.b16 %v396
    %v1140 = vunpack.c.h.b16 %v396
    %v1141 = vunpack.c.l.b16 %v397
    %v1142 = vunpack.c.h.b16 %v397
    %v1143 = vunpack.c.l.b16 %v398
    %v1144 = vunpack.c.h.b16 %v398
    %v1145 = vunpack.c.l.b16 %v399
    %v1146 = vunpack.c.h.b16 %v399
    %v1147 = vunpack.c.l.b16 %v400
    %v1148 = vunpack.c.h.b16 %v400
    %v1149 = vunpack.c.l.b16 %v401
    %v1150 = vunpack.c.h.b16 %v401
    %v1151 = vunpack.c.l.b16 %v402
    %v1152 = vunpack.c.h.b16 %v402
    %v1153 = vunpack.c.l.b16 %v403
    %v1154 = vunpack.c.h.b16 %v403
    %v1155 = vunpack.c.l.b16 %v404
    %v1156 = vunpack.c.h.b16 %v404
    %v1157 = vunpack.c.l.b16 %v405
    %v1158 = vunpack.c.h.b16 %v405
    %v1159 = vunpack.c.l.b16 %v406
    %v1160 = vunpack.c.h.b16 %v406
    %v1161 = vunpack.c.l.b16 %v407
    %v1162 = vunpack.c.h.b16 %v407
    %v1163 = vunpack.c.l.b16 %v408
    %v1164 = vunpack.c.h.b16 %v408
    %v1165 = vunpack.c.l.b16 %v409
    %v1166 = vunpack.c.h.b16 %v409
    %v1167 = vunpack.c.l.b16 %v410
    %v1168 = vunpack.c.h.b16 %v410
    %v1169 = vunpack.c.l.b16 %v411
    %v1170 = vunpack.c.h.b16 %v411
    %v1171 = vunpack.c.l.b16 %v412
    %v1172 = vunpack.c.h.b16 %v412
    %v1173 = vunpack.c.l.b16 %v413
    %v1174 = vunpack.c.h.b16 %v413
    %v1175 = vunpack.c.l.b16 %v414
    %v1176 = vunpack.c.h.b16 %v414
    %v1177 = vunpack.c.l.b16 %v415
    %v1178 = vunpack.c.h.b16 %v415
    %v1179 = vunpack.c.l.b16 %v416
    %v1180 = vunpack.c.h.b16 %v416
    %v1181 = vunpack.c.l.b16 %v417
    %v1182 = vunpack.c.h.b16 %v417
    %v1183 = vunpack.c.l.b16 %v418
    %v1184 = vunpack.c.h.b16 %v418
    %v1185 = vunpack.c.l.b16 %v419
    %v1186 = vunpack.c.h.b16 %v419
    %v1187 = vunpack.c.l.b16 %v420
    %v1188 = vunpack.c.h.b16 %v420
    %v1189 = vunpack.c.l.b16 %v421
    %v1190 = vunpack.c.h.b16 %v421
    %v1191 = vunpack.c.l.b16 %v422
    %v1192 = vunpack.c.h.b16 %v422
    %v1193 = vunpack.c.l.b16 %v423
    %v1194 = vunpack.c.h.b16 %v423
    %v1195 = vunpack.c.l.b16 %v424
    %v1196 = vunpack.c.h.b16 %v424
    %v1197 = vunpack.c.l.b16 %v425
    %v1198 = vunpack.c.h.b16 %v425
    %v1199 = vunpack.c.l.b16 %v426
    %v1200 = vunpack.c.h.b16 %v426
    %v1201 = vunpack.c.l.b16 %v427
    %v1202 = vunpack.c.h.b16 %v427
    %v1203 = vunpack.c.l.b16 %v428
    %v1204 = vunpack.c.h.b16 %v428
    %v1205 = vunpack.c.l.b16 %v429
    %v1206 = vunpack.c.h.b16 %v429
    %v1207 = vunpack.c.l.b16 %v430
    %v1208 = vunpack.c.h.b16 %v430
    %v1209 = vunpack.c.l.b16 %v431
    %v1210 = vunpack.c.h.b16 %v431
    %v1211 = vunpack.c.l.b16 %v432
    %v1212 = vunpack.c.h.b16 %v432
    %v1213 = vunpack.c.l.b16 %v433
    %v1214 = vunpack.c.h.b16 %v433
    %v1215 = vunpack.c.l.b16 %v434
    %v1216 = vunpack.c.h.b16 %v434
    %v1217 = vunpack.c.l.b16 %v435
    %v1218 = vunpack.c.h.b16 %v435
    %v1219 = vunpack.c.l.b16 %v436
    %v1220 = vunpack.c.h.b16 %v436
    %v1221 = vunpack.c.l.b16 %v437
    %v1222 = vunpack.c.h.b16 %v437
    %v1223 = vunpack.c.l.b16 %v438
    %v1224 = vunpack.c.h.b16 %v438
    %v1225 = vunpack.c.l.b16 %v439
    %v1226 = vunpack.c.h.b16 %v439
    %v1227 = vunpack.c.l.b16 %v440
    %v1228 = vunpack.c.h.b16 %v440
    %v1229 = vunpack.c.l.b16 %v441
    %v1230 = vunpack.c.h.b16 %v441
    %v1231 = vunpack.c.l.b16 %v442
    %v1232 = vunpack.c.h.b16 %v442
    %v1233 = vunpack.c.l.b16 %v443
    %v1234 = vunpack.c.h.b16 %v443
    %v1235 = vunpack.c.l.b16 %v444
    %v1236 = vunpack.c.h.b16 %v444
    %v1237 = vunpack.c.l.b16 %v445
    %v1238 = vunpack.c.h.b16 %v445
    %v1239 = vunpack.c.l.b16 %v446
    %v1240 = vunpack.c.h.b16 %v446
    %v1241 = vunpack.c.l.b16 %v447
    %v1242 = vunpack.c.h.b16 %v447
    %v1243 = vunpack.c.l.b16 %v448
    %v1244 = vunpack.c.h.b16 %v448
    %v1245 = vunpack.c.l.b16 %v449
    %v1246 = vunpack.c.h.b16 %v449
    %v1247 = vunpack.c.l.b16 %v450
    %v1248 = vunpack.c.h.b16 %v450
    %v1249 = vunpack.c.l.b16 %v451
    %v1250 = vunpack.c.h.b16 %v451
    %v1251 = vunpack.c.l.b16 %v452
    %v1252 = vunpack.c.h.b16 %v452
    %v1253 = vunpack.c.l.b16 %v453
    %v1254 = vunpack.c.h.b16 %v453
    %v1255 = vunpack.c.l.b16 %v454
    %v1256 = vunpack.c.h.b16 %v454
    %v1257 = vunpack.c.l.b16 %v455
    %v1258 = vunpack.c.h.b16 %v455
    %v1259 = vunpack.c.l.b16 %v456
    %v1260 = vunpack.c.h.b16 %v456
    %v1261 = vunpack.c.l.b16 %v457
    %v1262 = vunpack.c.h.b16 %v457
    %v1263 = vunpack.c.l.b16 %v458
    %v1264 = vunpack.c.h.b16 %v458
    %v1265 = vunpack.c.l.b16 %v459
    %v1266 = vunpack.c.h.b16 %v459
    %v1267 = vunpack.c.l.b16 %v460
    %v1268 = vunpack.c.h.b16 %v460
    %v1269 = vunpack.c.l.b16 %v461
    %v1270 = vunpack.c.h.b16 %v461
    %v1271 = vunpack.c.l.b16 %v462
    %v1272 = vunpack.c.h.b16 %v462
    %v1273 = vunpack.c.l.b16 %v463
    %v1274 = vunpack.c.h.b16 %v463
    %v1275 = vunpack.c.l.b16 %v464
    %v1276 = vunpack.c.h.b16 %v464
    %v1277 = vunpack.c.l.b16 %v465
    %v1278 = vunpack.c.h.b16 %v465
    %v1279 = vunpack.c.l.b16 %v466
    %v1280 = vunpack.c.h.b16 %v466
    %v1281 = vunpack.c.l.b16 %v467
    %v1282 = vunpack.c.h.b16 %v467
    %v1283 = vunpack.c.l.b16 %v468
    %v1284 = vunpack.c.h.b16 %v468
    %v1285 = vunpack.c.l.b16 %v469
    %v1286 = vunpack.c.h.b16 %v469
    %v1287 = vunpack.c.l.b16 %v470
    %v1288 = vunpack.c.h.b16 %v470
    %v1289 = vunpack.c.l.b16 %v471
    %v1290 = vunpack.c.h.b16 %v471
    %v1291 = vunpack.c.l.b16 %v472
    %v1292 = vunpack.c.h.b16 %v472
    %v1293 = vunpack.c.l.b16 %v473
    %v1294 = vunpack.c.h.b16 %v473
    %v1295 = vunpack.c.l.b16 %v474
    %v1296 = vunpack.c.h.b16 %v474
    %v1297 = vunpack.c.l.b16 %v475
    %v1298 = vunpack.c.h.b16 %v475
    %v1299 = vunpack.c.l.b16 %v476
    %v1300 = vunpack.c.h.b16 %v476
    %v1301 = vunpack.c.l.b16 %v477
    %v1302 = vunpack.c.h.b16 %v477
    %v1303 = vunpack.c.l.b16 %v478
    %v1304 = vunpack.c.h.b16 %v478
    %v1305 = vunpack.c.l.b16 %v479
    %v1306 = vunpack.c.h.b16 %v479
    %v1307 = vunpack.c.l.b16 %v480
    %v1308 = vunpack.c.h.b16 %v480
    %v1309 = vunpack.c.l.b16 %v481
    %v1310 = vunpack.c.h.b16 %v481
    %v1311 = vunpack.c.l.b16 %v482
    %v1312 = vunpack.c.h.b16 %v482
    %v1313 = vunpack.c.l.b16 %v483
    %v1314 = vunpack.c.h.b16 %v483
    %v1315 = vunpack.c.l.b16 %v484
    %v1316 = vunpack.c.h.b16 %v484
    %v1317 = vunpack.c.l.b16 %v485
    %v1318 = vunpack.c.h.b16 %v485
    %v1319 = vunpack.c.l.b16 %v486
    %v1320 = vunpack.c.h.b16 %v486
    %v1321 = vunpack.c.l.b16 %v487
    %v1322 = vunpack.c.h.b16 %v487
    %v1323 = vunpack.c.l.b16 %v488
    %v1324 = vunpack.c.h.b16 %v488
    %v1325 = vunpack.c.l.b16 %v489
    %v1326 = vunpack.c.h.b16 %v489
    %v1327 = vunpack.c.l.b16 %v490
    %v1328 = vunpack.c.h.b16 %v490
    %v1329 = vunpack.c.l.b16 %v491
    %v1330 = vunpack.c.h.b16 %v491
    %v1331 = vunpack.c.l.b16 %v492
    %v1332 = vunpack.c.h.b16 %v492
    %v1333 = vunpack.c.l.b16 %v493
    %v1334 = vunpack.c.h.b16 %v493
    %v1335 = vunpack.c.l.b16 %v494
    %v1336 = vunpack.c.h.b16 %v494
    %v1337 = vunpack.c.l.b16 %v495
    %v1338 = vunpack.c.h.b16 %v495
    %v1339 = vunpack.c.l.b16 %v496
    %v1340 = vunpack.c.h.b16 %v496
    %v1341 = vunpack.c.l.b16 %v497
    %v1342 = vunpack.c.h.b16 %v497
    %v1343 = vunpack.c.l.b16 %v498
    %v1344 = vunpack.c.h.b16 %v498
    %v1345 = vunpack.c.l.b16 %v499
    %v1346 = vunpack.c.h.b16 %v499
    %v1347 = vunpack.c.l.b16 %v500
    %v1348 = vunpack.c.h.b16 %v500
    %v1349 = vunpack.c.l.b16 %v501
    %v1350 = vunpack.c.h.b16 %v501
    %v1351 = vunpack.c.l.b16 %v502
    %v1352 = vunpack.c.h.b16 %v502
    %v1353 = vunpack.c.l.b16 %v503
    %v1354 = vunpack.c.h.b16 %v503
    %v1355 = vunpack.c.l.b16 %v504
    %v1356 = vunpack.c.h.b16 %v504
    %v1357 = vunpack.c.l.b16 %v505
    %v1358 = vunpack.c.h.b16 %v505
    %v1359 = vunpack.c.l.b16 %v506
    %v1360 = vunpack.c.h.b16 %v506
    %v1361 = vunpack.c.l.b16 %v507
    %v1362 = vunpack.c.h.b16 %v507
    %v1363 = vunpack.c.l.b16 %v508
    %v1364 = vunpack.c.h.b16 %v508
    %v1365 = vunpack.c.l.b16 %v509
    %v1366 = vunpack.c.h.b16 %v509
    %v1367 = vunpack.c.l.b16 %v510
    %v1368 = vunpack.c.h.b16 %v510
    %v1369 = vunpack.c.l.b16 %v511
    %v1370 = vunpack.c.h.b16 %v511
    %v1371 = vunpack.c.l.b16 %v512
    %v1372 = vunpack.c.h.b16 %v512
    %v1373 = vunpack.c.l.b16 %v513
    %v1374 = vunpack.c.h.b16 %v513
    %v1375 = vunpack.c.l.b16 %v514
    %v1376 = vunpack.c.h.b16 %v514
    %v1377 = vunpack.c.l.b16 %v515
    %v1378 = vunpack.c.h.b16 %v515
    %v1379 = vunpack.c.l.b16 %v516
    %v1380 = vunpack.c.h.b16 %v516
    %v1381 = vunpack.c.l.b16 %v517
    %v1382 = vunpack.c.h.b16 %v517
    %v1383 = vunpack.c.l.b16 %v518
    %v1384 = vunpack.c.h.b16 %v518
    %v1385 = vunpack.c.l.b16 %v519
    %v1386 = vunpack.c.h.b16 %v519
    %v1387 = vunpack.c.l.b16 %v520
    %v1388 = vunpack.c.h.b16 %v520
    %v1389 = vunpack.c.l.b16 %v521
    %v1390 = vunpack.c.h.b16 %v521
    %v1391 = vunpack.c.l.b16 %v522
    %v1392 = vunpack.c.h.b16 %v522
    %v1393 = vunpack.c.l.b16 %v523
    %v1394 = vunpack.c.h.b16 %v523
    %v1395 = vunpack.c.l.b16 %v524
    %v1396 = vunpack.c.h.b16 %v524
    %v1397 = vunpack.c.l.b16 %v525
    %v1398 = vunpack.c.h.b16 %v525
    %v1399 = vunpack.c.l.b16 %v526
    %v1400 = vunpack.c.h.b16 %v526
    %v1401 = vunpack.c.l.b16 %v527
    %v1402 = vunpack.c.h.b16 %v527
    %v1403 = vunpack.c.l.b16 %v528
    %v1404 = vunpack.c.h.b16 %v528
    %v1405 = vunpack.c.l.b16 %v529
    %v1406 = vunpack.c.h.b16 %v529
    %v1407 = vunpack.c.l.b16 %v530
    %v1408 = vunpack.c.h.b16 %v530
    %v1409 = vunpack.c.l.b16 %v531
    %v1410 = vunpack.c.h.b16 %v531
    %v1411 = vunpack.c.l.b16 %v532
    %v1412 = vunpack.c.h.b16 %v532
    %v1413 = vunpack.c.l.b16 %v533
    %v1414 = vunpack.c.h.b16 %v533
    %v1415 = vunpack.c.l.b16 %v534
    %v1416 = vunpack.c.h.b16 %v534
    %v1417 = vunpack.c.l.b16 %v535
    %v1418 = vunpack.c.h.b16 %v535
    %v1419 = vunpack.c.l.b16 %v536
    %v1420 = vunpack.c.h.b16 %v536
    %v1421 = vunpack.c.l.b16 %v537
    %v1422 = vunpack.c.h.b16 %v537
    %v1423 = vunpack.c.l.b16 %v538
    %v1424 = vunpack.c.h.b16 %v538
    %v1425 = vunpack.c.l.b16 %v539
    %v1426 = vunpack.c.h.b16 %v539
    %v1427 = vunpack.c.l.b16 %v540
    %v1428 = vunpack.c.h.b16 %v540
    %v1429 = vunpack.c.l.b16 %v541
    %v1430 = vunpack.c.h.b16 %v541
    %v1431 = vunpack.c.l.b16 %v542
    %v1432 = vunpack.c.h.b16 %v542
    %v1433 = vunpack.c.l.b16 %v543
    %v1434 = vunpack.c.h.b16 %v543
    %v1435 = vunpack.c.l.b16 %v544
    %v1436 = vunpack.c.h.b16 %v544
    %v1437 = vunpack.c.l.b16 %v545
    %v1438 = vunpack.c.h.b16 %v545
    %v1439 = vunpack.c.l.b16 %v546
    %v1440 = vunpack.c.h.b16 %v546
    %v1441 = vunpack.c.l.b16 %v547
    %v1442 = vunpack.c.h.b16 %v547
    %v1443 = vunpack.c.l.b16 %v548
    %v1444 = vunpack.c.h.b16 %v548
    %v1445 = vpack.c.b16 %v875, %v869
    %v1446 = vpack.c.b16 %v876, %v870
    %v1447 = vpack.c.b16 %v877, %v871
    %v1448 = vpack.c.b16 %v878, %v872
    %v1449 = vpack.c.b16 %v879, %v873
    %v1450 = vpack.c.b16 %v880, %v874
    %v1451 = vpack.c.b16 %v887, %v881
    %v1452 = vpack.c.b16 %v888, %v882
    %v1453 = vpack.c.b16 %v889, %v883
    %v1454 = vpack.c.b16 %v890, %v884
    %v1455 = vpack.c.b16 %v891, %v885
    %v1456 = vpack.c.b16 %v892, %v886
    %v1457 = vpack.c.b16 %v899, %v893
    %v1458 = vpack.c.b16 %v900, %v894
    %v1459 = vpack.c.b16 %v901, %v895
    %v1460 = vpack.c.b16 %v902, %v896
    %v1461 = vpack.c.b16 %v903, %v897
    %v1462 = vpack.c.b16 %v904, %v898
    %v1463 = vpack.c.b16 %v911, %v905
    %v1464 = vpack.c.b16 %v912, %v906
    %v1465 = vpack.c.b16 %v913, %v907
    %v1466 = vpack.c.b16 %v914, %v908
    %v1467 = vpack.c.b16 %v915, %v909
    %v1468 = vpack.c.b16 %v916, %v910
    %v1469 = vpack.c.b16 %v923, %v917
    %v1470 = vpack.c.b16 %v924, %v918
    %v1471 = vpack.c.b16 %v925, %v919
    %v1472 = vpack.c.b16 %v926, %v920
    %v1473 = vpack.c.b16 %v927, %v921
    %v1474 = vpack.c.b16 %v928, %v922
    %v1475 = vpack.c.b16 %v935, %v929
    %v1476 = vpack.c.b16 %v936, %v930
    %v1477 = vpack.c.b16 %v937, %v931
    %v1478 = vpack.c.b16 %v938, %v932
    %v1479 = vpack.c.b16 %v939, %v933
    %v1480 = vpack.c.b16 %v940, %v934
    %v1481 = vpack.c.b16 %v947, %v941
    %v1482 = vpack.c.b16 %v948, %v942
    %v1483 = vpack.c.b16 %v949, %v943
    %v1484 = vpack.c.b16 %v950, %v944
    %v1485 = vpack.c.b16 %v951, %v945
    %v1486 = vpack.c.b16 %v952, %v946
    %v1487 = vpack.c.b16 %v959, %v953
    %v1488 = vpack.c.b16 %v960, %v954
    %v1489 = vpack.c.b16 %v961, %v955
    %v1490 = vpack.c.b16 %v962, %v956
    %v1491 = vpack.c.b16 %v963, %v957
    %v1492 = vpack.c.b16 %v964, %v958
    %v1493 = vpack.c.b16 %v971, %v965
    %v1494 = vpack.c.b16 %v972, %v966
    %v1495 = vpack.c.b16 %v973, %v967
    %v1496 = vpack.c.b16 %v974, %v968
    %v1497 = vpack.c.b16 %v975, %v969
    %v1498 = vpack.c.b16 %v976, %v970
    %v1499 = vpack.c.b16 %v983, %v977
    %v1500 = vpack.c.b16 %v984, %v978
    %v1501 = vpack.c.b16 %v985, %v979
    %v1502 = vpack.c.b16 %v986, %v980
    %v1503 = vpack.c.b16 %v987, %v981
    %v1504 = vpack.c.b16 %v988, %v982
    %v1505 = vpack.c.b16 %v995, %v989
    %v1506 = vpack.c.b16 %v996, %v990
    %v1507 = vpack.c.b16 %v997, %v991
    %v1508 = vpack.c.b16 %v998, %v992
    %v1509 = vpack.c.b16 %v999, %v993
    %v1510 = vpack.c.b16 %v1000, %v994
    %v1511 = vpack.c.b16 %v1007, %v1001
    %v1512 = vpack.c.b16 %v1008, %v1002
    %v1513 = vpack.c.b16 %v1009, %v1003
    %v1514 = vpack.c.b16 %v1010, %v1004
    %v1515 = vpack.c.b16 %v1011, %v1005
    %v1516 = vpack.c.b16 %v1012, %v1006
    %v1517 = vpack.c.b16 %v1019, %v1013
    %v1518 = vpack.c.b16 %v1020, %v1014
    %v1519 = vpack.c.b16 %v1021, %v1015
    %v1520 = vpack.c.b16 %v1022, %v1016
    %v1521 = vpack.c.b16 %v1023, %v1017
    %v1522 = vpack.c.b16 %v1024, %v1018
    %v1523 = vpack.c.b16 %v1031, %v1025
    %v1524 = vpack.c.b16 %v1032, %v1026
    %v1525 = vpack.c.b16 %v1033, %v1027
    %v1526 = vpack.c.b16 %v1034, %v1028
    %v1527 = vpack.c.b16 %v1035, %v1029
    %v1528 = vpack.c.b16 %v1036, %v1030
    %v1529 = vpack.c.b16 %v1043, %v1037
    %v1530 = vpack.c.b16 %v1044, %v1038
    %v1531 = vpack.c.b16 %v1045, %v1039
    %v1532 = vpack.c.b16 %v1046, %v1040
    %v1533 = vpack.c.b16 %v1047, %v1041
    %v1534 = vpack.c.b16 %v1048, %v1042
    %v1535 = vpack.c.b16 %v1055, %v1049
    %v1536 = vpack.c.b16 %v1056, %v1050
    %v1537 = vpack.c.b16 %v1057, %v1051
    %v1538 = vpack.c.b16 %v1058, %v1052
    %v1539 = vpack.c.b16 %v1059, %v1053
    %v1540 = vpack.c.b16 %v1060, %v1054
    %v1541 = vpack.c.b16 %v1067, %v1061
    %v1542 = vpack.c.b16 %v1068, %v1062
    %v1543 = vpack.c.b16 %v1069, %v1063
    %v1544 = vpack.c.b16 %v1070, %v1064
    %v1545 = vpack.c.b16 %v1071, %v1065
    %v1546 = vpack.c.b16 %v1072, %v1066
    %v1547 = vpack.c.b16 %v1079, %v1073
    %v1548 = vpack.c.b16 %v1080, %v1074
    %v1549 = vpack.c.b16 %v1081, %v1075
    %v1550 = vpack.c.b16 %v1082, %v1076
    %v1551 = vpack.c.b16 %v1083, %v1077
    %v1552 = vpack.c.b16 %v1084, %v1078
    %v1553 = vpack.c.b16 %v1091, %v1085
    %v1554 = vpack.c.b16 %v1092, %v1086
    %v1555 = vpack.c.b16 %v1093, %v1087
    %v1556 = vpack.c.b16 %v1094, %v1088
    %v1557 = vpack.c.b16 %v1095, %v1089
    %v1558 = vpack.c.b16 %v1096, %v1090
    %v1559 = vpack.c.b16 %v1103, %v1097
    %v1560 = vpack.c.b16 %v1104, %v1098
    %v1561 = vpack.c.b16 %v1105, %v1099
    %v1562 = vpack.c.b16 %v1106, %v1100
    %v1563 = vpack.c.b16 %v1107, %v1101
    %v1564 = vpack.c.b16 %v1108, %v1102
    %v1565 = vpack.c.b16 %v1115, %v1109
    %v1566 = vpack.c.b16 %v1116, %v1110
    %v1567 = vpack.c.b16 %v1117, %v1111
    %v1568 = vpack.c.b16 %v1118, %v1112
    %v1569 = vpack.c.b16 %v1119, %v1113
    %v1570 = vpack.c.b16 %v1120, %v1114
    %v1571 = vpack.c.b16 %v1127, %v1121
    %v1572 = vpack.c.b16 %v1128, %v1122
    %v1573 = vpack.c.b16 %v1129, %v1123
    %v1574 = vpack.c.b16 %v1130, %v1124
    %v1575 = vpack.c.b16 %v1131, %v1125
    %v1576 = vpack.c.b16 %v1132, %v1126
    %v1577 = vpack.c.b16 %v1139, %v1133
    %v1578 = vpack.c.b16 %v1140, %v1134
    %v1579 = vpack.c.b16 %v1141, %v1135
    %v1580 = vpack.c.b16 %v1142, %v1136
    %v1581 = vpack.c.b16 %v1143, %v1137
    %v1582 = vpack.c.b16 %v1144, %v1138
    %v1583 = vpack.c.b16 %v1151, %v1145
    %v1584 = vpack.c.b16 %v1152, %v1146
    %v1585 = vpack.c.b16 %v1153, %v1147
    %v1586 = vpack.c.b16 %v1154, %v1148
    %v1587 = vpack.c.b16 %v1155, %v1149
    %v1588 = vpack.c.b16 %v1156, %v1150
    %v1589 = vpack.c.b16 %v1163, %v1157
    %v1590 = vpack.c.b16 %v1164, %v1158
    %v1591 = vpack.c.b16 %v1165, %v1159
    %v1592 = vpack.c.b16 %v1166, %v1160
    %v1593 = vpack.c.b16 %v1167, %v1161
    %v1594 = vpack.c.b16 %v1168, %v1162
    %v1595 = vpack.c.b16 %v1175, %v1169
    %v1596 = vpack.c.b16 %v1176, %v1170
    %v1597 = vpack.c.b16 %v1177, %v1171
    %v1598 = vpack.c.b16 %v1178, %v1172
    %v1599 = vpack.c.b16 %v1179, %v1173
    %v1600 = vpack.c.b16 %v1180, %v1174
    %v1601 = vpack.c.b16 %v1187, %v1181
    %v1602 = vpack.c.b16 %v1188, %v1182
    %v1603 = vpack.c.b16 %v1189, %v1183
    %v1604 = vpack.c.b16 %v1190, %v1184
    %v1605 = vpack.c.b16 %v1191, %v1185
    %v1606 = vpack.c.b16 %v1192, %v1186
    %v1607 = vpack.c.b16 %v1199, %v1193
    %v1608 = vpack.c.b16 %v1200, %v1194
    %v1609 = vpack.c.b16 %v1201, %v1195
    %v1610 = vpack.c.b16 %v1202, %v1196
    %v1611 = vpack.c.b16 %v1203, %v1197
    %v1612 = vpack.c.b16 %v1204, %v1198
    %v1613 = vpack.c.b16 %v1211, %v1205
    %v1614 = vpack.c.b16 %v1212, %v1206
    %v1615 = vpack.c.b16 %v1213, %v1207
    %v1616 = vpack.c.b16 %v1214, %v1208
    %v1617 = vpack.c.b16 %v1215, %v1209
    %v1618 = vpack.c.b16 %v1216, %v1210
    %v1619 = vpack.c.b16 %v1223, %v1217
    %v1620 = vpack.c.b16 %v1224, %v1218
    %v1621 = vpack.c.b16 %v1225, %v1219
    %v1622 = vpack.c.b16 %v1226, %v1220
    %v1623 = vpack.c.b16 %v1227, %v1221
    %v1624 = vpack.c.b16 %v1228, %v1222
    %v1625 = vpack.c.b16 %v1235, %v1229
    %v1626 = vpack.c.b16 %v1236, %v1230
    %v1627 = vpack.c.b16 %v1237, %v1231
    %v1628 = vpack.c.b16 %v1238, %v1232
    %v1629 = vpack.c.b16 %v1239, %v1233
    %v1630 = vpack.c.b16 %v1240, %v1234
    %v1631 = vpack.c.b16 %v1247, %v1241
    %v1632 = vpack.c.b16 %v1248, %v1242
    %v1633 = vpack.c.b16 %v1249, %v1243
    %v1634 = vpack.c.b16 %v1250, %v1244
    %v1635 = vpack.c.b16 %v1251, %v1245
    %v1636 = vpack.c.b16 %v1252, %v1246
    %v1637 = vpack.c.b16 %v1259, %v1253
    %v1638 = vpack.c.b16 %v1260, %v1254
    %v1639 = vpack.c.b16 %v1261, %v1255
    %v1640 = vpack.c.b16 %v1262, %v1256
    %v1641 = vpack.c.b16 %v1263, %v1257
    %v1642 = vpack.c.b16 %v1264, %v1258
    %v1643 = vpack.c.b16 %v1271, %v1265
    %v1644 = vpack.c.b16 %v1272, %v1266
    %v1645 = vpack.c.b16 %v1273, %v1267
    %v1646 = vpack.c.b16 %v1274, %v1268
    %v1647 = vpack.c.b16 %v1275, %v1269
    %v1648 = vpack.c.b16 %v1276, %v1270
    %v1649 = vpack.c.b16 %v1283, %v1277
    %v1650 = vpack.c.b16 %v1284, %v1278
    %v1651 = vpack.c.b16 %v1285, %v1279
    %v1652 = vpack.c.b16 %v1286, %v1280
    %v1653 = vpack.c.b16 %v1287, %v1281
    %v1654 = vpack.c.b16 %v1288, %v1282
    %v1655 = vpack.c.b16 %v1295, %v1289
    %v1656 = vpack.c.b16 %v1296, %v1290
    %v1657 = vpack.c.b16 %v1297, %v1291
    %v1658 = vpack.c.b16 %v1298, %v1292
    %v1659 = vpack.c.b16 %v1299, %v1293
    %v1660 = vpack.c.b16 %v1300, %v1294
    %v1661 = vpack.c.b16 %v1307, %v1301
    %v1662 = vpack.c.b16 %v1308, %v1302
    %v1663 = vpack.c.b16 %v1309, %v1303
    %v1664 = vpack.c.b16 %v1310, %v1304
    %v1665 = vpack.c.b16 %v1311, %v1305
    %v1666 = vpack.c.b16 %v1312, %v1306
    %v1667 = vpack.c.b16 %v1319, %v1313
    %v1668 = vpack.c.b16 %v1320, %v1314
    %v1669 = vpack.c.b16 %v1321, %v1315
    %v1670 = vpack.c.b16 %v1322, %v1316
    %v1671 = vpack.c.b16 %v1323, %v1317
    %v1672 = vpack.c.b16 %v1324, %v1318
    %v1673 = vpack.c.b16 %v1331, %v1325
    %v1674 = vpack.c.b16 %v1332, %v1326
    %v1675 = vpack.c.b16 %v1333, %v1327
    %v1676 = vpack.c.b16 %v1334, %v1328
    %v1677 = vpack.c.b16 %v1335, %v1329
    %v1678 = vpack.c.b16 %v1336, %v1330
    %v1679 = vpack.c.b16 %v1343, %v1337
    %v1680 = vpack.c.b16 %v1344, %v1338
    %v1681 = vpack.c.b16 %v1345, %v1339
    %v1682 = vpack.c.b16 %v1346, %v1340
    %v1683 = vpack.c.b16 %v1347, %v1341
    %v1684 = vpack.c.b16 %v1348, %v1342
    %v1685 = vpack.c.b16 %v1355, %v1349
    %v1686 = vpack.c.b16 %v1356, %v1350
    %v1687 = vpack.c.b16 %v1357, %v1351
    %v1688 = vpack.c.b16 %v1358, %v1352
    %v1689 = vpack.c.b16 %v1359, %v1353
    %v1690 = vpack.c.b16 %v1360, %v1354
    %v1691 = vpack.c.b16 %v1367, %v1361
    %v1692 = vpack.c.b16 %v1368, %v1362
    %v1693 = vpack.c.b16 %v1369, %v1363
    %v1694 = vpack.c.b16 %v1370, %v1364
    %v1695 = vpack.c.b16 %v1371, %v1365
    %v1696 = vpack.c.b16 %v1372, %v1366
    %v1697 = vpack.c.b16 %v1379, %v1373
    %v1698 = vpack.c.b16 %v1380, %v1374
    %v1699 = vpack.c.b16 %v1381, %v1375
    %v1700 = vpack.c.b16 %v1382, %v1376
    %v1701 = vpack.c.b16 %v1383, %v1377
    %v1702 = vpack.c.b16 %v1384, %v1378
    %v1703 = vpack.c.b16 %v1391, %v1385
    %v1704 = vpack.c.b16 %v1392, %v1386
    %v1705 = vpack.c.b16 %v1393, %v1387
    %v1706 = vpack.c.b16 %v1394, %v1388
    %v1707 = vpack.c.b16 %v1395, %v1389
    %v1708 = vpack.c.b16 %v1396, %v1390
    %v1709 = vpack.c.b16 %v1403, %v1397
    %v1710 = vpack.c.b16 %v1404, %v1398
    %v1711 = vpack.c.b16 %v1405, %v1399
    %v1712 = vpack.c.b16 %v1406, %v1400
    %v1713 = vpack.c.b16 %v1407, %v1401
    %v1714 = vpack.c.b16 %v1408, %v1402
    %v1715 = vpack.c.b16 %v1415, %v1409
    %v1716 = vpack.c.b16 %v1416, %v1410
    %v1717 = vpack.c.b16 %v1417, %v1411
    %v1718 = vpack.c.b16 %v1418, %v1412
    %v1719 = vpack.c.b16 %v1419, %v1413
    %v1720 = vpack.c.b16 %v1420, %v1414
    %v1721 = vpack.c.b16 %v1427, %v1421
    %v1722 = vpack.c.b16 %v1428, %v1422
    %v1723 = vpack.c.b16 %v1429, %v1423
    %v1724 = vpack.c.b16 %v1430, %v1424
    %v1725 = vpack.c.b16 %v1431, %v1425
    %v1726 = vpack.c.b16 %v1432, %v1426
    %v1727 = vpack.c.b16 %v1439, %v1433
    %v1728 = vpack.c.b16 %v1440, %v1434
    %v1729 = vpack.c.b16 %v1441, %v1435
    %v1730 = vpack.c.b16 %v1442, %v1436
    %v1731 = vpack.c.b16 %v1443, %v1437
    %v1732 = vpack.c.b16 %v1444, %v1438
    %2021 = vmatprep.subr.bf16.mxu0 %v1446
    %2022 = vmatpush1.bf16.msra.mxu0 %v1445
    %2023 = vmatprep.subr.bf16.mxu0 %v1452
    %2024 = vmatpush1.bf16.msra.mxu0 %v1451
    %2025 = vmatprep.subr.bf16.mxu0 %v1458
    %2026 = vmatpush1.bf16.msra.mxu0 %v1457
    %2027 = vmatprep.subr.bf16.mxu0 %v1464
    %2028 = vmatpush1.bf16.msra.mxu0 %v1463
    %2029 = vmatprep.subr.bf16.mxu0 %v1470
    %2030 = vmatpush1.bf16.msra.mxu0 %v1469
    %2031 = vmatprep.subr.bf16.mxu0 %v1476
    %2032 = vmatpush1.bf16.msra.mxu0 %v1475
    %2033 = vmatprep.subr.bf16.mxu0 %v1482
    %2034 = vmatpush1.bf16.msra.mxu0 %v1481
    %2035 = vmatprep.subr.bf16.mxu0 %v1488
    %2036 = vmatpush1.bf16.msra.mxu0 %v1487
    %2037 = vmatprep.subr.bf16.mxu0 %v1494
    %2038 = vmatpush1.bf16.msra.mxu0 %v1493
    %2039 = vmatprep.subr.bf16.mxu0 %v1500
    %2040 = vmatpush1.bf16.msra.mxu0 %v1499
    %2041 = vmatprep.subr.bf16.mxu0 %v1506
    %2042 = vmatpush1.bf16.msra.mxu0 %v1505
    %2043 = vmatprep.subr.bf16.mxu0 %v1512
    %2044 = vmatpush1.bf16.msra.mxu0 %v1511
    %2045 = vmatprep.subr.bf16.mxu0 %v1518
    %2046 = vmatpush1.bf16.msra.mxu0 %v1517
    %2047 = vmatprep.subr.bf16.mxu0 %v1524
    %2048 = vmatpush1.bf16.msra.mxu0 %v1523
    %2049 = vmatprep.subr.bf16.mxu0 %v1530
    %2050 = vmatpush1.bf16.msra.mxu0 %v1529
    %2051 = vmatprep.subr.bf16.mxu0 %v1536
    %2052 = vmatpush1.bf16.msra.mxu0 %v1535
    %2053 = vmatprep.mubr.bf16.mxu0 %v178
    %2054 = vmatmul.mubr.bf16.gmra.mrb[0].mxu0 %v177
    %v2055 = vpop.f32.mrb[0].mxu0
    %v2056 = vadd.f32 %v554, %v2055
    %v2057 = vpop.f32.mrb[0].mxu0
    %v2058 = vadd.f32 %v558, %v2057
    %v2059 = vpop.f32.mrb[0].mxu0
    %v2060 = vadd.f32 %v554, %v2059
    %v2061 = vpop.f32.mrb[0].mxu0
    %v2062 = vadd.f32 %v558, %v2061
    %2063 = vmatprep.mubr.bf16.mxu0 %v184
    %2064 = vmatmul.mubr.bf16.gmra.mrb[0].mxu0 %v183
    %v2065 = vpop.f32.mrb[0].mxu0
    %v2066 = vadd.f32 %v554, %v2065
    %v2067 = vpop.f32.mrb[0].mxu0
    %v2068 = vadd.f32 %v558, %v2067
    %v2069 = vpop.f32.mrb[0].mxu0
    %v2070 = vadd.f32 %v554, %v2069
    %v2071 = vpop.f32.mrb[0].mxu0
    %v2072 = vadd.f32 %v558, %v2071
    %2073 = vdwg.mxu0
    %2074 = vmatprep.subr.bf16.mxu0 %v1542
    %2075 = vmatpush1.bf16.msra.mxu0 %v1541
    %2076 = vmatprep.subr.bf16.mxu0 %v1548
    %2077 = vmatpush1.bf16.msra.mxu0 %v1547
    %2078 = vmatprep.subr.bf16.mxu0 %v1554
    %2079 = vmatpush1.bf16.msra.mxu0 %v1553
    %2080 = vmatprep.subr.bf16.mxu0 %v1560
    %2081 = vmatpush1.bf16.msra.mxu0 %v1559
    %2082 = vmatprep.subr.bf16.mxu0 %v1566
    %2083 = vmatpush1.bf16.msra.mxu0 %v1565
    %2084 = vmatprep.subr.bf16.mxu0 %v1572
    %2085 = vmatpush1.bf16.msra.mxu0 %v1571
    %2086 = vmatprep.subr.bf16.mxu0 %v1578
    %2087 = vmatpush1.bf16.msra.mxu0 %v1577
    %2088 = vmatprep.subr.bf16.mxu0 %v1584
    %2089 = vmatpush1.bf16.msra.mxu0 %v1583
    %2090 = vmatprep.subr.bf16.mxu0 %v1590
    %2091 = vmatpush1.bf16.msra.mxu0 %v1589
    %2092 = vmatprep.subr.bf16.mxu0 %v1596
    %2093 = vmatpush1.bf16.msra.mxu0 %v1595
    %2094 = vmatprep.subr.bf16.mxu0 %v1602
    %2095 = vmatpush1.bf16.msra.mxu0 %v1601
    %2096 = vmatprep.subr.bf16.mxu0 %v1608
    %2097 = vmatpush1.bf16.msra.mxu0 %v1607
    %2098 = vmatprep.subr.bf16.mxu0 %v1614
    %2099 = vmatpush1.bf16.msra.mxu0 %v1613
    %2100 = vmatprep.subr.bf16.mxu0 %v1620
    %2101 = vmatpush1.bf16.msra.mxu0 %v1619
    %2102 = vmatprep.subr.bf16.mxu0 %v1626
    %2103 = vmatpush1.bf16.msra.mxu0 %v1625
    %2104 = vmatprep.subr.bf16.mxu0 %v1632
    %2105 = vmatpush1.bf16.msra.mxu0 %v1631
    %2106 = vmatprep.mubr.bf16.mxu0 %v180
    %2107 = vmatmul.mubr.bf16.gmra.mrb[0].mxu0 %v179
    %v2108 = vpop.f32.mrb[0].mxu0
    %v2109 = vadd.f32 %v2056, %v2108
    %v2110 = vpop.f32.mrb[0].mxu0
    %v2111 = vadd.f32 %v2058, %v2110
    %v2112 = vpop.f32.mrb[0].mxu0
    %v2113 = vadd.f32 %v2060, %v2112
    %v2114 = vpop.f32.mrb[0].mxu0
    %v2115 = vadd.f32 %v2062, %v2114
    %2116 = vmatprep.mubr.bf16.mxu0 %v186
    %2117 = vmatmul.mubr.bf16.gmra.mrb[0].mxu0 %v185
    %v2118 = vpop.f32.mrb[0].mxu0
    %v2119 = vadd.f32 %v2066, %v2118
    %v2120 = vpop.f32.mrb[0].mxu0
    %v2121 = vadd.f32 %v2068, %v2120
    %v2122 = vpop.f32.mrb[0].mxu0
    %v2123 = vadd.f32 %v2070, %v2122
    %v2124 = vpop.f32.mrb[0].mxu0
    %v2125 = vadd.f32 %v2072, %v2124
    %2126 = vdwg.mxu0
    %2127 = vmatprep.subr.bf16.mxu0 %v1638
    %2128 = vmatpush1.bf16.msra.mxu0 %v1637
    %2129 = vmatprep.subr.bf16.mxu0 %v1644
    %2130 = vmatpush1.bf16.msra.mxu0 %v1643
    %2131 = vmatprep.subr.bf16.mxu0 %v1650
    %2132 = vmatpush1.bf16.msra.mxu0 %v1649
    %2133 = vmatprep.subr.bf16.mxu0 %v1656
    %2134 = vmatpush1.bf16.msra.mxu0 %v1655
    %2135 = vmatprep.subr.bf16.mxu0 %v1662
    %2136 = vmatpush1.bf16.msra.mxu0 %v1661
    %2137 = vmatprep.subr.bf16.mxu0 %v1668
    %2138 = vmatpush1.bf16.msra.mxu0 %v1667
    %2139 = vmatprep.subr.bf16.mxu0 %v1674
    %2140 = vmatpush1.bf16.msra.mxu0 %v1673
    %2141 = vmatprep.subr.bf16.mxu0 %v1680
    %2142 = vmatpush1.bf16.msra.mxu0 %v1679
    %2143 = vmatprep.subr.bf16.mxu0 %v1686
    %2144 = vmatpush1.bf16.msra.mxu0 %v1685
    %2145 = vmatprep.subr.bf16.mxu0 %v1692
    %2146 = vmatpush1.bf16.msra.mxu0 %v1691
    %2147 = vmatprep.subr.bf16.mxu0 %v1698
    %2148 = vmatpush1.bf16.msra.mxu0 %v1697
    %2149 = vmatprep.subr.bf16.mxu0 %v1704
    %2150 = vmatpush1.bf16.msra.mxu0 %v1703
    %2151 = vmatprep.subr.bf16.mxu0 %v1710
    %2152 = vmatpush1.bf16.msra.mxu0 %v1709
    %2153 = vmatprep.subr.bf16.mxu0 %v1716
    %2154 = vmatpush1.bf16.msra.mxu0 %v1715
    %2155 = vmatprep.subr.bf16.mxu0 %v1722
    %2156 = vmatpush1.bf16.msra.mxu0 %v1721
    %2157 = vmatprep.subr.bf16.mxu0 %v1728
    %2158 = vmatpush1.bf16.msra.mxu0 %v1727
    %2159 = vmatprep.mubr.bf16.mxu0 %v182
    %2160 = vmatmul.mubr.bf16.gmra.mrb[0].mxu0 %v181
    %v2161 = vpop.f32.mrb[0].mxu0
    %v2162 = vadd.f32 %v2109, %v2161
    %v2163 = vpop.f32.mrb[0].mxu0
    %v2164 = vadd.f32 %v2111, %v2163
    %v2165 = vpop.f32.mrb[0].mxu0
    %v2166 = vadd.f32 %v2113, %v2165
    %v2167 = vpop.f32.mrb[0].mxu0
    %v2168 = vadd.f32 %v2115, %v2167
    %2169 = vmatprep.mubr.bf16.mxu0 %v188
    %2170 = vmatmul.mubr.bf16.gmra.mrb[0].mxu0 %v187
    %v2171 = vpop.f32.mrb[0].mxu0
    %v2172 = vadd.f32 %v2119, %v2171
    %v2173 = vpop.f32.mrb[0].mxu0
    %v2174 = vadd.f32 %v2121, %v2173
    %v2175 = vpop.f32.mrb[0].mxu0
    %v2176 = vadd.f32 %v2123, %v2175
    %v2177 = vpop.f32.mrb[0].mxu0
    %v2178 = vadd.f32 %v2125, %v2177
    %2179 = vdwg.mxu0
    %2180 = vmatprep.subr.bf16.mxu0 %v1448
    %2181 = vmatpush1.bf16.msra.mxu0 %v1447
    %2182 = vmatprep.subr.bf16.mxu0 %v1454
    %2183 = vmatpush1.bf16.msra.mxu0 %v1453
    %2184 = vmatprep.subr.bf16.mxu0 %v1460
    %2185 = vmatpush1.bf16.msra.mxu0 %v1459
    %2186 = vmatprep.subr.bf16.mxu0 %v1466
    %2187 = vmatpush1.bf16.msra.mxu0 %v1465
    %2188 = vmatprep.subr.bf16.mxu0 %v1472
    %2189 = vmatpush1.bf16.msra.mxu0 %v1471
    %2190 = vmatprep.subr.bf16.mxu0 %v1478
    %2191 = vmatpush1.bf16.msra.mxu0 %v1477
    %2192 = vmatprep.subr.bf16.mxu0 %v1484
    %2193 = vmatpush1.bf16.msra.mxu0 %v1483
    %2194 = vmatprep.subr.bf16.mxu0 %v1490
    %2195 = vmatpush1.bf16.msra.mxu0 %v1489
    %2196 = vmatprep.subr.bf16.mxu0 %v1496
    %2197 = vmatpush1.bf16.msra.mxu0 %v1495
    %2198 = vmatprep.subr.bf16.mxu0 %v1502
    %2199 = vmatpush1.bf16.msra.mxu0 %v1501
    %2200 = vmatprep.subr.bf16.mxu0 %v1508
    %2201 = vmatpush1.bf16.msra.mxu0 %v1507
    %2202 = vmatprep.subr.bf16.mxu0 %v1514
    %2203 = vmatpush1.bf16.msra.mxu0 %v1513
    %2204 = vmatprep.subr.bf16.mxu0 %v1520
    %2205 = vmatpush1.bf16.msra.mxu0 %v1519
    %2206 = vmatprep.subr.bf16.mxu0 %v1526
    %2207 = vmatpush1.bf16.msra.mxu0 %v1525
    %2208 = vmatprep.subr.bf16.mxu0 %v1532
    %2209 = vmatpush1.bf16.msra.mxu0 %v1531
    %2210 = vmatprep.subr.bf16.mxu0 %v1538
    %2211 = vmatpush1.bf16.msra.mxu0 %v1537
    %2212 = vmatprep.mubr.bf16.mxu0 %v178
    %2213 = vmatmul.mubr.bf16.gmra.mrb[0].mxu0 %v177
    %v2214 = vpop.f32.mrb[0].mxu0
    %v2215 = vadd.f32 %v562, %v2214
    %v2216 = vpop.f32.mrb[0].mxu0
    %v2217 = vadd.f32 %v566, %v2216
    %v2218 = vpop.f32.mrb[0].mxu0
    %v2219 = vadd.f32 %v562, %v2218
    %v2220 = vpop.f32.mrb[0].mxu0
    %v2221 = vadd.f32 %v566, %v2220
    %2222 = vmatprep.mubr.bf16.mxu0 %v184
    %2223 = vmatmul.mubr.bf16.gmra.mrb[0].mxu0 %v183
    %v2224 = vpop.f32.mrb[0].mxu0
    %v2225 = vadd.f32 %v562, %v2224
    %v2226 = vpop.f32.mrb[0].mxu0
    %v2227 = vadd.f32 %v566, %v2226
    %v2228 = vpop.f32.mrb[0].mxu0
    %v2229 = vadd.f32 %v562, %v2228
    %v2230 = vpop.f32.mrb[0].mxu0
    %v2231 = vadd.f32 %v566, %v2230
    %2232 = vdwg.mxu0
    %2233 = vmatprep.subr.bf16.mxu0 %v1544
    %2234 = vmatpush1.bf16.msra.mxu0 %v1543
    %2235 = vmatprep.subr.bf16.mxu0 %v1550
    %2236 = vmatpush1.bf16.msra.mxu0 %v1549
    %2237 = vmatprep.subr.bf16.mxu0 %v1556
    %2238 = vmatpush1.bf16.msra.mxu0 %v1555
    %2239 = vmatprep.subr.bf16.mxu0 %v1562
    %2240 = vmatpush1.bf16.msra.mxu0 %v1561
    %2241 = vmatprep.subr.bf16.mxu0 %v1568
    %2242 = vmatpush1.bf16.msra.mxu0 %v1567
    %2243 = vmatprep.subr.bf16.mxu0 %v1574
    %2244 = vmatpush1.bf16.msra.mxu0 %v1573
    %2245 = vmatprep.subr.bf16.mxu0 %v1580
    %2246 = vmatpush1.bf16.msra.mxu0 %v1579
    %2247 = vmatprep.subr.bf16.mxu0 %v1586
    %2248 = vmatpush1.bf16.msra.mxu0 %v1585
    %2249 = vmatprep.subr.bf16.mxu0 %v1592
    %2250 = vmatpush1.bf16.msra.mxu0 %v1591
    %2251 = vmatprep.subr.bf16.mxu0 %v1598
    %2252 = vmatpush1.bf16.msra.mxu0 %v1597
    %2253 = vmatprep.subr.bf16.mxu0 %v1604
    %2254 = vmatpush1.bf16.msra.mxu0 %v1603
    %2255 = vmatprep.subr.bf16.mxu0 %v1610
    %2256 = vmatpush1.bf16.msra.mxu0 %v1609
    %2257 = vmatprep.subr.bf16.mxu0 %v1616
    %2258 = vmatpush1.bf16.msra.mxu0 %v1615
    %2259 = vmatprep.subr.bf16.mxu0 %v1622
    %2260 = vmatpush1.bf16.msra.mxu0 %v1621
    %2261 = vmatprep.subr.bf16.mxu0 %v1628
    %2262 = vmatpush1.bf16.msra.mxu0 %v1627
    %2263 = vmatprep.subr.bf16.mxu0 %v1634
    %2264 = vmatpush1.bf16.msra.mxu0 %v1633
    %2265 = vmatprep.mubr.bf16.mxu0 %v180
    %2266 = vmatmul.mubr.bf16.gmra.mrb[0].mxu0 %v179
    %v2267 = vpop.f32.mrb[0].mxu0
    %v2268 = vadd.f32 %v2215, %v2267
    %v2269 = vpop.f32.mrb[0].mxu0
    %v2270 = vadd.f32 %v2217, %v2269
    %v2271 = vpop.f32.mrb[0].mxu0
    %v2272 = vadd.f32 %v2219, %v2271
    %v2273 = vpop.f32.mrb[0].mxu0
    %v2274 = vadd.f32 %v2221, %v2273
    %2275 = vmatprep.mubr.bf16.mxu0 %v186
    %2276 = vmatmul.mubr.bf16.gmra.mrb[0].mxu0 %v185
    %v2277 = vpop.f32.mrb[0].mxu0
    %v2278 = vadd.f32 %v2225, %v2277
    %v2279 = vpop.f32.mrb[0].mxu0
    %v2280 = vadd.f32 %v2227, %v2279
    %v2281 = vpop.f32.mrb[0].mxu0
    %v2282 = vadd.f32 %v2229, %v2281
    %v2283 = vpop.f32.mrb[0].mxu0
    %v2284 = vadd.f32 %v2231, %v2283
    %2285 = vdwg.mxu0
    %2286 = vmatprep.subr.bf16.mxu0 %v1640
    %2287 = vmatpush1.bf16.msra.mxu0 %v1639
    %2288 = vmatprep.subr.bf16.mxu0 %v1646
    %2289 = vmatpush1.bf16.msra.mxu0 %v1645
    %2290 = vmatprep.subr.bf16.mxu0 %v1652
    %2291 = vmatpush1.bf16.msra.mxu0 %v1651
    %2292 = vmatprep.subr.bf16.mxu0 %v1658
    %2293 = vmatpush1.bf16.msra.mxu0 %v1657
    %2294 = vmatprep.subr.bf16.mxu0 %v1664
    %2295 = vmatpush1.bf16.msra.mxu0 %v1663
    %2296 = vmatprep.subr.bf16.mxu0 %v1670
    %2297 = vmatpush1.bf16.msra.mxu0 %v1669
    %2298 = vmatprep.subr.bf16.mxu0 %v1676
    %2299 = vmatpush1.bf16.msra.mxu0 %v1675
    %2300 = vmatprep.subr.bf16.mxu0 %v1682
    %2301 = vmatpush1.bf16.msra.mxu0 %v1681
    %2302 = vmatprep.subr.bf16.mxu0 %v1688
    %2303 = vmatpush1.bf16.msra.mxu0 %v1687
    %2304 = vmatprep.subr.bf16.mxu0 %v1694
    %2305 = vmatpush1.bf16.msra.mxu0 %v1693
    %2306 = vmatprep.subr.bf16.mxu0 %v1700
    %2307 = vmatpush1.bf16.msra.mxu0 %v1699
    %2308 = vmatprep.subr.bf16.mxu0 %v1706
    %2309 = vmatpush1.bf16.msra.mxu0 %v1705
    %2310 = vmatprep.subr.bf16.mxu0 %v1712
    %2311 = vmatpush1.bf16.msra.mxu0 %v1711
    %2312 = vmatprep.subr.bf16.mxu0 %v1718
    %2313 = vmatpush1.bf16.msra.mxu0 %v1717
    %2314 = vmatprep.subr.bf16.mxu0 %v1724
    %2315 = vmatpush1.bf16.msra.mxu0 %v1723
    %2316 = vmatprep.subr.bf16.mxu0 %v1730
    %2317 = vmatpush1.bf16.msra.mxu0 %v1729
    %2318 = vmatprep.mubr.bf16.mxu0 %v182
    %2319 = vmatmul.mubr.bf16.gmra.mrb[0].mxu0 %v181
    %v2320 = vpop.f32.mrb[0].mxu0
    %v2321 = vadd.f32 %v2268, %v2320
    %v2322 = vpop.f32.mrb[0].mxu0
    %v2323 = vadd.f32 %v2270, %v2322
    %v2324 = vpop.f32.mrb[0].mxu0
    %v2325 = vadd.f32 %v2272, %v2324
    %v2326 = vpop.f32.mrb[0].mxu0
    %v2327 = vadd.f32 %v2274, %v2326
    %2328 = vmatprep.mubr.bf16.mxu0 %v188
    %2329 = vmatmul.mubr.bf16.gmra.mrb[0].mxu0 %v187
    %v2330 = vpop.f32.mrb[0].mxu0
    %v2331 = vadd.f32 %v2278, %v2330
    %v2332 = vpop.f32.mrb[0].mxu0
    %v2333 = vadd.f32 %v2280, %v2332
    %v2334 = vpop.f32.mrb[0].mxu0
    %v2335 = vadd.f32 %v2282, %v2334
    %v2336 = vpop.f32.mrb[0].mxu0
    %v2337 = vadd.f32 %v2284, %v2336
    %2338 = vdwg.mxu0
    %2339 = vmatprep.subr.bf16.mxu0 %v1450
    %2340 = vmatpush1.bf16.msra.mxu0 %v1449
    %2341 = vmatprep.subr.bf16.mxu0 %v1456
    %2342 = vmatpush1.bf16.msra.mxu0 %v1455
    %2343 = vmatprep.subr.bf16.mxu0 %v1462
    %2344 = vmatpush1.bf16.msra.mxu0 %v1461
    %2345 = vmatprep.subr.bf16.mxu0 %v1468
    %2346 = vmatpush1.bf16.msra.mxu0 %v1467
    %2347 = vmatprep.subr.bf16.mxu0 %v1474
    %2348 = vmatpush1.bf16.msra.mxu0 %v1473
    %2349 = vmatprep.subr.bf16.mxu0 %v1480
    %2350 = vmatpush1.bf16.msra.mxu0 %v1479
    %2351 = vmatprep.subr.bf16.mxu0 %v1486
    %2352 = vmatpush1.bf16.msra.mxu0 %v1485
    %2353 = vmatprep.subr.bf16.mxu0 %v1492
    %2354 = vmatpush1.bf16.msra.mxu0 %v1491
    %2355 = vmatprep.subr.bf16.mxu0 %v1498
    %2356 = vmatpush1.bf16.msra.mxu0 %v1497
    %2357 = vmatprep.subr.bf16.mxu0 %v1504
    %2358 = vmatpush1.bf16.msra.mxu0 %v1503
    %2359 = vmatprep.subr.bf16.mxu0 %v1510
    %2360 = vmatpush1.bf16.msra.mxu0 %v1509
    %2361 = vmatprep.subr.bf16.mxu0 %v1516
    %2362 = vmatpush1.bf16.msra.mxu0 %v1515
    %2363 = vmatprep.subr.bf16.mxu0 %v1522
    %2364 = vmatpush1.bf16.msra.mxu0 %v1521
    %2365 = vmatprep.subr.bf16.mxu0 %v1528
    %2366 = vmatpush1.bf16.msra.mxu0 %v1527
    %2367 = vmatprep.subr.bf16.mxu0 %v1534
    %2368 = vmatpush1.bf16.msra.mxu0 %v1533
    %2369 = vmatprep.subr.bf16.mxu0 %v1540
    %2370 = vmatpush1.bf16.msra.mxu0 %v1539
    %2371 = vmatprep.mubr.bf16.mxu0 %v178
    %2372 = vmatmul.mubr.bf16.gmra.mrb[0].mxu0 %v177
    %v2373 = vpop.f32.mrb[0].mxu0
    %v2374 = vadd.f32 %v570, %v2373
    %v2375 = vpop.f32.mrb[0].mxu0
    %v2376 = vadd.f32 %v574, %v2375
    %v2377 = vpop.f32.mrb[0].mxu0
    %v2378 = vadd.f32 %v570, %v2377
    %v2379 = vpop.f32.mrb[0].mxu0
    %v2380 = vadd.f32 %v574, %v2379
    %2381 = vmatprep.mubr.bf16.mxu0 %v184
    %2382 = vmatmul.mubr.bf16.gmra.mrb[0].mxu0 %v183
    %v2383 = vpop.f32.mrb[0].mxu0
    %v2384 = vadd.f32 %v570, %v2383
    %v2385 = vpop.f32.mrb[0].mxu0
    %v2386 = vadd.f32 %v574, %v2385
    %v2387 = vpop.f32.mrb[0].mxu0
    %v2388 = vadd.f32 %v570, %v2387
    %v2389 = vpop.f32.mrb[0].mxu0
    %v2390 = vadd.f32 %v574, %v2389
    %2391 = vdwg.mxu0
    %2392 = vmatprep.subr.bf16.mxu0 %v1546
    %2393 = vmatpush1.bf16.msra.mxu0 %v1545
    %2394 = vmatprep.subr.bf16.mxu0 %v1552
    %2395 = vmatpush1.bf16.msra.mxu0 %v1551
    %2396 = vmatprep.subr.bf16.mxu0 %v1558
    %2397 = vmatpush1.bf16.msra.mxu0 %v1557
    %2398 = vmatprep.subr.bf16.mxu0 %v1564
    %2399 = vmatpush1.bf16.msra.mxu0 %v1563
    %2400 = vmatprep.subr.bf16.mxu0 %v1570
    %2401 = vmatpush1.bf16.msra.mxu0 %v1569
    %2402 = vmatprep.subr.bf16.mxu0 %v1576
    %2403 = vmatpush1.bf16.msra.mxu0 %v1575
    %2404 = vmatprep.subr.bf16.mxu0 %v1582
    %2405 = vmatpush1.bf16.msra.mxu0 %v1581
    %2406 = vmatprep.subr.bf16.mxu0 %v1588
    %2407 = vmatpush1.bf16.msra.mxu0 %v1587
    %2408 = vmatprep.subr.bf16.mxu0 %v1594
    %2409 = vmatpush1.bf16.msra.mxu0 %v1593
    %2410 = vmatprep.subr.bf16.mxu0 %v1600
    %2411 = vmatpush1.bf16.msra.mxu0 %v1599
    %2412 = vmatprep.subr.bf16.mxu0 %v1606
    %2413 = vmatpush1.bf16.msra.mxu0 %v1605
    %2414 = vmatprep.subr.bf16.mxu0 %v1612
    %2415 = vmatpush1.bf16.msra.mxu0 %v1611
    %2416 = vmatprep.subr.bf16.mxu0 %v1618
    %2417 = vmatpush1.bf16.msra.mxu0 %v1617
    %2418 = vmatprep.subr.bf16.mxu0 %v1624
    %2419 = vmatpush1.bf16.msra.mxu0 %v1623
    %2420 = vmatprep.subr.bf16.mxu0 %v1630
    %2421 = vmatpush1.bf16.msra.mxu0 %v1629
    %2422 = vmatprep.subr.bf16.mxu0 %v1636
    %2423 = vmatpush1.bf16.msra.mxu0 %v1635
    %2424 = vmatprep.mubr.bf16.mxu0 %v180
    %2425 = vmatmul.mubr.bf16.gmra.mrb[0].mxu0 %v179
    %v2426 = vpop.f32.mrb[0].mxu0
    %v2427 = vadd.f32 %v2374, %v2426
    %v2428 = vpop.f32.mrb[0].mxu0
    %v2429 = vadd.f32 %v2376, %v2428
    %v2430 = vpop.f32.mrb[0].mxu0
    %v2431 = vadd.f32 %v2378, %v2430
    %v2432 = vpop.f32.mrb[0].mxu0
    %v2433 = vadd.f32 %v2380, %v2432
    %2434 = vmatprep.mubr.bf16.mxu0 %v186
    %2435 = vmatmul.mubr.bf16.gmra.mrb[0].mxu0 %v185
    %v2436 = vpop.f32.mrb[0].mxu0
    %v2437 = vadd.f32 %v2384, %v2436
    %v2438 = vpop.f32.mrb[0].mxu0
    %v2439 = vadd.f32 %v2386, %v2438
    %v2440 = vpop.f32.mrb[0].mxu0
    %v2441 = vadd.f32 %v2388, %v2440
    %v2442 = vpop.f32.mrb[0].mxu0
    %v2443 = vadd.f32 %v2390, %v2442
    %2444 = vdwg.mxu0
    %2445 = vmatprep.subr.bf16.mxu0 %v1642
    %2446 = vmatpush1.bf16.msra.mxu0 %v1641
    %2447 = vmatprep.subr.bf16.mxu0 %v1648
    %2448 = vmatpush1.bf16.msra.mxu0 %v1647
    %2449 = vmatprep.subr.bf16.mxu0 %v1654
    %2450 = vmatpush1.bf16.msra.mxu0 %v1653
    %2451 = vmatprep.subr.bf16.mxu0 %v1660
    %2452 = vmatpush1.bf16.msra.mxu0 %v1659
    %2453 = vmatprep.subr.bf16.mxu0 %v1666
    %2454 = vmatpush1.bf16.msra.mxu0 %v1665
    %2455 = vmatprep.subr.bf16.mxu0 %v1672
    %2456 = vmatpush1.bf16.msra.mxu0 %v1671
    %2457 = vmatprep.subr.bf16.mxu0 %v1678
    %2458 = vmatpush1.bf16.msra.mxu0 %v1677
    %2459 = vmatprep.subr.bf16.mxu0 %v1684
    %2460 = vmatpush1.bf16.msra.mxu0 %v1683
    %2461 = vmatprep.subr.bf16.mxu0 %v1690
    %2462 = vmatpush1.bf16.msra.mxu0 %v1689
    %2463 = vmatprep.subr.bf16.mxu0 %v1696
    %2464 = vmatpush1.bf16.msra.mxu0 %v1695
    %2465 = vmatprep.subr.bf16.mxu0 %v1702
    %2466 = vmatpush1.bf16.msra.mxu0 %v1701
    %2467 = vmatprep.subr.bf16.mxu0 %v1708
    %2468 = vmatpush1.bf16.msra.mxu0 %v1707
    %2469 = vmatprep.subr.bf16.mxu0 %v1714
    %2470 = vmatpush1.bf16.msra.mxu0 %v1713
    %2471 = vmatprep.subr.bf16.mxu0 %v1720
    %2472 = vmatpush1.bf16.msra.mxu0 %v1719
    %2473 = vmatprep.subr.bf16.mxu0 %v1726
    %2474 = vmatpush1.bf16.msra.mxu0 %v1725
    %2475 = vmatprep.subr.bf16.mxu0 %v1732
    %2476 = vmatpush1.bf16.msra.mxu0 %v1731
    %2477 = vmatprep.mubr.bf16.mxu0 %v182
    %2478 = vmatmul.mubr.bf16.gmra.mrb[0].mxu0 %v181
    %v2479 = vpop.f32.mrb[0].mxu0
    %v2480 = vadd.f32 %v2427, %v2479
    %v2481 = vpop.f32.mrb[0].mxu0
    %v2482 = vadd.f32 %v2429, %v2481
    %v2483 = vpop.f32.mrb[0].mxu0
    %v2484 = vadd.f32 %v2431, %v2483
    %v2485 = vpop.f32.mrb[0].mxu0
    %v2486 = vadd.f32 %v2433, %v2485
    %2487 = vmatprep.mubr.bf16.mxu0 %v188
    %2488 = vmatmul.mubr.bf16.gmra.mrb[0].mxu0 %v187
    %v2489 = vpop.f32.mrb[0].mxu0
    %v2490 = vadd.f32 %v2437, %v2489
    %v2491 = vpop.f32.mrb[0].mxu0
    %v2492 = vadd.f32 %v2439, %v2491
    %v2493 = vpop.f32.mrb[0].mxu0
    %v2494 = vadd.f32 %v2441, %v2493
    %v2495 = vpop.f32.mrb[0].mxu0
    %v2496 = vadd.f32 %v2443, %v2495
    %2497 = vdwg.mxu0
    %v2498 = vld [vmem:[#allocation10] sm:$0xff]
    %v2499 = vld [vmem:[#allocation10 + $0x8] sm:$0xff]
    %v2500 = vld [vmem:[#allocation10 + $0x10] sm:$0xff]
    %v2501 = vld [vmem:[#allocation10 + $0x18] sm:$0xff]
    %v2502 = vld [vmem:[#allocation10 + $0x20] sm:$0xff]
    %v2503 = vld [vmem:[#allocation10 + $0x28] sm:$0xff]
    %v2504 = vld [vmem:[#allocation10 + $0x30] sm:$0xff]
    %v2505 = vld [vmem:[#allocation10 + $0x38] sm:$0xff]
    %v2506 = vld [vmem:[#allocation10 + $0x40] sm:$0xff]
    %v2507 = vld [vmem:[#allocation10 + $0x48] sm:$0xff]
    %v2508 = vld [vmem:[#allocation10 + $0x50] sm:$0xff]
    %v2509 = vld [vmem:[#allocation10 + $0x58] sm:$0xff]
    %v2510 = vld [vmem:[#allocation10 + $0x60] sm:$0xff]
    %v2511 = vld [vmem:[#allocation10 + $0x68] sm:$0xff]
    %v2512 = vld [vmem:[#allocation10 + $0x70] sm:$0xff]
    %v2513 = vld [vmem:[#allocation10 + $0x78] sm:$0xff]
    %v2514 = vld [vmem:[#allocation10 + $0x80] sm:$0xff]
    %v2515 = vld [vmem:[#allocation10 + $0x88] sm:$0xff]
    %v2516 = vld [vmem:[#allocation10 + $0x90] sm:$0xff]
    %v2517 = vld [vmem:[#allocation10 + $0x98] sm:$0xff]
    %v2518 = vld [vmem:[#allocation10 + $0xa0] sm:$0xff]
    %v2519 = vld [vmem:[#allocation10 + $0xa8] sm:$0xff]
    %v2520 = vld [vmem:[#allocation10 + $0xb0] sm:$0xff]
    %v2521 = vld [vmem:[#allocation10 + $0xb8] sm:$0xff]
    %v2522 = vld [vmem:[#allocation10 + $0xc0] sm:$0xff]
    %v2523 = vld [vmem:[#allocation10 + $0xc8] sm:$0xff]
    %v2524 = vld [vmem:[#allocation10 + $0xd0] sm:$0xff]
    %v2525 = vld [vmem:[#allocation10 + $0xd8] sm:$0xff]
    %v2526 = vld [vmem:[#allocation10 + $0xe0] sm:$0xff]
    %v2527 = vld [vmem:[#allocation10 + $0xe8] sm:$0xff]
    %v2528 = vld [vmem:[#allocation10 + $0xf0] sm:$0xff]
    %v2529 = vld [vmem:[#allocation10 + $0xf8] sm:$0xff]
    %v2530 = vld [vmem:[#allocation10 + $0x100] sm:$0xff]
    %v2531 = vld [vmem:[#allocation10 + $0x108] sm:$0xff]
    %v2532 = vld [vmem:[#allocation10 + $0x110] sm:$0xff]
    %v2533 = vld [vmem:[#allocation10 + $0x118] sm:$0xff]
    %v2534 = vld [vmem:[#allocation10 + $0x120] sm:$0xff]
    %v2535 = vld [vmem:[#allocation10 + $0x128] sm:$0xff]
    %v2536 = vld [vmem:[#allocation10 + $0x130] sm:$0xff]
    %v2537 = vld [vmem:[#allocation10 + $0x138] sm:$0xff]
    %v2538 = vld [vmem:[#allocation10 + $0x140] sm:$0xff]
    %v2539 = vld [vmem:[#allocation10 + $0x148] sm:$0xff]
    %v2540 = vld [vmem:[#allocation10 + $0x150] sm:$0xff]
    %v2541 = vld [vmem:[#allocation10 + $0x158] sm:$0xff]
    %v2542 = vld [vmem:[#allocation10 + $0x160] sm:$0xff]
    %v2543 = vld [vmem:[#allocation10 + $0x168] sm:$0xff]
    %v2544 = vld [vmem:[#allocation10 + $0x170] sm:$0xff]
    %v2545 = vld [vmem:[#allocation10 + $0x178] sm:$0xff]
    %v2546 = vld [vmem:[#allocation10 + $0x180] sm:$0xff]
    %v2547 = vld [vmem:[#allocation10 + $0x188] sm:$0xff]
    %v2548 = vld [vmem:[#allocation10 + $0x190] sm:$0xff]
    %v2549 = vld [vmem:[#allocation10 + $0x198] sm:$0xff]
    %v2550 = vld [vmem:[#allocation10 + $0x1a0] sm:$0xff]
    %v2551 = vld [vmem:[#allocation10 + $0x1a8] sm:$0xff]
    %v2552 = vld [vmem:[#allocation10 + $0x1b0] sm:$0xff]
    %v2553 = vld [vmem:[#allocation10 + $0x1b8] sm:$0xff]
    %v2554 = vld [vmem:[#allocation10 + $0x1c0] sm:$0xff]
    %v2555 = vld [vmem:[#allocation10 + $0x1c8] sm:$0xff]
    %v2556 = vld [vmem:[#allocation10 + $0x1d0] sm:$0xff]
    %v2557 = vld [vmem:[#allocation10 + $0x1d8] sm:$0xff]
    %v2558 = vld [vmem:[#allocation10 + $0x1e0] sm:$0xff]
    %v2559 = vld [vmem:[#allocation10 + $0x1e8] sm:$0xff]
    %v2560 = vld [vmem:[#allocation10 + $0x1f0] sm:$0xff]
    %v2561 = vld [vmem:[#allocation10 + $0x1f8] sm:$0xff]
    %v2562 = vld [vmem:[#allocation10 + $0x200] sm:$0xff]
    %v2563 = vld [vmem:[#allocation10 + $0x208] sm:$0xff]
    %v2564 = vld [vmem:[#allocation10 + $0x210] sm:$0xff]
    %v2565 = vld [vmem:[#allocation10 + $0x218] sm:$0xff]
    %v2566 = vld [vmem:[#allocation10 + $0x220] sm:$0xff]
    %v2567 = vld [vmem:[#allocation10 + $0x228] sm:$0xff]
    %v2568 = vld [vmem:[#allocation10 + $0x230] sm:$0xff]
    %v2569 = vld [vmem:[#allocation10 + $0x238] sm:$0xff]
    %v2570 = vld [vmem:[#allocation10 + $0x240] sm:$0xff]
    %v2571 = vld [vmem:[#allocation10 + $0x248] sm:$0xff]
    %v2572 = vld [vmem:[#allocation10 + $0x250] sm:$0xff]
    %v2573 = vld [vmem:[#allocation10 + $0x258] sm:$0xff]
    %v2574 = vld [vmem:[#allocation10 + $0x260] sm:$0xff]
    %v2575 = vld [vmem:[#allocation10 + $0x268] sm:$0xff]
    %v2576 = vld [vmem:[#allocation10 + $0x270] sm:$0xff]
    %v2577 = vld [vmem:[#allocation10 + $0x278] sm:$0xff]
    %v2578 = vld [vmem:[#allocation10 + $0x280] sm:$0xff]
    %v2579 = vld [vmem:[#allocation10 + $0x288] sm:$0xff]
    %v2580 = vld [vmem:[#allocation10 + $0x290] sm:$0xff]
    %v2581 = vld [vmem:[#allocation10 + $0x298] sm:$0xff]
    %v2582 = vld [vmem:[#allocation10 + $0x2a0] sm:$0xff]
    %v2583 = vld [vmem:[#allocation10 + $0x2a8] sm:$0xff]
    %v2584 = vld [vmem:[#allocation10 + $0x2b0] sm:$0xff]
    %v2585 = vld [vmem:[#allocation10 + $0x2b8] sm:$0xff]
    %v2586 = vld [vmem:[#allocation10 + $0x2c0] sm:$0xff]
    %v2587 = vld [vmem:[#allocation10 + $0x2c8] sm:$0xff]
    %v2588 = vld [vmem:[#allocation10 + $0x2d0] sm:$0xff]
    %v2589 = vld [vmem:[#allocation10 + $0x2d8] sm:$0xff]
    %v2590 = vld [vmem:[#allocation10 + $0x2e0] sm:$0xff]
    %v2591 = vld [vmem:[#allocation10 + $0x2e8] sm:$0xff]
    %v2592 = vld [vmem:[#allocation10 + $0x2f0] sm:$0xff]
    %v2593 = vld [vmem:[#allocation10 + $0x2f8] sm:$0xff]
    %v2594 = vld [vmem:[#allocation10 + $0x300] sm:$0xff]
    %v2595 = vld [vmem:[#allocation10 + $0x308] sm:$0xff]
    %v2596 = vld [vmem:[#allocation10 + $0x310] sm:$0xff]
    %v2597 = vld [vmem:[#allocation10 + $0x318] sm:$0xff]
    %v2598 = vld [vmem:[#allocation10 + $0x320] sm:$0xff]
    %v2599 = vld [vmem:[#allocation10 + $0x328] sm:$0xff]
    %v2600 = vld [vmem:[#allocation10 + $0x330] sm:$0xff]
    %v2601 = vld [vmem:[#allocation10 + $0x338] sm:$0xff]
    %v2602 = vld [vmem:[#allocation10 + $0x340] sm:$0xff]
    %v2603 = vld [vmem:[#allocation10 + $0x348] sm:$0xff]
    %v2604 = vld [vmem:[#allocation10 + $0x350] sm:$0xff]
    %v2605 = vld [vmem:[#allocation10 + $0x358] sm:$0xff]
    %v2606 = vld [vmem:[#allocation10 + $0x360] sm:$0xff]
    %v2607 = vld [vmem:[#allocation10 + $0x368] sm:$0xff]
    %v2608 = vld [vmem:[#allocation10 + $0x370] sm:$0xff]
    %v2609 = vld [vmem:[#allocation10 + $0x378] sm:$0xff]
    %v2610 = vld [vmem:[#allocation10 + $0x380] sm:$0xff]
    %v2611 = vld [vmem:[#allocation10 + $0x388] sm:$0xff]
    %v2612 = vld [vmem:[#allocation10 + $0x390] sm:$0xff]
    %v2613 = vld [vmem:[#allocation10 + $0x398] sm:$0xff]
    %v2614 = vld [vmem:[#allocation10 + $0x3a0] sm:$0xff]
    %v2615 = vld [vmem:[#allocation10 + $0x3a8] sm:$0xff]
    %v2616 = vld [vmem:[#allocation10 + $0x3b0] sm:$0xff]
    %v2617 = vld [vmem:[#allocation10 + $0x3b8] sm:$0xff]
    %v2618 = vld [vmem:[#allocation10 + $0x3c0] sm:$0xff]
    %v2619 = vld [vmem:[#allocation10 + $0x3c8] sm:$0xff]
    %v2620 = vld [vmem:[#allocation10 + $0x3d0] sm:$0xff]
    %v2621 = vld [vmem:[#allocation10 + $0x3d8] sm:$0xff]
    %v2622 = vld [vmem:[#allocation10 + $0x3e0] sm:$0xff]
    %v2623 = vld [vmem:[#allocation10 + $0x3e8] sm:$0xff]
    %v2624 = vld [vmem:[#allocation10 + $0x3f0] sm:$0xff]
    %v2625 = vld [vmem:[#allocation10 + $0x3f8] sm:$0xff]
    %v2626 = vld [vmem:[#allocation10 + $0x400] sm:$0xff]
    %v2627 = vld [vmem:[#allocation10 + $0x408] sm:$0xff]
    %v2628 = vld [vmem:[#allocation10 + $0x410] sm:$0xff]
    %v2629 = vld [vmem:[#allocation10 + $0x418] sm:$0xff]
    %v2630 = vld [vmem:[#allocation10 + $0x420] sm:$0xff]
    %v2631 = vld [vmem:[#allocation10 + $0x428] sm:$0xff]
    %v2632 = vld [vmem:[#allocation10 + $0x430] sm:$0xff]
    %v2633 = vld [vmem:[#allocation10 + $0x438] sm:$0xff]
    %v2634 = vld [vmem:[#allocation10 + $0x440] sm:$0xff]
    %v2635 = vld [vmem:[#allocation10 + $0x448] sm:$0xff]
    %v2636 = vld [vmem:[#allocation10 + $0x450] sm:$0xff]
    %v2637 = vld [vmem:[#allocation10 + $0x458] sm:$0xff]
    %v2638 = vld [vmem:[#allocation10 + $0x460] sm:$0xff]
    %v2639 = vld [vmem:[#allocation10 + $0x468] sm:$0xff]
    %v2640 = vld [vmem:[#allocation10 + $0x470] sm:$0xff]
    %v2641 = vld [vmem:[#allocation10 + $0x478] sm:$0xff]
    %v2642 = vld [vmem:[#allocation10 + $0x480] sm:$0xff]
    %v2643 = vld [vmem:[#allocation10 + $0x488] sm:$0xff]
    %v2644 = vld [vmem:[#allocation10 + $0x490] sm:$0xff]
    %v2645 = vld [vmem:[#allocation10 + $0x498] sm:$0xff]
    %v2646 = vld [vmem:[#allocation10 + $0x4a0] sm:$0xff]
    %v2647 = vld [vmem:[#allocation10 + $0x4a8] sm:$0xff]
    %v2648 = vld [vmem:[#allocation10 + $0x4b0] sm:$0xff]
    %v2649 = vld [vmem:[#allocation10 + $0x4b8] sm:$0xff]
    %v2650 = vld [vmem:[#allocation10 + $0x4c0] sm:$0xff]
    %v2651 = vld [vmem:[#allocation10 + $0x4c8] sm:$0xff]
    %v2652 = vld [vmem:[#allocation10 + $0x4d0] sm:$0xff]
    %v2653 = vld [vmem:[#allocation10 + $0x4d8] sm:$0xff]
    %v2654 = vld [vmem:[#allocation10 + $0x4e0] sm:$0xff]
    %v2655 = vld [vmem:[#allocation10 + $0x4e8] sm:$0xff]
    %v2656 = vld [vmem:[#allocation10 + $0x4f0] sm:$0xff]
    %v2657 = vld [vmem:[#allocation10 + $0x4f8] sm:$0xff]
    %v2658 = vld [vmem:[#allocation10 + $0x500] sm:$0xff]
    %v2659 = vld [vmem:[#allocation10 + $0x508] sm:$0xff]
    %v2660 = vld [vmem:[#allocation10 + $0x510] sm:$0xff]
    %v2661 = vld [vmem:[#allocation10 + $0x518] sm:$0xff]
    %v2662 = vld [vmem:[#allocation10 + $0x520] sm:$0xff]
    %v2663 = vld [vmem:[#allocation10 + $0x528] sm:$0xff]
    %v2664 = vld [vmem:[#allocation10 + $0x530] sm:$0xff]
    %v2665 = vld [vmem:[#allocation10 + $0x538] sm:$0xff]
    %v2666 = vld [vmem:[#allocation10 + $0x540] sm:$0xff]
    %v2667 = vld [vmem:[#allocation10 + $0x548] sm:$0xff]
    %v2668 = vld [vmem:[#allocation10 + $0x550] sm:$0xff]
    %v2669 = vld [vmem:[#allocation10 + $0x558] sm:$0xff]
    %v2670 = vld [vmem:[#allocation10 + $0x560] sm:$0xff]
    %v2671 = vld [vmem:[#allocation10 + $0x568] sm:$0xff]
    %v2672 = vld [vmem:[#allocation10 + $0x570] sm:$0xff]
    %v2673 = vld [vmem:[#allocation10 + $0x578] sm:$0xff]
    %v2674 = vld [vmem:[#allocation10 + $0x580] sm:$0xff]
    %v2675 = vld [vmem:[#allocation10 + $0x588] sm:$0xff]
    %v2676 = vld [vmem:[#allocation10 + $0x590] sm:$0xff]
    %v2677 = vld [vmem:[#allocation10 + $0x598] sm:$0xff]
    %v2678 = vld [vmem:[#allocation10 + $0x5a0] sm:$0xff]
    %v2679 = vld [vmem:[#allocation10 + $0x5a8] sm:$0xff]
    %v2680 = vld [vmem:[#allocation10 + $0x5b0] sm:$0xff]
    %v2681 = vld [vmem:[#allocation10 + $0x5b8] sm:$0xff]
    %v2682 = vld [vmem:[#allocation10 + $0x5c0] sm:$0xff]
    %v2683 = vld [vmem:[#allocation10 + $0x5c8] sm:$0xff]
    %v2684 = vld [vmem:[#allocation10 + $0x5d0] sm:$0xff]
    %v2685 = vld [vmem:[#allocation10 + $0x5d8] sm:$0xff]
    %v2686 = vld [vmem:[#allocation10 + $0x5e0] sm:$0xff]
    %v2687 = vld [vmem:[#allocation10 + $0x5e8] sm:$0xff]
    %v2688 = vld [vmem:[#allocation10 + $0x5f0] sm:$0xff]
    %v2689 = vld [vmem:[#allocation10 + $0x5f8] sm:$0xff]
    %v2690 = vld [vmem:[#allocation10 + $0x600] sm:$0xff]
    %v2691 = vld [vmem:[#allocation10 + $0x608] sm:$0xff]
    %v2692 = vld [vmem:[#allocation10 + $0x610] sm:$0xff]
    %v2693 = vld [vmem:[#allocation10 + $0x618] sm:$0xff]
    %v2694 = vld [vmem:[#allocation10 + $0x620] sm:$0xff]
    %v2695 = vld [vmem:[#allocation10 + $0x628] sm:$0xff]
    %v2696 = vld [vmem:[#allocation10 + $0x630] sm:$0xff]
    %v2697 = vld [vmem:[#allocation10 + $0x638] sm:$0xff]
    %v2698 = vld [vmem:[#allocation10 + $0x640] sm:$0xff]
    %v2699 = vld [vmem:[#allocation10 + $0x648] sm:$0xff]
    %v2700 = vld [vmem:[#allocation10 + $0x650] sm:$0xff]
    %v2701 = vld [vmem:[#allocation10 + $0x658] sm:$0xff]
    %v2702 = vld [vmem:[#allocation10 + $0x660] sm:$0xff]
    %v2703 = vld [vmem:[#allocation10 + $0x668] sm:$0xff]
    %v2704 = vld [vmem:[#allocation10 + $0x670] sm:$0xff]
    %v2705 = vld [vmem:[#allocation10 + $0x678] sm:$0xff]
    %v2706 = vld [vmem:[#allocation10 + $0x680] sm:$0xff]
    %v2707 = vld [vmem:[#allocation10 + $0x688] sm:$0xff]
    %v2708 = vld [vmem:[#allocation10 + $0x690] sm:$0xff]
    %v2709 = vld [vmem:[#allocation10 + $0x698] sm:$0xff]
    %v2710 = vld [vmem:[#allocation10 + $0x6a0] sm:$0xff]
    %v2711 = vld [vmem:[#allocation10 + $0x6a8] sm:$0xff]
    %v2712 = vld [vmem:[#allocation10 + $0x6b0] sm:$0xff]
    %v2713 = vld [vmem:[#allocation10 + $0x6b8] sm:$0xff]
    %v2714 = vld [vmem:[#allocation10 + $0x6c0] sm:$0xff]
    %v2715 = vld [vmem:[#allocation10 + $0x6c8] sm:$0xff]
    %v2716 = vld [vmem:[#allocation10 + $0x6d0] sm:$0xff]
    %v2717 = vld [vmem:[#allocation10 + $0x6d8] sm:$0xff]
    %v2718 = vld [vmem:[#allocation10 + $0x6e0] sm:$0xff]
    %v2719 = vld [vmem:[#allocation10 + $0x6e8] sm:$0xff]
    %v2720 = vld [vmem:[#allocation10 + $0x6f0] sm:$0xff]
    %v2721 = vld [vmem:[#allocation10 + $0x6f8] sm:$0xff]
    %v2722 = vld [vmem:[#allocation10 + $0x700] sm:$0xff]
    %v2723 = vld [vmem:[#allocation10 + $0x708] sm:$0xff]
    %v2724 = vld [vmem:[#allocation10 + $0x710] sm:$0xff]
    %v2725 = vld [vmem:[#allocation10 + $0x718] sm:$0xff]
    %v2726 = vld [vmem:[#allocation10 + $0x720] sm:$0xff]
    %v2727 = vld [vmem:[#allocation10 + $0x728] sm:$0xff]
    %v2728 = vld [vmem:[#allocation10 + $0x730] sm:$0xff]
    %v2729 = vld [vmem:[#allocation10 + $0x738] sm:$0xff]
    %v2730 = vld [vmem:[#allocation10 + $0x740] sm:$0xff]
    %v2731 = vld [vmem:[#allocation10 + $0x748] sm:$0xff]
    %v2732 = vld [vmem:[#allocation10 + $0x750] sm:$0xff]
    %v2733 = vld [vmem:[#allocation10 + $0x758] sm:$0xff]
    %v2734 = vld [vmem:[#allocation10 + $0x760] sm:$0xff]
    %v2735 = vld [vmem:[#allocation10 + $0x768] sm:$0xff]
    %v2736 = vld [vmem:[#allocation10 + $0x770] sm:$0xff]
    %v2737 = vld [vmem:[#allocation10 + $0x778] sm:$0xff]
    %v2738 = vld [vmem:[#allocation10 + $0x780] sm:$0xff]
    %v2739 = vld [vmem:[#allocation10 + $0x788] sm:$0xff]
    %v2740 = vld [vmem:[#allocation10 + $0x790] sm:$0xff]
    %v2741 = vld [vmem:[#allocation10 + $0x798] sm:$0xff]
    %v2742 = vld [vmem:[#allocation10 + $0x7a0] sm:$0xff]
    %v2743 = vld [vmem:[#allocation10 + $0x7a8] sm:$0xff]
    %v2744 = vld [vmem:[#allocation10 + $0x7b0] sm:$0xff]
    %v2745 = vld [vmem:[#allocation10 + $0x7b8] sm:$0xff]
    %v2746 = vld [vmem:[#allocation10 + $0x7c0] sm:$0xff]
    %v2747 = vld [vmem:[#allocation10 + $0x7c8] sm:$0xff]
    %v2748 = vld [vmem:[#allocation10 + $0x7d0] sm:$0xff]
    %v2749 = vld [vmem:[#allocation10 + $0x7d8] sm:$0xff]
    %v2750 = vld [vmem:[#allocation10 + $0x7e0] sm:$0xff]
    %v2751 = vld [vmem:[#allocation10 + $0x7e8] sm:$0xff]
    %v2752 = vld [vmem:[#allocation10 + $0x7f0] sm:$0xff]
    %v2753 = vld [vmem:[#allocation10 + $0x7f8] sm:$0xff]
    %v2754 = vld [vmem:[#allocation10 + $0x800] sm:$0xff]
    %v2755 = vld [vmem:[#allocation10 + $0x808] sm:$0xff]
    %v2756 = vld [vmem:[#allocation10 + $0x810] sm:$0xff]
    %v2757 = vld [vmem:[#allocation10 + $0x818] sm:$0xff]
    %v2758 = vld [vmem:[#allocation10 + $0x820] sm:$0xff]
    %v2759 = vld [vmem:[#allocation10 + $0x828] sm:$0xff]
    %v2760 = vld [vmem:[#allocation10 + $0x830] sm:$0xff]
    %v2761 = vld [vmem:[#allocation10 + $0x838] sm:$0xff]
    %v2762 = vld [vmem:[#allocation10 + $0x840] sm:$0xff]
    %v2763 = vld [vmem:[#allocation10 + $0x848] sm:$0xff]
    %v2764 = vld [vmem:[#allocation10 + $0x850] sm:$0xff]
    %v2765 = vld [vmem:[#allocation10 + $0x858] sm:$0xff]
    %v2766 = vld [vmem:[#allocation10 + $0x860] sm:$0xff]
    %v2767 = vld [vmem:[#allocation10 + $0x868] sm:$0xff]
    %v2768 = vld [vmem:[#allocation10 + $0x870] sm:$0xff]
    %v2769 = vld [vmem:[#allocation10 + $0x878] sm:$0xff]
    %v2770 = vld [vmem:[#allocation10 + $0x880] sm:$0xff]
    %v2771 = vld [vmem:[#allocation10 + $0x888] sm:$0xff]
    %v2772 = vld [vmem:[#allocation10 + $0x890] sm:$0xff]
    %v2773 = vld [vmem:[#allocation10 + $0x898] sm:$0xff]
    %v2774 = vld [vmem:[#allocation10 + $0x8a0] sm:$0xff]
    %v2775 = vld [vmem:[#allocation10 + $0x8a8] sm:$0xff]
    %v2776 = vld [vmem:[#allocation10 + $0x8b0] sm:$0xff]
    %v2777 = vld [vmem:[#allocation10 + $0x8b8] sm:$0xff]
    %v2778 = vld [vmem:[#allocation10 + $0x8c0] sm:$0xff]
    %v2779 = vld [vmem:[#allocation10 + $0x8c8] sm:$0xff]
    %v2780 = vld [vmem:[#allocation10 + $0x8d0] sm:$0xff]
    %v2781 = vld [vmem:[#allocation10 + $0x8d8] sm:$0xff]
    %v2782 = vld [vmem:[#allocation10 + $0x8e0] sm:$0xff]
    %v2783 = vld [vmem:[#allocation10 + $0x8e8] sm:$0xff]
    %v2784 = vld [vmem:[#allocation10 + $0x8f0] sm:$0xff]
    %v2785 = vld [vmem:[#allocation10 + $0x8f8] sm:$0xff]
    %v2786 = vld [vmem:[#allocation14] sm:$0x3f]
    %v2788 = vlaneseq
    %v2789 = vshrl.u32 %v2788, 7
    %v2790 = vsub.s32 0, %v2789
    %v2791 = vrot.slane %v2786, %v2790
    %v2792 = vlaneseq
    %v2793 = vshrl.u32 %v2792, 7
    %v2794 = vsub.s32 1, %v2793
    %v2795 = vrot.slane %v2786, %v2794
    %v2796 = vlaneseq
    %v2797 = vshrl.u32 %v2796, 7
    %v2798 = vsub.s32 2, %v2797
    %v2799 = vrot.slane %v2786, %v2798
    %v2800 = vlaneseq
    %v2801 = vshrl.u32 %v2800, 7
    %v2802 = vsub.s32 3, %v2801
    %v2803 = vrot.slane %v2786, %v2802
    %v2804 = vlaneseq
    %v2805 = vshrl.u32 %v2804, 7
    %v2806 = vsub.s32 4, %v2805
    %v2807 = vrot.slane %v2786, %v2806
    %v2808 = vlaneseq
    %v2809 = vshrl.u32 %v2808, 7
    %v2810 = vsub.s32 5, %v2809
    %v2811 = vrot.slane %v2786, %v2810
    %v3106 = vunpack.c.l.b16 %v2498
    %v3107 = vunpack.c.h.b16 %v2498
    %v3108 = vunpack.c.l.b16 %v2499
    %v3109 = vunpack.c.h.b16 %v2499
    %v3110 = vunpack.c.l.b16 %v2500
    %v3111 = vunpack.c.h.b16 %v2500
    %v3112 = vunpack.c.l.b16 %v2501
    %v3113 = vunpack.c.h.b16 %v2501
    %v3114 = vunpack.c.l.b16 %v2502
    %v3115 = vunpack.c.h.b16 %v2502
    %v3116 = vunpack.c.l.b16 %v2503
    %v3117 = vunpack.c.h.b16 %v2503
    %v3118 = vunpack.c.l.b16 %v2504
    %v3119 = vunpack.c.h.b16 %v2504
    %v3120 = vunpack.c.l.b16 %v2505
    %v3121 = vunpack.c.h.b16 %v2505
    %v3122 = vunpack.c.l.b16 %v2506
    %v3123 = vunpack.c.h.b16 %v2506
    %v3124 = vunpack.c.l.b16 %v2507
    %v3125 = vunpack.c.h.b16 %v2507
    %v3126 = vunpack.c.l.b16 %v2508
    %v3127 = vunpack.c.h.b16 %v2508
    %v3128 = vunpack.c.l.b16 %v2509
    %v3129 = vunpack.c.h.b16 %v2509
    %v3130 = vunpack.c.l.b16 %v2510
    %v3131 = vunpack.c.h.b16 %v2510
    %v3132 = vunpack.c.l.b16 %v2511
    %v3133 = vunpack.c.h.b16 %v2511
    %v3134 = vunpack.c.l.b16 %v2512
    %v3135 = vunpack.c.h.b16 %v2512
    %v3136 = vunpack.c.l.b16 %v2513
    %v3137 = vunpack.c.h.b16 %v2513
    %v3138 = vunpack.c.l.b16 %v2514
    %v3139 = vunpack.c.h.b16 %v2514
    %v3140 = vunpack.c.l.b16 %v2515
    %v3141 = vunpack.c.h.b16 %v2515
    %v3142 = vunpack.c.l.b16 %v2516
    %v3143 = vunpack.c.h.b16 %v2516
    %v3144 = vunpack.c.l.b16 %v2517
    %v3145 = vunpack.c.h.b16 %v2517
    %v3146 = vunpack.c.l.b16 %v2518
    %v3147 = vunpack.c.h.b16 %v2518
    %v3148 = vunpack.c.l.b16 %v2519
    %v3149 = vunpack.c.h.b16 %v2519
    %v3150 = vunpack.c.l.b16 %v2520
    %v3151 = vunpack.c.h.b16 %v2520
    %v3152 = vunpack.c.l.b16 %v2521
    %v3153 = vunpack.c.h.b16 %v2521
    %v3154 = vunpack.c.l.b16 %v2522
    %v3155 = vunpack.c.h.b16 %v2522
    %v3156 = vunpack.c.l.b16 %v2523
    %v3157 = vunpack.c.h.b16 %v2523
    %v3158 = vunpack.c.l.b16 %v2524
    %v3159 = vunpack.c.h.b16 %v2524
    %v3160 = vunpack.c.l.b16 %v2525
    %v3161 = vunpack.c.h.b16 %v2525
    %v3162 = vunpack.c.l.b16 %v2526
    %v3163 = vunpack.c.h.b16 %v2526
    %v3164 = vunpack.c.l.b16 %v2527
    %v3165 = vunpack.c.h.b16 %v2527
    %v3166 = vunpack.c.l.b16 %v2528
    %v3167 = vunpack.c.h.b16 %v2528
    %v3168 = vunpack.c.l.b16 %v2529
    %v3169 = vunpack.c.h.b16 %v2529
    %v3170 = vunpack.c.l.b16 %v2530
    %v3171 = vunpack.c.h.b16 %v2530
    %v3172 = vunpack.c.l.b16 %v2531
    %v3173 = vunpack.c.h.b16 %v2531
    %v3174 = vunpack.c.l.b16 %v2532
    %v3175 = vunpack.c.h.b16 %v2532
    %v3176 = vunpack.c.l.b16 %v2533
    %v3177 = vunpack.c.h.b16 %v2533
    %v3178 = vunpack.c.l.b16 %v2534
    %v3179 = vunpack.c.h.b16 %v2534
    %v3180 = vunpack.c.l.b16 %v2535
    %v3181 = vunpack.c.h.b16 %v2535
    %v3182 = vunpack.c.l.b16 %v2536
    %v3183 = vunpack.c.h.b16 %v2536
    %v3184 = vunpack.c.l.b16 %v2537
    %v3185 = vunpack.c.h.b16 %v2537
    %v3186 = vunpack.c.l.b16 %v2538
    %v3187 = vunpack.c.h.b16 %v2538
    %v3188 = vunpack.c.l.b16 %v2539
    %v3189 = vunpack.c.h.b16 %v2539
    %v3190 = vunpack.c.l.b16 %v2540
    %v3191 = vunpack.c.h.b16 %v2540
    %v3192 = vunpack.c.l.b16 %v2541
    %v3193 = vunpack.c.h.b16 %v2541
    %v3194 = vunpack.c.l.b16 %v2542
    %v3195 = vunpack.c.h.b16 %v2542
    %v3196 = vunpack.c.l.b16 %v2543
    %v3197 = vunpack.c.h.b16 %v2543
    %v3198 = vunpack.c.l.b16 %v2544
    %v3199 = vunpack.c.h.b16 %v2544
    %v3200 = vunpack.c.l.b16 %v2545
    %v3201 = vunpack.c.h.b16 %v2545
    %v3202 = vunpack.c.l.b16 %v2546
    %v3203 = vunpack.c.h.b16 %v2546
    %v3204 = vunpack.c.l.b16 %v2547
    %v3205 = vunpack.c.h.b16 %v2547
    %v3206 = vunpack.c.l.b16 %v2548
    %v3207 = vunpack.c.h.b16 %v2548
    %v3208 = vunpack.c.l.b16 %v2549
    %v3209 = vunpack.c.h.b16 %v2549
    %v3210 = vunpack.c.l.b16 %v2550
    %v3211 = vunpack.c.h.b16 %v2550
    %v3212 = vunpack.c.l.b16 %v2551
    %v3213 = vunpack.c.h.b16 %v2551
    %v3214 = vunpack.c.l.b16 %v2552
    %v3215 = vunpack.c.h.b16 %v2552
    %v3216 = vunpack.c.l.b16 %v2553
    %v3217 = vunpack.c.h.b16 %v2553
    %v3218 = vunpack.c.l.b16 %v2554
    %v3219 = vunpack.c.h.b16 %v2554
    %v3220 = vunpack.c.l.b16 %v2555
    %v3221 = vunpack.c.h.b16 %v2555
    %v3222 = vunpack.c.l.b16 %v2556
    %v3223 = vunpack.c.h.b16 %v2556
    %v3224 = vunpack.c.l.b16 %v2557
    %v3225 = vunpack.c.h.b16 %v2557
    %v3226 = vunpack.c.l.b16 %v2558
    %v3227 = vunpack.c.h.b16 %v2558
    %v3228 = vunpack.c.l.b16 %v2559
    %v3229 = vunpack.c.h.b16 %v2559
    %v3230 = vunpack.c.l.b16 %v2560
    %v3231 = vunpack.c.h.b16 %v2560
    %v3232 = vunpack.c.l.b16 %v2561
    %v3233 = vunpack.c.h.b16 %v2561
    %v3234 = vunpack.c.l.b16 %v2562
    %v3235 = vunpack.c.h.b16 %v2562
    %v3236 = vunpack.c.l.b16 %v2563
    %v3237 = vunpack.c.h.b16 %v2563
    %v3238 = vunpack.c.l.b16 %v2564
    %v3239 = vunpack.c.h.b16 %v2564
    %v3240 = vunpack.c.l.b16 %v2565
    %v3241 = vunpack.c.h.b16 %v2565
    %v3242 = vunpack.c.l.b16 %v2566
    %v3243 = vunpack.c.h.b16 %v2566
    %v3244 = vunpack.c.l.b16 %v2567
    %v3245 = vunpack.c.h.b16 %v2567
    %v3246 = vunpack.c.l.b16 %v2568
    %v3247 = vunpack.c.h.b16 %v2568
    %v3248 = vunpack.c.l.b16 %v2569
    %v3249 = vunpack.c.h.b16 %v2569
    %v3250 = vunpack.c.l.b16 %v2570
    %v3251 = vunpack.c.h.b16 %v2570
    %v3252 = vunpack.c.l.b16 %v2571
    %v3253 = vunpack.c.h.b16 %v2571
    %v3254 = vunpack.c.l.b16 %v2572
    %v3255 = vunpack.c.h.b16 %v2572
    %v3256 = vunpack.c.l.b16 %v2573
    %v3257 = vunpack.c.h.b16 %v2573
    %v3258 = vunpack.c.l.b16 %v2574
    %v3259 = vunpack.c.h.b16 %v2574
    %v3260 = vunpack.c.l.b16 %v2575
    %v3261 = vunpack.c.h.b16 %v2575
    %v3262 = vunpack.c.l.b16 %v2576
    %v3263 = vunpack.c.h.b16 %v2576
    %v3264 = vunpack.c.l.b16 %v2577
    %v3265 = vunpack.c.h.b16 %v2577
    %v3266 = vunpack.c.l.b16 %v2578
    %v3267 = vunpack.c.h.b16 %v2578
    %v3268 = vunpack.c.l.b16 %v2579
    %v3269 = vunpack.c.h.b16 %v2579
    %v3270 = vunpack.c.l.b16 %v2580
    %v3271 = vunpack.c.h.b16 %v2580
    %v3272 = vunpack.c.l.b16 %v2581
    %v3273 = vunpack.c.h.b16 %v2581
    %v3274 = vunpack.c.l.b16 %v2582
    %v3275 = vunpack.c.h.b16 %v2582
    %v3276 = vunpack.c.l.b16 %v2583
    %v3277 = vunpack.c.h.b16 %v2583
    %v3278 = vunpack.c.l.b16 %v2584
    %v3279 = vunpack.c.h.b16 %v2584
    %v3280 = vunpack.c.l.b16 %v2585
    %v3281 = vunpack.c.h.b16 %v2585
    %v3282 = vunpack.c.l.b16 %v2586
    %v3283 = vunpack.c.h.b16 %v2586
    %v3284 = vunpack.c.l.b16 %v2587
    %v3285 = vunpack.c.h.b16 %v2587
    %v3286 = vunpack.c.l.b16 %v2588
    %v3287 = vunpack.c.h.b16 %v2588
    %v3288 = vunpack.c.l.b16 %v2589
    %v3289 = vunpack.c.h.b16 %v2589
    %v3290 = vunpack.c.l.b16 %v2590
    %v3291 = vunpack.c.h.b16 %v2590
    %v3292 = vunpack.c.l.b16 %v2591
    %v3293 = vunpack.c.h.b16 %v2591
    %v3294 = vunpack.c.l.b16 %v2592
    %v3295 = vunpack.c.h.b16 %v2592
    %v3296 = vunpack.c.l.b16 %v2593
    %v3297 = vunpack.c.h.b16 %v2593
    %v3298 = vunpack.c.l.b16 %v2594
    %v3299 = vunpack.c.h.b16 %v2594
    %v3300 = vunpack.c.l.b16 %v2595
    %v3301 = vunpack.c.h.b16 %v2595
    %v3302 = vunpack.c.l.b16 %v2596
    %v3303 = vunpack.c.h.b16 %v2596
    %v3304 = vunpack.c.l.b16 %v2597
    %v3305 = vunpack.c.h.b16 %v2597
    %v3306 = vunpack.c.l.b16 %v2598
    %v3307 = vunpack.c.h.b16 %v2598
    %v3308 = vunpack.c.l.b16 %v2599
    %v3309 = vunpack.c.h.b16 %v2599
    %v3310 = vunpack.c.l.b16 %v2600
    %v3311 = vunpack.c.h.b16 %v2600
    %v3312 = vunpack.c.l.b16 %v2601
    %v3313 = vunpack.c.h.b16 %v2601
    %v3314 = vunpack.c.l.b16 %v2602
    %v3315 = vunpack.c.h.b16 %v2602
    %v3316 = vunpack.c.l.b16 %v2603
    %v3317 = vunpack.c.h.b16 %v2603
    %v3318 = vunpack.c.l.b16 %v2604
    %v3319 = vunpack.c.h.b16 %v2604
    %v3320 = vunpack.c.l.b16 %v2605
    %v3321 = vunpack.c.h.b16 %v2605
    %v3322 = vunpack.c.l.b16 %v2606
    %v3323 = vunpack.c.h.b16 %v2606
    %v3324 = vunpack.c.l.b16 %v2607
    %v3325 = vunpack.c.h.b16 %v2607
    %v3326 = vunpack.c.l.b16 %v2608
    %v3327 = vunpack.c.h.b16 %v2608
    %v3328 = vunpack.c.l.b16 %v2609
    %v3329 = vunpack.c.h.b16 %v2609
    %v3330 = vunpack.c.l.b16 %v2610
    %v3331 = vunpack.c.h.b16 %v2610
    %v3332 = vunpack.c.l.b16 %v2611
    %v3333 = vunpack.c.h.b16 %v2611
    %v3334 = vunpack.c.l.b16 %v2612
    %v3335 = vunpack.c.h.b16 %v2612
    %v3336 = vunpack.c.l.b16 %v2613
    %v3337 = vunpack.c.h.b16 %v2613
    %v3338 = vunpack.c.l.b16 %v2614
    %v3339 = vunpack.c.h.b16 %v2614
    %v3340 = vunpack.c.l.b16 %v2615
    %v3341 = vunpack.c.h.b16 %v2615
    %v3342 = vunpack.c.l.b16 %v2616
    %v3343 = vunpack.c.h.b16 %v2616
    %v3344 = vunpack.c.l.b16 %v2617
    %v3345 = vunpack.c.h.b16 %v2617
    %v3346 = vunpack.c.l.b16 %v2618
    %v3347 = vunpack.c.h.b16 %v2618
    %v3348 = vunpack.c.l.b16 %v2619
    %v3349 = vunpack.c.h.b16 %v2619
    %v3350 = vunpack.c.l.b16 %v2620
    %v3351 = vunpack.c.h.b16 %v2620
    %v3352 = vunpack.c.l.b16 %v2621
    %v3353 = vunpack.c.h.b16 %v2621
    %v3354 = vunpack.c.l.b16 %v2622
    %v3355 = vunpack.c.h.b16 %v2622
    %v3356 = vunpack.c.l.b16 %v2623
    %v3357 = vunpack.c.h.b16 %v2623
    %v3358 = vunpack.c.l.b16 %v2624
    %v3359 = vunpack.c.h.b16 %v2624
    %v3360 = vunpack.c.l.b16 %v2625
    %v3361 = vunpack.c.h.b16 %v2625
    %v3362 = vunpack.c.l.b16 %v2626
    %v3363 = vunpack.c.h.b16 %v2626
    %v3364 = vunpack.c.l.b16 %v2627
    %v3365 = vunpack.c.h.b16 %v2627
    %v3366 = vunpack.c.l.b16 %v2628
    %v3367 = vunpack.c.h.b16 %v2628
    %v3368 = vunpack.c.l.b16 %v2629
    %v3369 = vunpack.c.h.b16 %v2629
    %v3370 = vunpack.c.l.b16 %v2630
    %v3371 = vunpack.c.h.b16 %v2630
    %v3372 = vunpack.c.l.b16 %v2631
    %v3373 = vunpack.c.h.b16 %v2631
    %v3374 = vunpack.c.l.b16 %v2632
    %v3375 = vunpack.c.h.b16 %v2632
    %v3376 = vunpack.c.l.b16 %v2633
    %v3377 = vunpack.c.h.b16 %v2633
    %v3378 = vunpack.c.l.b16 %v2634
    %v3379 = vunpack.c.h.b16 %v2634
    %v3380 = vunpack.c.l.b16 %v2635
    %v3381 = vunpack.c.h.b16 %v2635
    %v3382 = vunpack.c.l.b16 %v2636
    %v3383 = vunpack.c.h.b16 %v2636
    %v3384 = vunpack.c.l.b16 %v2637
    %v3385 = vunpack.c.h.b16 %v2637
    %v3386 = vunpack.c.l.b16 %v2638
    %v3387 = vunpack.c.h.b16 %v2638
    %v3388 = vunpack.c.l.b16 %v2639
    %v3389 = vunpack.c.h.b16 %v2639
    %v3390 = vunpack.c.l.b16 %v2640
    %v3391 = vunpack.c.h.b16 %v2640
    %v3392 = vunpack.c.l.b16 %v2641
    %v3393 = vunpack.c.h.b16 %v2641
    %v3394 = vunpack.c.l.b16 %v2642
    %v3395 = vunpack.c.h.b16 %v2642
    %v3396 = vunpack.c.l.b16 %v2643
    %v3397 = vunpack.c.h.b16 %v2643
    %v3398 = vunpack.c.l.b16 %v2644
    %v3399 = vunpack.c.h.b16 %v2644
    %v3400 = vunpack.c.l.b16 %v2645
    %v3401 = vunpack.c.h.b16 %v2645
    %v3402 = vunpack.c.l.b16 %v2646
    %v3403 = vunpack.c.h.b16 %v2646
    %v3404 = vunpack.c.l.b16 %v2647
    %v3405 = vunpack.c.h.b16 %v2647
    %v3406 = vunpack.c.l.b16 %v2648
    %v3407 = vunpack.c.h.b16 %v2648
    %v3408 = vunpack.c.l.b16 %v2649
    %v3409 = vunpack.c.h.b16 %v2649
    %v3410 = vunpack.c.l.b16 %v2650
    %v3411 = vunpack.c.h.b16 %v2650
    %v3412 = vunpack.c.l.b16 %v2651
    %v3413 = vunpack.c.h.b16 %v2651
    %v3414 = vunpack.c.l.b16 %v2652
    %v3415 = vunpack.c.h.b16 %v2652
    %v3416 = vunpack.c.l.b16 %v2653
    %v3417 = vunpack.c.h.b16 %v2653
    %v3418 = vunpack.c.l.b16 %v2654
    %v3419 = vunpack.c.h.b16 %v2654
    %v3420 = vunpack.c.l.b16 %v2655
    %v3421 = vunpack.c.h.b16 %v2655
    %v3422 = vunpack.c.l.b16 %v2656
    %v3423 = vunpack.c.h.b16 %v2656
    %v3424 = vunpack.c.l.b16 %v2657
    %v3425 = vunpack.c.h.b16 %v2657
    %v3426 = vunpack.c.l.b16 %v2658
    %v3427 = vunpack.c.h.b16 %v2658
    %v3428 = vunpack.c.l.b16 %v2659
    %v3429 = vunpack.c.h.b16 %v2659
    %v3430 = vunpack.c.l.b16 %v2660
    %v3431 = vunpack.c.h.b16 %v2660
    %v3432 = vunpack.c.l.b16 %v2661
    %v3433 = vunpack.c.h.b16 %v2661
    %v3434 = vunpack.c.l.b16 %v2662
    %v3435 = vunpack.c.h.b16 %v2662
    %v3436 = vunpack.c.l.b16 %v2663
    %v3437 = vunpack.c.h.b16 %v2663
    %v3438 = vunpack.c.l.b16 %v2664
    %v3439 = vunpack.c.h.b16 %v2664
    %v3440 = vunpack.c.l.b16 %v2665
    %v3441 = vunpack.c.h.b16 %v2665
    %v3442 = vunpack.c.l.b16 %v2666
    %v3443 = vunpack.c.h.b16 %v2666
    %v3444 = vunpack.c.l.b16 %v2667
    %v3445 = vunpack.c.h.b16 %v2667
    %v3446 = vunpack.c.l.b16 %v2668
    %v3447 = vunpack.c.h.b16 %v2668
    %v3448 = vunpack.c.l.b16 %v2669
    %v3449 = vunpack.c.h.b16 %v2669
    %v3450 = vunpack.c.l.b16 %v2670
    %v3451 = vunpack.c.h.b16 %v2670
    %v3452 = vunpack.c.l.b16 %v2671
    %v3453 = vunpack.c.h.b16 %v2671
    %v3454 = vunpack.c.l.b16 %v2672
    %v3455 = vunpack.c.h.b16 %v2672
    %v3456 = vunpack.c.l.b16 %v2673
    %v3457 = vunpack.c.h.b16 %v2673
    %v3458 = vunpack.c.l.b16 %v2674
    %v3459 = vunpack.c.h.b16 %v2674
    %v3460 = vunpack.c.l.b16 %v2675
    %v3461 = vunpack.c.h.b16 %v2675
    %v3462 = vunpack.c.l.b16 %v2676
    %v3463 = vunpack.c.h.b16 %v2676
    %v3464 = vunpack.c.l.b16 %v2677
    %v3465 = vunpack.c.h.b16 %v2677
    %v3466 = vunpack.c.l.b16 %v2678
    %v3467 = vunpack.c.h.b16 %v2678
    %v3468 = vunpack.c.l.b16 %v2679
    %v3469 = vunpack.c.h.b16 %v2679
    %v3470 = vunpack.c.l.b16 %v2680
    %v3471 = vunpack.c.h.b16 %v2680
    %v3472 = vunpack.c.l.b16 %v2681
    %v3473 = vunpack.c.h.b16 %v2681
    %v3474 = vunpack.c.l.b16 %v2682
    %v3475 = vunpack.c.h.b16 %v2682
    %v3476 = vunpack.c.l.b16 %v2683
    %v3477 = vunpack.c.h.b16 %v2683
    %v3478 = vunpack.c.l.b16 %v2684
    %v3479 = vunpack.c.h.b16 %v2684
    %v3480 = vunpack.c.l.b16 %v2685
    %v3481 = vunpack.c.h.b16 %v2685
    %v3482 = vunpack.c.l.b16 %v2686
    %v3483 = vunpack.c.h.b16 %v2686
    %v3484 = vunpack.c.l.b16 %v2687
    %v3485 = vunpack.c.h.b16 %v2687
    %v3486 = vunpack.c.l.b16 %v2688
    %v3487 = vunpack.c.h.b16 %v2688
    %v3488 = vunpack.c.l.b16 %v2689
    %v3489 = vunpack.c.h.b16 %v2689
    %v3490 = vunpack.c.l.b16 %v2690
    %v3491 = vunpack.c.h.b16 %v2690
    %v3492 = vunpack.c.l.b16 %v2691
    %v3493 = vunpack.c.h.b16 %v2691
    %v3494 = vunpack.c.l.b16 %v2692
    %v3495 = vunpack.c.h.b16 %v2692
    %v3496 = vunpack.c.l.b16 %v2693
    %v3497 = vunpack.c.h.b16 %v2693
    %v3498 = vunpack.c.l.b16 %v2694
    %v3499 = vunpack.c.h.b16 %v2694
    %v3500 = vunpack.c.l.b16 %v2695
    %v3501 = vunpack.c.h.b16 %v2695
    %v3502 = vunpack.c.l.b16 %v2696
    %v3503 = vunpack.c.h.b16 %v2696
    %v3504 = vunpack.c.l.b16 %v2697
    %v3505 = vunpack.c.h.b16 %v2697
    %v3506 = vunpack.c.l.b16 %v2698
    %v3507 = vunpack.c.h.b16 %v2698
    %v3508 = vunpack.c.l.b16 %v2699
    %v3509 = vunpack.c.h.b16 %v2699
    %v3510 = vunpack.c.l.b16 %v2700
    %v3511 = vunpack.c.h.b16 %v2700
    %v3512 = vunpack.c.l.b16 %v2701
    %v3513 = vunpack.c.h.b16 %v2701
    %v3514 = vunpack.c.l.b16 %v2702
    %v3515 = vunpack.c.h.b16 %v2702
    %v3516 = vunpack.c.l.b16 %v2703
    %v3517 = vunpack.c.h.b16 %v2703
    %v3518 = vunpack.c.l.b16 %v2704
    %v3519 = vunpack.c.h.b16 %v2704
    %v3520 = vunpack.c.l.b16 %v2705
    %v3521 = vunpack.c.h.b16 %v2705
    %v3522 = vunpack.c.l.b16 %v2706
    %v3523 = vunpack.c.h.b16 %v2706
    %v3524 = vunpack.c.l.b16 %v2707
    %v3525 = vunpack.c.h.b16 %v2707
    %v3526 = vunpack.c.l.b16 %v2708
    %v3527 = vunpack.c.h.b16 %v2708
    %v3528 = vunpack.c.l.b16 %v2709
    %v3529 = vunpack.c.h.b16 %v2709
    %v3530 = vunpack.c.l.b16 %v2710
    %v3531 = vunpack.c.h.b16 %v2710
    %v3532 = vunpack.c.l.b16 %v2711
    %v3533 = vunpack.c.h.b16 %v2711
    %v3534 = vunpack.c.l.b16 %v2712
    %v3535 = vunpack.c.h.b16 %v2712
    %v3536 = vunpack.c.l.b16 %v2713
    %v3537 = vunpack.c.h.b16 %v2713
    %v3538 = vunpack.c.l.b16 %v2714
    %v3539 = vunpack.c.h.b16 %v2714
    %v3540 = vunpack.c.l.b16 %v2715
    %v3541 = vunpack.c.h.b16 %v2715
    %v3542 = vunpack.c.l.b16 %v2716
    %v3543 = vunpack.c.h.b16 %v2716
    %v3544 = vunpack.c.l.b16 %v2717
    %v3545 = vunpack.c.h.b16 %v2717
    %v3546 = vunpack.c.l.b16 %v2718
    %v3547 = vunpack.c.h.b16 %v2718
    %v3548 = vunpack.c.l.b16 %v2719
    %v3549 = vunpack.c.h.b16 %v2719
    %v3550 = vunpack.c.l.b16 %v2720
    %v3551 = vunpack.c.h.b16 %v2720
    %v3552 = vunpack.c.l.b16 %v2721
    %v3553 = vunpack.c.h.b16 %v2721
    %v3554 = vunpack.c.l.b16 %v2722
    %v3555 = vunpack.c.h.b16 %v2722
    %v3556 = vunpack.c.l.b16 %v2723
    %v3557 = vunpack.c.h.b16 %v2723
    %v3558 = vunpack.c.l.b16 %v2724
    %v3559 = vunpack.c.h.b16 %v2724
    %v3560 = vunpack.c.l.b16 %v2725
    %v3561 = vunpack.c.h.b16 %v2725
    %v3562 = vunpack.c.l.b16 %v2726
    %v3563 = vunpack.c.h.b16 %v2726
    %v3564 = vunpack.c.l.b16 %v2727
    %v3565 = vunpack.c.h.b16 %v2727
    %v3566 = vunpack.c.l.b16 %v2728
    %v3567 = vunpack.c.h.b16 %v2728
    %v3568 = vunpack.c.l.b16 %v2729
    %v3569 = vunpack.c.h.b16 %v2729
    %v3570 = vunpack.c.l.b16 %v2730
    %v3571 = vunpack.c.h.b16 %v2730
    %v3572 = vunpack.c.l.b16 %v2731
    %v3573 = vunpack.c.h.b16 %v2731
    %v3574 = vunpack.c.l.b16 %v2732
    %v3575 = vunpack.c.h.b16 %v2732
    %v3576 = vunpack.c.l.b16 %v2733
    %v3577 = vunpack.c.h.b16 %v2733
    %v3578 = vunpack.c.l.b16 %v2734
    %v3579 = vunpack.c.h.b16 %v2734
    %v3580 = vunpack.c.l.b16 %v2735
    %v3581 = vunpack.c.h.b16 %v2735
    %v3582 = vunpack.c.l.b16 %v2736
    %v3583 = vunpack.c.h.b16 %v2736
    %v3584 = vunpack.c.l.b16 %v2737
    %v3585 = vunpack.c.h.b16 %v2737
    %v3586 = vunpack.c.l.b16 %v2738
    %v3587 = vunpack.c.h.b16 %v2738
    %v3588 = vunpack.c.l.b16 %v2739
    %v3589 = vunpack.c.h.b16 %v2739
    %v3590 = vunpack.c.l.b16 %v2740
    %v3591 = vunpack.c.h.b16 %v2740
    %v3592 = vunpack.c.l.b16 %v2741
    %v3593 = vunpack.c.h.b16 %v2741
    %v3594 = vunpack.c.l.b16 %v2742
    %v3595 = vunpack.c.h.b16 %v2742
    %v3596 = vunpack.c.l.b16 %v2743
    %v3597 = vunpack.c.h.b16 %v2743
    %v3598 = vunpack.c.l.b16 %v2744
    %v3599 = vunpack.c.h.b16 %v2744
    %v3600 = vunpack.c.l.b16 %v2745
    %v3601 = vunpack.c.h.b16 %v2745
    %v3602 = vunpack.c.l.b16 %v2746
    %v3603 = vunpack.c.h.b16 %v2746
    %v3604 = vunpack.c.l.b16 %v2747
    %v3605 = vunpack.c.h.b16 %v2747
    %v3606 = vunpack.c.l.b16 %v2748
    %v3607 = vunpack.c.h.b16 %v2748
    %v3608 = vunpack.c.l.b16 %v2749
    %v3609 = vunpack.c.h.b16 %v2749
    %v3610 = vunpack.c.l.b16 %v2750
    %v3611 = vunpack.c.h.b16 %v2750
    %v3612 = vunpack.c.l.b16 %v2751
    %v3613 = vunpack.c.h.b16 %v2751
    %v3614 = vunpack.c.l.b16 %v2752
    %v3615 = vunpack.c.h.b16 %v2752
    %v3616 = vunpack.c.l.b16 %v2753
    %v3617 = vunpack.c.h.b16 %v2753
    %v3618 = vunpack.c.l.b16 %v2754
    %v3619 = vunpack.c.h.b16 %v2754
    %v3620 = vunpack.c.l.b16 %v2755
    %v3621 = vunpack.c.h.b16 %v2755
    %v3622 = vunpack.c.l.b16 %v2756
    %v3623 = vunpack.c.h.b16 %v2756
    %v3624 = vunpack.c.l.b16 %v2757
    %v3625 = vunpack.c.h.b16 %v2757
    %v3626 = vunpack.c.l.b16 %v2758
    %v3627 = vunpack.c.h.b16 %v2758
    %v3628 = vunpack.c.l.b16 %v2759
    %v3629 = vunpack.c.h.b16 %v2759
    %v3630 = vunpack.c.l.b16 %v2760
    %v3631 = vunpack.c.h.b16 %v2760
    %v3632 = vunpack.c.l.b16 %v2761
    %v3633 = vunpack.c.h.b16 %v2761
    %v3634 = vunpack.c.l.b16 %v2762
    %v3635 = vunpack.c.h.b16 %v2762
    %v3636 = vunpack.c.l.b16 %v2763
    %v3637 = vunpack.c.h.b16 %v2763
    %v3638 = vunpack.c.l.b16 %v2764
    %v3639 = vunpack.c.h.b16 %v2764
    %v3640 = vunpack.c.l.b16 %v2765
    %v3641 = vunpack.c.h.b16 %v2765
    %v3642 = vunpack.c.l.b16 %v2766
    %v3643 = vunpack.c.h.b16 %v2766
    %v3644 = vunpack.c.l.b16 %v2767
    %v3645 = vunpack.c.h.b16 %v2767
    %v3646 = vunpack.c.l.b16 %v2768
    %v3647 = vunpack.c.h.b16 %v2768
    %v3648 = vunpack.c.l.b16 %v2769
    %v3649 = vunpack.c.h.b16 %v2769
    %v3650 = vunpack.c.l.b16 %v2770
    %v3651 = vunpack.c.h.b16 %v2770
    %v3652 = vunpack.c.l.b16 %v2771
    %v3653 = vunpack.c.h.b16 %v2771
    %v3654 = vunpack.c.l.b16 %v2772
    %v3655 = vunpack.c.h.b16 %v2772
    %v3656 = vunpack.c.l.b16 %v2773
    %v3657 = vunpack.c.h.b16 %v2773
    %v3658 = vunpack.c.l.b16 %v2774
    %v3659 = vunpack.c.h.b16 %v2774
    %v3660 = vunpack.c.l.b16 %v2775
    %v3661 = vunpack.c.h.b16 %v2775
    %v3662 = vunpack.c.l.b16 %v2776
    %v3663 = vunpack.c.h.b16 %v2776
    %v3664 = vunpack.c.l.b16 %v2777
    %v3665 = vunpack.c.h.b16 %v2777
    %v3666 = vunpack.c.l.b16 %v2778
    %v3667 = vunpack.c.h.b16 %v2778
    %v3668 = vunpack.c.l.b16 %v2779
    %v3669 = vunpack.c.h.b16 %v2779
    %v3670 = vunpack.c.l.b16 %v2780
    %v3671 = vunpack.c.h.b16 %v2780
    %v3672 = vunpack.c.l.b16 %v2781
    %v3673 = vunpack.c.h.b16 %v2781
    %v3674 = vunpack.c.l.b16 %v2782
    %v3675 = vunpack.c.h.b16 %v2782
    %v3676 = vunpack.c.l.b16 %v2783
    %v3677 = vunpack.c.h.b16 %v2783
    %v3678 = vunpack.c.l.b16 %v2784
    %v3679 = vunpack.c.h.b16 %v2784
    %v3680 = vunpack.c.l.b16 %v2785
    %v3681 = vunpack.c.h.b16 %v2785
    %v3682 = vpack.c.b16 %v3112, %v3106
    %v3683 = vpack.c.b16 %v3113, %v3107
    %v3684 = vpack.c.b16 %v3114, %v3108
    %v3685 = vpack.c.b16 %v3115, %v3109
    %v3686 = vpack.c.b16 %v3116, %v3110
    %v3687 = vpack.c.b16 %v3117, %v3111
    %v3688 = vpack.c.b16 %v3124, %v3118
    %v3689 = vpack.c.b16 %v3125, %v3119
    %v3690 = vpack.c.b16 %v3126, %v3120
    %v3691 = vpack.c.b16 %v3127, %v3121
    %v3692 = vpack.c.b16 %v3128, %v3122
    %v3693 = vpack.c.b16 %v3129, %v3123
    %v3694 = vpack.c.b16 %v3136, %v3130
    %v3695 = vpack.c.b16 %v3137, %v3131
    %v3696 = vpack.c.b16 %v3138, %v3132
    %v3697 = vpack.c.b16 %v3139, %v3133
    %v3698 = vpack.c.b16 %v3140, %v3134
    %v3699 = vpack.c.b16 %v3141, %v3135
    %v3700 = vpack.c.b16 %v3148, %v3142
    %v3701 = vpack.c.b16 %v3149, %v3143
    %v3702 = vpack.c.b16 %v3150, %v3144
    %v3703 = vpack.c.b16 %v3151, %v3145
    %v3704 = vpack.c.b16 %v3152, %v3146
    %v3705 = vpack.c.b16 %v3153, %v3147
    %v3706 = vpack.c.b16 %v3160, %v3154
    %v3707 = vpack.c.b16 %v3161, %v3155
    %v3708 = vpack.c.b16 %v3162, %v3156
    %v3709 = vpack.c.b16 %v3163, %v3157
    %v3710 = vpack.c.b16 %v3164, %v3158
    %v3711 = vpack.c.b16 %v3165, %v3159
    %v3712 = vpack.c.b16 %v3172, %v3166
    %v3713 = vpack.c.b16 %v3173, %v3167
    %v3714 = vpack.c.b16 %v3174, %v3168
    %v3715 = vpack.c.b16 %v3175, %v3169
    %v3716 = vpack.c.b16 %v3176, %v3170
    %v3717 = vpack.c.b16 %v3177, %v3171
    %v3718 = vpack.c.b16 %v3184, %v3178
    %v3719 = vpack.c.b16 %v3185, %v3179
    %v3720 = vpack.c.b16 %v3186, %v3180
    %v3721 = vpack.c.b16 %v3187, %v3181
    %v3722 = vpack.c.b16 %v3188, %v3182
    %v3723 = vpack.c.b16 %v3189, %v3183
    %v3724 = vpack.c.b16 %v3196, %v3190
    %v3725 = vpack.c.b16 %v3197, %v3191
    %v3726 = vpack.c.b16 %v3198, %v3192
    %v3727 = vpack.c.b16 %v3199, %v3193
    %v3728 = vpack.c.b16 %v3200, %v3194
    %v3729 = vpack.c.b16 %v3201, %v3195
    %v3730 = vpack.c.b16 %v3208, %v3202
    %v3731 = vpack.c.b16 %v3209, %v3203
    %v3732 = vpack.c.b16 %v3210, %v3204
    %v3733 = vpack.c.b16 %v3211, %v3205
    %v3734 = vpack.c.b16 %v3212, %v3206
    %v3735 = vpack.c.b16 %v3213, %v3207
    %v3736 = vpack.c.b16 %v3220, %v3214
    %v3737 = vpack.c.b16 %v3221, %v3215
    %v3738 = vpack.c.b16 %v3222, %v3216
    %v3739 = vpack.c.b16 %v3223, %v3217
    %v3740 = vpack.c.b16 %v3224, %v3218
    %v3741 = vpack.c.b16 %v3225, %v3219
    %v3742 = vpack.c.b16 %v3232, %v3226
    %v3743 = vpack.c.b16 %v3233, %v3227
    %v3744 = vpack.c.b16 %v3234, %v3228
    %v3745 = vpack.c.b16 %v3235, %v3229
    %v3746 = vpack.c.b16 %v3236, %v3230
    %v3747 = vpack.c.b16 %v3237, %v3231
    %v3748 = vpack.c.b16 %v3244, %v3238
    %v3749 = vpack.c.b16 %v3245, %v3239
    %v3750 = vpack.c.b16 %v3246, %v3240
    %v3751 = vpack.c.b16 %v3247, %v3241
    %v3752 = vpack.c.b16 %v3248, %v3242
    %v3753 = vpack.c.b16 %v3249, %v3243
    %v3754 = vpack.c.b16 %v3256, %v3250
    %v3755 = vpack.c.b16 %v3257, %v3251
    %v3756 = vpack.c.b16 %v3258, %v3252
    %v3757 = vpack.c.b16 %v3259, %v3253
    %v3758 = vpack.c.b16 %v3260, %v3254
    %v3759 = vpack.c.b16 %v3261, %v3255
    %v3760 = vpack.c.b16 %v3268, %v3262
    %v3761 = vpack.c.b16 %v3269, %v3263
    %v3762 = vpack.c.b16 %v3270, %v3264
    %v3763 = vpack.c.b16 %v3271, %v3265
    %v3764 = vpack.c.b16 %v3272, %v3266
    %v3765 = vpack.c.b16 %v3273, %v3267
    %v3766 = vpack.c.b16 %v3280, %v3274
    %v3767 = vpack.c.b16 %v3281, %v3275
    %v3768 = vpack.c.b16 %v3282, %v3276
    %v3769 = vpack.c.b16 %v3283, %v3277
    %v3770 = vpack.c.b16 %v3284, %v3278
    %v3771 = vpack.c.b16 %v3285, %v3279
    %v3772 = vpack.c.b16 %v3292, %v3286
    %v3773 = vpack.c.b16 %v3293, %v3287
    %v3774 = vpack.c.b16 %v3294, %v3288
    %v3775 = vpack.c.b16 %v3295, %v3289
    %v3776 = vpack.c.b16 %v3296, %v3290
    %v3777 = vpack.c.b16 %v3297, %v3291
    %v3778 = vpack.c.b16 %v3304, %v3298
    %v3779 = vpack.c.b16 %v3305, %v3299
    %v3780 = vpack.c.b16 %v3306, %v3300
    %v3781 = vpack.c.b16 %v3307, %v3301
    %v3782 = vpack.c.b16 %v3308, %v3302
    %v3783 = vpack.c.b16 %v3309, %v3303
    %v3784 = vpack.c.b16 %v3316, %v3310
    %v3785 = vpack.c.b16 %v3317, %v3311
    %v3786 = vpack.c.b16 %v3318, %v3312
    %v3787 = vpack.c.b16 %v3319, %v3313
    %v3788 = vpack.c.b16 %v3320, %v3314
    %v3789 = vpack.c.b16 %v3321, %v3315
    %v3790 = vpack.c.b16 %v3328, %v3322
    %v3791 = vpack.c.b16 %v3329, %v3323
    %v3792 = vpack.c.b16 %v3330, %v3324
    %v3793 = vpack.c.b16 %v3331, %v3325
    %v3794 = vpack.c.b16 %v3332, %v3326
    %v3795 = vpack.c.b16 %v3333, %v3327
    %v3796 = vpack.c.b16 %v3340, %v3334
    %v3797 = vpack.c.b16 %v3341, %v3335
    %v3798 = vpack.c.b16 %v3342, %v3336
    %v3799 = vpack.c.b16 %v3343, %v3337
    %v3800 = vpack.c.b16 %v3344, %v3338
    %v3801 = vpack.c.b16 %v3345, %v3339
    %v3802 = vpack.c.b16 %v3352, %v3346
    %v3803 = vpack.c.b16 %v3353, %v3347
    %v3804 = vpack.c.b16 %v3354, %v3348
    %v3805 = vpack.c.b16 %v3355, %v3349
    %v3806 = vpack.c.b16 %v3356, %v3350
    %v3807 = vpack.c.b16 %v3357, %v3351
    %v3808 = vpack.c.b16 %v3364, %v3358
    %v3809 = vpack.c.b16 %v3365, %v3359
    %v3810 = vpack.c.b16 %v3366, %v3360
    %v3811 = vpack.c.b16 %v3367, %v3361
    %v3812 = vpack.c.b16 %v3368, %v3362
    %v3813 = vpack.c.b16 %v3369, %v3363
    %v3814 = vpack.c.b16 %v3376, %v3370
    %v3815 = vpack.c.b16 %v3377, %v3371
    %v3816 = vpack.c.b16 %v3378, %v3372
    %v3817 = vpack.c.b16 %v3379, %v3373
    %v3818 = vpack.c.b16 %v3380, %v3374
    %v3819 = vpack.c.b16 %v3381, %v3375
    %v3820 = vpack.c.b16 %v3388, %v3382
    %v3821 = vpack.c.b16 %v3389, %v3383
    %v3822 = vpack.c.b16 %v3390, %v3384
    %v3823 = vpack.c.b16 %v3391, %v3385
    %v3824 = vpack.c.b16 %v3392, %v3386
    %v3825 = vpack.c.b16 %v3393, %v3387
    %v3826 = vpack.c.b16 %v3400, %v3394
    %v3827 = vpack.c.b16 %v3401, %v3395
    %v3828 = vpack.c.b16 %v3402, %v3396
    %v3829 = vpack.c.b16 %v3403, %v3397
    %v3830 = vpack.c.b16 %v3404, %v3398
    %v3831 = vpack.c.b16 %v3405, %v3399
    %v3832 = vpack.c.b16 %v3412, %v3406
    %v3833 = vpack.c.b16 %v3413, %v3407
    %v3834 = vpack.c.b16 %v3414, %v3408
    %v3835 = vpack.c.b16 %v3415, %v3409
    %v3836 = vpack.c.b16 %v3416, %v3410
    %v3837 = vpack.c.b16 %v3417, %v3411
    %v3838 = vpack.c.b16 %v3424, %v3418
    %v3839 = vpack.c.b16 %v3425, %v3419
    %v3840 = vpack.c.b16 %v3426, %v3420
    %v3841 = vpack.c.b16 %v3427, %v3421
    %v3842 = vpack.c.b16 %v3428, %v3422
    %v3843 = vpack.c.b16 %v3429, %v3423
    %v3844 = vpack.c.b16 %v3436, %v3430
    %v3845 = vpack.c.b16 %v3437, %v3431
    %v3846 = vpack.c.b16 %v3438, %v3432
    %v3847 = vpack.c.b16 %v3439, %v3433
    %v3848 = vpack.c.b16 %v3440, %v3434
    %v3849 = vpack.c.b16 %v3441, %v3435
    %v3850 = vpack.c.b16 %v3448, %v3442
    %v3851 = vpack.c.b16 %v3449, %v3443
    %v3852 = vpack.c.b16 %v3450, %v3444
    %v3853 = vpack.c.b16 %v3451, %v3445
    %v3854 = vpack.c.b16 %v3452, %v3446
    %v3855 = vpack.c.b16 %v3453, %v3447
    %v3856 = vpack.c.b16 %v3460, %v3454
    %v3857 = vpack.c.b16 %v3461, %v3455
    %v3858 = vpack.c.b16 %v3462, %v3456
    %v3859 = vpack.c.b16 %v3463, %v3457
    %v3860 = vpack.c.b16 %v3464, %v3458
    %v3861 = vpack.c.b16 %v3465, %v3459
    %v3862 = vpack.c.b16 %v3472, %v3466
    %v3863 = vpack.c.b16 %v3473, %v3467
    %v3864 = vpack.c.b16 %v3474, %v3468
    %v3865 = vpack.c.b16 %v3475, %v3469
    %v3866 = vpack.c.b16 %v3476, %v3470
    %v3867 = vpack.c.b16 %v3477, %v3471
    %v3868 = vpack.c.b16 %v3484, %v3478
    %v3869 = vpack.c.b16 %v3485, %v3479
    %v3870 = vpack.c.b16 %v3486, %v3480
    %v3871 = vpack.c.b16 %v3487, %v3481
    %v3872 = vpack.c.b16 %v3488, %v3482
    %v3873 = vpack.c.b16 %v3489, %v3483
    %v3874 = vpack.c.b16 %v3496, %v3490
    %v3875 = vpack.c.b16 %v3497, %v3491
    %v3876 = vpack.c.b16 %v3498, %v3492
    %v3877 = vpack.c.b16 %v3499, %v3493
    %v3878 = vpack.c.b16 %v3500, %v3494
    %v3879 = vpack.c.b16 %v3501, %v3495
    %v3880 = vpack.c.b16 %v3508, %v3502
    %v3881 = vpack.c.b16 %v3509, %v3503
    %v3882 = vpack.c.b16 %v3510, %v3504
    %v3883 = vpack.c.b16 %v3511, %v3505
    %v3884 = vpack.c.b16 %v3512, %v3506
    %v3885 = vpack.c.b16 %v3513, %v3507
    %v3886 = vpack.c.b16 %v3520, %v3514
    %v3887 = vpack.c.b16 %v3521, %v3515
    %v3888 = vpack.c.b16 %v3522, %v3516
    %v3889 = vpack.c.b16 %v3523, %v3517
    %v3890 = vpack.c.b16 %v3524, %v3518
    %v3891 = vpack.c.b16 %v3525, %v3519
    %v3892 = vpack.c.b16 %v3532, %v3526
    %v3893 = vpack.c.b16 %v3533, %v3527
    %v3894 = vpack.c.b16 %v3534, %v3528
    %v3895 = vpack.c.b16 %v3535, %v3529
    %v3896 = vpack.c.b16 %v3536, %v3530
    %v3897 = vpack.c.b16 %v3537, %v3531
    %v3898 = vpack.c.b16 %v3544, %v3538
    %v3899 = vpack.c.b16 %v3545, %v3539
    %v3900 = vpack.c.b16 %v3546, %v3540
    %v3901 = vpack.c.b16 %v3547, %v3541
    %v3902 = vpack.c.b16 %v3548, %v3542
    %v3903 = vpack.c.b16 %v3549, %v3543
    %v3904 = vpack.c.b16 %v3556, %v3550
    %v3905 = vpack.c.b16 %v3557, %v3551
    %v3906 = vpack.c.b16 %v3558, %v3552
    %v3907 = vpack.c.b16 %v3559, %v3553
    %v3908 = vpack.c.b16 %v3560, %v3554
    %v3909 = vpack.c.b16 %v3561, %v3555
    %v3910 = vpack.c.b16 %v3568, %v3562
    %v3911 = vpack.c.b16 %v3569, %v3563
    %v3912 = vpack.c.b16 %v3570, %v3564
    %v3913 = vpack.c.b16 %v3571, %v3565
    %v3914 = vpack.c.b16 %v3572, %v3566
    %v3915 = vpack.c.b16 %v3573, %v3567
    %v3916 = vpack.c.b16 %v3580, %v3574
    %v3917 = vpack.c.b16 %v3581, %v3575
    %v3918 = vpack.c.b16 %v3582, %v3576
    %v3919 = vpack.c.b16 %v3583, %v3577
    %v3920 = vpack.c.b16 %v3584, %v3578
    %v3921 = vpack.c.b16 %v3585, %v3579
    %v3922 = vpack.c.b16 %v3592, %v3586
    %v3923 = vpack.c.b16 %v3593, %v3587
    %v3924 = vpack.c.b16 %v3594, %v3588
    %v3925 = vpack.c.b16 %v3595, %v3589
    %v3926 = vpack.c.b16 %v3596, %v3590
    %v3927 = vpack.c.b16 %v3597, %v3591
    %v3928 = vpack.c.b16 %v3604, %v3598
    %v3929 = vpack.c.b16 %v3605, %v3599
    %v3930 = vpack.c.b16 %v3606, %v3600
    %v3931 = vpack.c.b16 %v3607, %v3601
    %v3932 = vpack.c.b16 %v3608, %v3602
    %v3933 = vpack.c.b16 %v3609, %v3603
    %v3934 = vpack.c.b16 %v3616, %v3610
    %v3935 = vpack.c.b16 %v3617, %v3611
    %v3936 = vpack.c.b16 %v3618, %v3612
    %v3937 = vpack.c.b16 %v3619, %v3613
    %v3938 = vpack.c.b16 %v3620, %v3614
    %v3939 = vpack.c.b16 %v3621, %v3615
    %v3940 = vpack.c.b16 %v3628, %v3622
    %v3941 = vpack.c.b16 %v3629, %v3623
    %v3942 = vpack.c.b16 %v3630, %v3624
    %v3943 = vpack.c.b16 %v3631, %v3625
    %v3944 = vpack.c.b16 %v3632, %v3626
    %v3945 = vpack.c.b16 %v3633, %v3627
    %v3946 = vpack.c.b16 %v3640, %v3634
    %v3947 = vpack.c.b16 %v3641, %v3635
    %v3948 = vpack.c.b16 %v3642, %v3636
    %v3949 = vpack.c.b16 %v3643, %v3637
    %v3950 = vpack.c.b16 %v3644, %v3638
    %v3951 = vpack.c.b16 %v3645, %v3639
    %v3952 = vpack.c.b16 %v3652, %v3646
    %v3953 = vpack.c.b16 %v3653, %v3647
    %v3954 = vpack.c.b16 %v3654, %v3648
    %v3955 = vpack.c.b16 %v3655, %v3649
    %v3956 = vpack.c.b16 %v3656, %v3650
    %v3957 = vpack.c.b16 %v3657, %v3651
    %v3958 = vpack.c.b16 %v3664, %v3658
    %v3959 = vpack.c.b16 %v3665, %v3659
    %v3960 = vpack.c.b16 %v3666, %v3660
    %v3961 = vpack.c.b16 %v3667, %v3661
    %v3962 = vpack.c.b16 %v3668, %v3662
    %v3963 = vpack.c.b16 %v3669, %v3663
    %v3964 = vpack.c.b16 %v3676, %v3670
    %v3965 = vpack.c.b16 %v3677, %v3671
    %v3966 = vpack.c.b16 %v3678, %v3672
    %v3967 = vpack.c.b16 %v3679, %v3673
    %v3968 = vpack.c.b16 %v3680, %v3674
    %v3969 = vpack.c.b16 %v3681, %v3675
    %4258 = vmatprep.subr.bf16.mxu0 %v3683
    %4259 = vmatpush1.bf16.msra.mxu0 %v3682
    %4260 = vmatprep.subr.bf16.mxu0 %v3689
    %4261 = vmatpush1.bf16.msra.mxu0 %v3688
    %4262 = vmatprep.subr.bf16.mxu0 %v3695
    %4263 = vmatpush1.bf16.msra.mxu0 %v3694
    %4264 = vmatprep.subr.bf16.mxu0 %v3701
    %4265 = vmatpush1.bf16.msra.mxu0 %v3700
    %4266 = vmatprep.subr.bf16.mxu0 %v3707
    %4267 = vmatpush1.bf16.msra.mxu0 %v3706
    %4268 = vmatprep.subr.bf16.mxu0 %v3713
    %4269 = vmatpush1.bf16.msra.mxu0 %v3712
    %4270 = vmatprep.subr.bf16.mxu0 %v3719
    %4271 = vmatpush1.bf16.msra.mxu0 %v3718
    %4272 = vmatprep.subr.bf16.mxu0 %v3725
    %4273 = vmatpush1.bf16.msra.mxu0 %v3724
    %4274 = vmatprep.subr.bf16.mxu0 %v3731
    %4275 = vmatpush1.bf16.msra.mxu0 %v3730
    %4276 = vmatprep.subr.bf16.mxu0 %v3737
    %4277 = vmatpush1.bf16.msra.mxu0 %v3736
    %4278 = vmatprep.subr.bf16.mxu0 %v3743
    %4279 = vmatpush1.bf16.msra.mxu0 %v3742
    %4280 = vmatprep.subr.bf16.mxu0 %v3749
    %4281 = vmatpush1.bf16.msra.mxu0 %v3748
    %4282 = vmatprep.subr.bf16.mxu0 %v3755
    %4283 = vmatpush1.bf16.msra.mxu0 %v3754
    %4284 = vmatprep.subr.bf16.mxu0 %v3761
    %4285 = vmatpush1.bf16.msra.mxu0 %v3760
    %4286 = vmatprep.subr.bf16.mxu0 %v3767
    %4287 = vmatpush1.bf16.msra.mxu0 %v3766
    %4288 = vmatprep.subr.bf16.mxu0 %v3773
    %4289 = vmatpush1.bf16.msra.mxu0 %v3772
    %4290 = vmatprep.mubr.bf16.mxu0 %v214
    %4291 = vmatmul.mubr.bf16.gmra.mrb[0].mxu0 %v213
    %v4292 = vpop.f32.mrb[0].mxu0
    %v4293 = vadd.f32 %v2791, %v4292
    %v4294 = vpop.f32.mrb[0].mxu0
    %v4295 = vadd.f32 %v2795, %v4294
    %v4296 = vpop.f32.mrb[0].mxu0
    %v4297 = vadd.f32 %v2791, %v4296
    %v4298 = vpop.f32.mrb[0].mxu0
    %v4299 = vadd.f32 %v2795, %v4298
    %4300 = vmatprep.mubr.bf16.mxu0 %v220
    %4301 = vmatmul.mubr.bf16.gmra.mrb[0].mxu0 %v219
    %v4302 = vpop.f32.mrb[0].mxu0
    %v4303 = vadd.f32 %v2791, %v4302
    %v4304 = vpop.f32.mrb[0].mxu0
    %v4305 = vadd.f32 %v2795, %v4304
    %v4306 = vpop.f32.mrb[0].mxu0
    %v4307 = vadd.f32 %v2791, %v4306
    %v4308 = vpop.f32.mrb[0].mxu0
    %v4309 = vadd.f32 %v2795, %v4308
    %4310 = vdwg.mxu0
    %4311 = vmatprep.subr.bf16.mxu0 %v3779
    %4312 = vmatpush1.bf16.msra.mxu0 %v3778
    %4313 = vmatprep.subr.bf16.mxu0 %v3785
    %4314 = vmatpush1.bf16.msra.mxu0 %v3784
    %4315 = vmatprep.subr.bf16.mxu0 %v3791
    %4316 = vmatpush1.bf16.msra.mxu0 %v3790
    %4317 = vmatprep.subr.bf16.mxu0 %v3797
    %4318 = vmatpush1.bf16.msra.mxu0 %v3796
    %4319 = vmatprep.subr.bf16.mxu0 %v3803
    %4320 = vmatpush1.bf16.msra.mxu0 %v3802
    %4321 = vmatprep.subr.bf16.mxu0 %v3809
    %4322 = vmatpush1.bf16.msra.mxu0 %v3808
    %4323 = vmatprep.subr.bf16.mxu0 %v3815
    %4324 = vmatpush1.bf16.msra.mxu0 %v3814
    %4325 = vmatprep.subr.bf16.mxu0 %v3821
    %4326 = vmatpush1.bf16.msra.mxu0 %v3820
    %4327 = vmatprep.subr.bf16.mxu0 %v3827
    %4328 = vmatpush1.bf16.msra.mxu0 %v3826
    %4329 = vmatprep.subr.bf16.mxu0 %v3833
    %4330 = vmatpush1.bf16.msra.mxu0 %v3832
    %4331 = vmatprep.subr.bf16.mxu0 %v3839
    %4332 = vmatpush1.bf16.msra.mxu0 %v3838
    %4333 = vmatprep.subr.bf16.mxu0 %v3845
    %4334 = vmatpush1.bf16.msra.mxu0 %v3844
    %4335 = vmatprep.subr.bf16.mxu0 %v3851
    %4336 = vmatpush1.bf16.msra.mxu0 %v3850
    %4337 = vmatprep.subr.bf16.mxu0 %v3857
    %4338 = vmatpush1.bf16.msra.mxu0 %v3856
    %4339 = vmatprep.subr.bf16.mxu0 %v3863
    %4340 = vmatpush1.bf16.msra.mxu0 %v3862
    %4341 = vmatprep.subr.bf16.mxu0 %v3869
    %4342 = vmatpush1.bf16.msra.mxu0 %v3868
    %4343 = vmatprep.mubr.bf16.mxu0 %v216
    %4344 = vmatmul.mubr.bf16.gmra.mrb[0].mxu0 %v215
    %v4345 = vpop.f32.mrb[0].mxu0
    %v4346 = vadd.f32 %v4293, %v4345
    %v4347 = vpop.f32.mrb[0].mxu0
    %v4348 = vadd.f32 %v4295, %v4347
    %v4349 = vpop.f32.mrb[0].mxu0
    %v4350 = vadd.f32 %v4297, %v4349
    %v4351 = vpop.f32.mrb[0].mxu0
    %v4352 = vadd.f32 %v4299, %v4351
    %4353 = vmatprep.mubr.bf16.mxu0 %v222
    %4354 = vmatmul.mubr.bf16.gmra.mrb[0].mxu0 %v221
    %v4355 = vpop.f32.mrb[0].mxu0
    %v4356 = vadd.f32 %v4303, %v4355
    %v4357 = vpop.f32.mrb[0].mxu0
    %v4358 = vadd.f32 %v4305, %v4357
    %v4359 = vpop.f32.mrb[0].mxu0
    %v4360 = vadd.f32 %v4307, %v4359
    %v4361 = vpop.f32.mrb[0].mxu0
    %v4362 = vadd.f32 %v4309, %v4361
    %4363 = vdwg.mxu0
    %4364 = vmatprep.subr.bf16.mxu0 %v3875
    %4365 = vmatpush1.bf16.msra.mxu0 %v3874
    %4366 = vmatprep.subr.bf16.mxu0 %v3881
    %4367 = vmatpush1.bf16.msra.mxu0 %v3880
    %4368 = vmatprep.subr.bf16.mxu0 %v3887
    %4369 = vmatpush1.bf16.msra.mxu0 %v3886
    %4370 = vmatprep.subr.bf16.mxu0 %v3893
    %4371 = vmatpush1.bf16.msra.mxu0 %v3892
    %4372 = vmatprep.subr.bf16.mxu0 %v3899
    %4373 = vmatpush1.bf16.msra.mxu0 %v3898
    %4374 = vmatprep.subr.bf16.mxu0 %v3905
    %4375 = vmatpush1.bf16.msra.mxu0 %v3904
    %4376 = vmatprep.subr.bf16.mxu0 %v3911
    %4377 = vmatpush1.bf16.msra.mxu0 %v3910
    %4378 = vmatprep.subr.bf16.mxu0 %v3917
    %4379 = vmatpush1.bf16.msra.mxu0 %v3916
    %4380 = vmatprep.subr.bf16.mxu0 %v3923
    %4381 = vmatpush1.bf16.msra.mxu0 %v3922
    %4382 = vmatprep.subr.bf16.mxu0 %v3929
    %4383 = vmatpush1.bf16.msra.mxu0 %v3928
    %4384 = vmatprep.subr.bf16.mxu0 %v3935
    %4385 = vmatpush1.bf16.msra.mxu0 %v3934
    %4386 = vmatprep.subr.bf16.mxu0 %v3941
    %4387 = vmatpush1.bf16.msra.mxu0 %v3940
    %4388 = vmatprep.subr.bf16.mxu0 %v3947
    %4389 = vmatpush1.bf16.msra.mxu0 %v3946
    %4390 = vmatprep.subr.bf16.mxu0 %v3953
    %4391 = vmatpush1.bf16.msra.mxu0 %v3952
    %4392 = vmatprep.subr.bf16.mxu0 %v3959
    %4393 = vmatpush1.bf16.msra.mxu0 %v3958
    %4394 = vmatprep.subr.bf16.mxu0 %v3965
    %4395 = vmatpush1.bf16.msra.mxu0 %v3964
    %4396 = vmatprep.mubr.bf16.mxu0 %v218
    %4397 = vmatmul.mubr.bf16.gmra.mrb[0].mxu0 %v217
    %v4398 = vpop.f32.mrb[0].mxu0
    %v4399 = vadd.f32 %v4346, %v4398
    %v4400 = vpop.f32.mrb[0].mxu0
    %v4401 = vadd.f32 %v4348, %v4400
    %v4402 = vpop.f32.mrb[0].mxu0
    %v4403 = vadd.f32 %v4350, %v4402
    %v4404 = vpop.f32.mrb[0].mxu0
    %v4405 = vadd.f32 %v4352, %v4404
    %4406 = vmatprep.mubr.bf16.mxu0 %v224
    %4407 = vmatmul.mubr.bf16.gmra.mrb[0].mxu0 %v223
    %v4408 = vpop.f32.mrb[0].mxu0
    %v4409 = vadd.f32 %v4356, %v4408
    %v4410 = vpop.f32.mrb[0].mxu0
    %v4411 = vadd.f32 %v4358, %v4410
    %v4412 = vpop.f32.mrb[0].mxu0
    %v4413 = vadd.f32 %v4360, %v4412
    %v4414 = vpop.f32.mrb[0].mxu0
    %v4415 = vadd.f32 %v4362, %v4414
    %4416 = vdwg.mxu0
    %4417 = vmatprep.subr.bf16.mxu0 %v3685
    %4418 = vmatpush1.bf16.msra.mxu0 %v3684
    %4419 = vmatprep.subr.bf16.mxu0 %v3691
    %4420 = vmatpush1.bf16.msra.mxu0 %v3690
    %4421 = vmatprep.subr.bf16.mxu0 %v3697
    %4422 = vmatpush1.bf16.msra.mxu0 %v3696
    %4423 = vmatprep.subr.bf16.mxu0 %v3703
    %4424 = vmatpush1.bf16.msra.mxu0 %v3702
    %4425 = vmatprep.subr.bf16.mxu0 %v3709
    %4426 = vmatpush1.bf16.msra.mxu0 %v3708
    %4427 = vmatprep.subr.bf16.mxu0 %v3715
    %4428 = vmatpush1.bf16.msra.mxu0 %v3714
    %4429 = vmatprep.subr.bf16.mxu0 %v3721
    %4430 = vmatpush1.bf16.msra.mxu0 %v3720
    %4431 = vmatprep.subr.bf16.mxu0 %v3727
    %4432 = vmatpush1.bf16.msra.mxu0 %v3726
    %4433 = vmatprep.subr.bf16.mxu0 %v3733
    %4434 = vmatpush1.bf16.msra.mxu0 %v3732
    %4435 = vmatprep.subr.bf16.mxu0 %v3739
    %4436 = vmatpush1.bf16.msra.mxu0 %v3738
    %4437 = vmatprep.subr.bf16.mxu0 %v3745
    %4438 = vmatpush1.bf16.msra.mxu0 %v3744
    %4439 = vmatprep.subr.bf16.mxu0 %v3751
    %4440 = vmatpush1.bf16.msra.mxu0 %v3750
    %4441 = vmatprep.subr.bf16.mxu0 %v3757
    %4442 = vmatpush1.bf16.msra.mxu0 %v3756
    %4443 = vmatprep.subr.bf16.mxu0 %v3763
    %4444 = vmatpush1.bf16.msra.mxu0 %v3762
    %4445 = vmatprep.subr.bf16.mxu0 %v3769
    %4446 = vmatpush1.bf16.msra.mxu0 %v3768
    %4447 = vmatprep.subr.bf16.mxu0 %v3775
    %4448 = vmatpush1.bf16.msra.mxu0 %v3774
    %4449 = vmatprep.mubr.bf16.mxu0 %v214
    %4450 = vmatmul.mubr.bf16.gmra.mrb[0].mxu0 %v213
    %v4451 = vpop.f32.mrb[0].mxu0
    %v4452 = vadd.f32 %v2799, %v4451
    %v4453 = vpop.f32.mrb[0].mxu0
    %v4454 = vadd.f32 %v2803, %v4453
    %v4455 = vpop.f32.mrb[0].mxu0
    %v4456 = vadd.f32 %v2799, %v4455
    %v4457 = vpop.f32.mrb[0].mxu0
    %v4458 = vadd.f32 %v2803, %v4457
    %4459 = vmatprep.mubr.bf16.mxu0 %v220
    %4460 = vmatmul.mubr.bf16.gmra.mrb[0].mxu0 %v219
    %v4461 = vpop.f32.mrb[0].mxu0
    %v4462 = vadd.f32 %v2799, %v4461
    %v4463 = vpop.f32.mrb[0].mxu0
    %v4464 = vadd.f32 %v2803, %v4463
    %v4465 = vpop.f32.mrb[0].mxu0
    %v4466 = vadd.f32 %v2799, %v4465
    %v4467 = vpop.f32.mrb[0].mxu0
    %v4468 = vadd.f32 %v2803, %v4467
    %4469 = vdwg.mxu0
    %4470 = vmatprep.subr.bf16.mxu0 %v3781
    %4471 = vmatpush1.bf16.msra.mxu0 %v3780
    %4472 = vmatprep.subr.bf16.mxu0 %v3787
    %4473 = vmatpush1.bf16.msra.mxu0 %v3786
    %4474 = vmatprep.subr.bf16.mxu0 %v3793
    %4475 = vmatpush1.bf16.msra.mxu0 %v3792
    %4476 = vmatprep.subr.bf16.mxu0 %v3799
    %4477 = vmatpush1.bf16.msra.mxu0 %v3798
    %4478 = vmatprep.subr.bf16.mxu0 %v3805
    %4479 = vmatpush1.bf16.msra.mxu0 %v3804
    %4480 = vmatprep.subr.bf16.mxu0 %v3811
    %4481 = vmatpush1.bf16.msra.mxu0 %v3810
    %4482 = vmatprep.subr.bf16.mxu0 %v3817
    %4483 = vmatpush1.bf16.msra.mxu0 %v3816
    %4484 = vmatprep.subr.bf16.mxu0 %v3823
    %4485 = vmatpush1.bf16.msra.mxu0 %v3822
    %4486 = vmatprep.subr.bf16.mxu0 %v3829
    %4487 = vmatpush1.bf16.msra.mxu0 %v3828
    %4488 = vmatprep.subr.bf16.mxu0 %v3835
    %4489 = vmatpush1.bf16.msra.mxu0 %v3834
    %4490 = vmatprep.subr.bf16.mxu0 %v3841
    %4491 = vmatpush1.bf16.msra.mxu0 %v3840
    %4492 = vmatprep.subr.bf16.mxu0 %v3847
    %4493 = vmatpush1.bf16.msra.mxu0 %v3846
    %4494 = vmatprep.subr.bf16.mxu0 %v3853
    %4495 = vmatpush1.bf16.msra.mxu0 %v3852
    %4496 = vmatprep.subr.bf16.mxu0 %v3859
    %4497 = vmatpush1.bf16.msra.mxu0 %v3858
    %4498 = vmatprep.subr.bf16.mxu0 %v3865
    %4499 = vmatpush1.bf16.msra.mxu0 %v3864
    %4500 = vmatprep.subr.bf16.mxu0 %v3871
    %4501 = vmatpush1.bf16.msra.mxu0 %v3870
    %4502 = vmatprep.mubr.bf16.mxu0 %v216
    %4503 = vmatmul.mubr.bf16.gmra.mrb[0].mxu0 %v215
    %v4504 = vpop.f32.mrb[0].mxu0
    %v4505 = vadd.f32 %v4452, %v4504
    %v4506 = vpop.f32.mrb[0].mxu0
    %v4507 = vadd.f32 %v4454, %v4506
    %v4508 = vpop.f32.mrb[0].mxu0
    %v4509 = vadd.f32 %v4456, %v4508
    %v4510 = vpop.f32.mrb[0].mxu0
    %v4511 = vadd.f32 %v4458, %v4510
    %4512 = vmatprep.mubr.bf16.mxu0 %v222
    %4513 = vmatmul.mubr.bf16.gmra.mrb[0].mxu0 %v221
    %v4514 = vpop.f32.mrb[0].mxu0
    %v4515 = vadd.f32 %v4462, %v4514
    %v4516 = vpop.f32.mrb[0].mxu0
    %v4517 = vadd.f32 %v4464, %v4516
    %v4518 = vpop.f32.mrb[0].mxu0
    %v4519 = vadd.f32 %v4466, %v4518
    %v4520 = vpop.f32.mrb[0].mxu0
    %v4521 = vadd.f32 %v4468, %v4520
    %4522 = vdwg.mxu0
    %4523 = vmatprep.subr.bf16.mxu0 %v3877
    %4524 = vmatpush1.bf16.msra.mxu0 %v3876
    %4525 = vmatprep.subr.bf16.mxu0 %v3883
    %4526 = vmatpush1.bf16.msra.mxu0 %v3882
    %4527 = vmatprep.subr.bf16.mxu0 %v3889
    %4528 = vmatpush1.bf16.msra.mxu0 %v3888
    %4529 = vmatprep.subr.bf16.mxu0 %v3895
    %4530 = vmatpush1.bf16.msra.mxu0 %v3894
    %4531 = vmatprep.subr.bf16.mxu0 %v3901
    %4532 = vmatpush1.bf16.msra.mxu0 %v3900
    %4533 = vmatprep.subr.bf16.mxu0 %v3907
    %4534 = vmatpush1.bf16.msra.mxu0 %v3906
    %4535 = vmatprep.subr.bf16.mxu0 %v3913
    %4536 = vmatpush1.bf16.msra.mxu0 %v3912
    %4537 = vmatprep.subr.bf16.mxu0 %v3919
    %4538 = vmatpush1.bf16.msra.mxu0 %v3918
    %4539 = vmatprep.subr.bf16.mxu0 %v3925
    %4540 = vmatpush1.bf16.msra.mxu0 %v3924
    %4541 = vmatprep.subr.bf16.mxu0 %v3931
    %4542 = vmatpush1.bf16.msra.mxu0 %v3930
    %4543 = vmatprep.subr.bf16.mxu0 %v3937
    %4544 = vmatpush1.bf16.msra.mxu0 %v3936
    %4545 = vmatprep.subr.bf16.mxu0 %v3943
    %4546 = vmatpush1.bf16.msra.mxu0 %v3942
    %4547 = vmatprep.subr.bf16.mxu0 %v3949
    %4548 = vmatpush1.bf16.msra.mxu0 %v3948
    %4549 = vmatprep.subr.bf16.mxu0 %v3955
    %4550 = vmatpush1.bf16.msra.mxu0 %v3954
    %4551 = vmatprep.subr.bf16.mxu0 %v3961
    %4552 = vmatpush1.bf16.msra.mxu0 %v3960
    %4553 = vmatprep.subr.bf16.mxu0 %v3967
    %4554 = vmatpush1.bf16.msra.mxu0 %v3966
    %4555 = vmatprep.mubr.bf16.mxu0 %v218
    %4556 = vmatmul.mubr.bf16.gmra.mrb[0].mxu0 %v217
    %v4557 = vpop.f32.mrb[0].mxu0
    %v4558 = vadd.f32 %v4505, %v4557
    %v4559 = vpop.f32.mrb[0].mxu0
    %v4560 = vadd.f32 %v4507, %v4559
    %v4561 = vpop.f32.mrb[0].mxu0
    %v4562 = vadd.f32 %v4509, %v4561
    %v4563 = vpop.f32.mrb[0].mxu0
    %v4564 = vadd.f32 %v4511, %v4563
    %4565 = vmatprep.mubr.bf16.mxu0 %v224
    %4566 = vmatmul.mubr.bf16.gmra.mrb[0].mxu0 %v223
    %v4567 = vpop.f32.mrb[0].mxu0
    %v4568 = vadd.f32 %v4515, %v4567
    %v4569 = vpop.f32.mrb[0].mxu0
    %v4570 = vadd.f32 %v4517, %v4569
    %v4571 = vpop.f32.mrb[0].mxu0
    %v4572 = vadd.f32 %v4519, %v4571
    %v4573 = vpop.f32.mrb[0].mxu0
    %v4574 = vadd.f32 %v4521, %v4573
    %4575 = vdwg.mxu0
    %4576 = vmatprep.subr.bf16.mxu0 %v3687
    %4577 = vmatpush1.bf16.msra.mxu0 %v3686
    %4578 = vmatprep.subr.bf16.mxu0 %v3693
    %4579 = vmatpush1.bf16.msra.mxu0 %v3692
    %4580 = vmatprep.subr.bf16.mxu0 %v3699
    %4581 = vmatpush1.bf16.msra.mxu0 %v3698
    %4582 = vmatprep.subr.bf16.mxu0 %v3705
    %4583 = vmatpush1.bf16.msra.mxu0 %v3704
    %4584 = vmatprep.subr.bf16.mxu0 %v3711
    %4585 = vmatpush1.bf16.msra.mxu0 %v3710
    %4586 = vmatprep.subr.bf16.mxu0 %v3717
    %4587 = vmatpush1.bf16.msra.mxu0 %v3716
    %4588 = vmatprep.subr.bf16.mxu0 %v3723
    %4589 = vmatpush1.bf16.msra.mxu0 %v3722
    %4590 = vmatprep.subr.bf16.mxu0 %v3729
    %4591 = vmatpush1.bf16.msra.mxu0 %v3728
    %4592 = vmatprep.subr.bf16.mxu0 %v3735
    %4593 = vmatpush1.bf16.msra.mxu0 %v3734
    %4594 = vmatprep.subr.bf16.mxu0 %v3741
    %4595 = vmatpush1.bf16.msra.mxu0 %v3740
    %4596 = vmatprep.subr.bf16.mxu0 %v3747
    %4597 = vmatpush1.bf16.msra.mxu0 %v3746
    %4598 = vmatprep.subr.bf16.mxu0 %v3753
    %4599 = vmatpush1.bf16.msra.mxu0 %v3752
    %4600 = vmatprep.subr.bf16.mxu0 %v3759
    %4601 = vmatpush1.bf16.msra.mxu0 %v3758
    %4602 = vmatprep.subr.bf16.mxu0 %v3765
    %4603 = vmatpush1.bf16.msra.mxu0 %v3764
    %4604 = vmatprep.subr.bf16.mxu0 %v3771
    %4605 = vmatpush1.bf16.msra.mxu0 %v3770
    %4606 = vmatprep.subr.bf16.mxu0 %v3777
    %4607 = vmatpush1.bf16.msra.mxu0 %v3776
    %4608 = vmatprep.mubr.bf16.mxu0 %v214
    %4609 = vmatmul.mubr.bf16.gmra.mrb[0].mxu0 %v213
    %v4610 = vpop.f32.mrb[0].mxu0
    %v4611 = vadd.f32 %v2807, %v4610
    %v4612 = vpop.f32.mrb[0].mxu0
    %v4613 = vadd.f32 %v2811, %v4612
    %v4614 = vpop.f32.mrb[0].mxu0
    %v4615 = vadd.f32 %v2807, %v4614
    %v4616 = vpop.f32.mrb[0].mxu0
    %v4617 = vadd.f32 %v2811, %v4616
    %4618 = vmatprep.mubr.bf16.mxu0 %v220
    %4619 = vmatmul.mubr.bf16.gmra.mrb[0].mxu0 %v219
    %v4620 = vpop.f32.mrb[0].mxu0
    %v4621 = vadd.f32 %v2807, %v4620
    %v4622 = vpop.f32.mrb[0].mxu0
    %v4623 = vadd.f32 %v2811, %v4622
    %v4624 = vpop.f32.mrb[0].mxu0
    %v4625 = vadd.f32 %v2807, %v4624
    %v4626 = vpop.f32.mrb[0].mxu0
    %v4627 = vadd.f32 %v2811, %v4626
    %4628 = vdwg.mxu0
    %4629 = vmatprep.subr.bf16.mxu0 %v3783
    %4630 = vmatpush1.bf16.msra.mxu0 %v3782
    %4631 = vmatprep.subr.bf16.mxu0 %v3789
    %4632 = vmatpush1.bf16.msra.mxu0 %v3788
    %4633 = vmatprep.subr.bf16.mxu0 %v3795
    %4634 = vmatpush1.bf16.msra.mxu0 %v3794
    %4635 = vmatprep.subr.bf16.mxu0 %v3801
    %4636 = vmatpush1.bf16.msra.mxu0 %v3800
    %4637 = vmatprep.subr.bf16.mxu0 %v3807
    %4638 = vmatpush1.bf16.msra.mxu0 %v3806
    %4639 = vmatprep.subr.bf16.mxu0 %v3813
    %4640 = vmatpush1.bf16.msra.mxu0 %v3812
    %4641 = vmatprep.subr.bf16.mxu0 %v3819
    %4642 = vmatpush1.bf16.msra.mxu0 %v3818
    %4643 = vmatprep.subr.bf16.mxu0 %v3825
    %4644 = vmatpush1.bf16.msra.mxu0 %v3824
    %4645 = vmatprep.subr.bf16.mxu0 %v3831
    %4646 = vmatpush1.bf16.msra.mxu0 %v3830
    %4647 = vmatprep.subr.bf16.mxu0 %v3837
    %4648 = vmatpush1.bf16.msra.mxu0 %v3836
    %4649 = vmatprep.subr.bf16.mxu0 %v3843
    %4650 = vmatpush1.bf16.msra.mxu0 %v3842
    %4651 = vmatprep.subr.bf16.mxu0 %v3849
    %4652 = vmatpush1.bf16.msra.mxu0 %v3848
    %4653 = vmatprep.subr.bf16.mxu0 %v3855
    %4654 = vmatpush1.bf16.msra.mxu0 %v3854
    %4655 = vmatprep.subr.bf16.mxu0 %v3861
    %4656 = vmatpush1.bf16.msra.mxu0 %v3860
    %4657 = vmatprep.subr.bf16.mxu0 %v3867
    %4658 = vmatpush1.bf16.msra.mxu0 %v3866
    %4659 = vmatprep.subr.bf16.mxu0 %v3873
    %4660 = vmatpush1.bf16.msra.mxu0 %v3872
    %4661 = vmatprep.mubr.bf16.mxu0 %v216
    %4662 = vmatmul.mubr.bf16.gmra.mrb[0].mxu0 %v215
    %v4663 = vpop.f32.mrb[0].mxu0
    %v4664 = vadd.f32 %v4611, %v4663
    %v4665 = vpop.f32.mrb[0].mxu0
    %v4666 = vadd.f32 %v4613, %v4665
    %v4667 = vpop.f32.mrb[0].mxu0
    %v4668 = vadd.f32 %v4615, %v4667
    %v4669 = vpop.f32.mrb[0].mxu0
    %v4670 = vadd.f32 %v4617, %v4669
    %4671 = vmatprep.mubr.bf16.mxu0 %v222
    %4672 = vmatmul.mubr.bf16.gmra.mrb[0].mxu0 %v221
    %v4673 = vpop.f32.mrb[0].mxu0
    %v4674 = vadd.f32 %v4621, %v4673
    %v4675 = vpop.f32.mrb[0].mxu0
    %v4676 = vadd.f32 %v4623, %v4675
    %v4677 = vpop.f32.mrb[0].mxu0
    %v4678 = vadd.f32 %v4625, %v4677
    %v4679 = vpop.f32.mrb[0].mxu0
    %v4680 = vadd.f32 %v4627, %v4679
    %4681 = vdwg.mxu0
    %4682 = vmatprep.subr.bf16.mxu0 %v3879
    %4683 = vmatpush1.bf16.msra.mxu0 %v3878
    %4684 = vmatprep.subr.bf16.mxu0 %v3885
    %4685 = vmatpush1.bf16.msra.mxu0 %v3884
    %4686 = vmatprep.subr.bf16.mxu0 %v3891
    %4687 = vmatpush1.bf16.msra.mxu0 %v3890
    %4688 = vmatprep.subr.bf16.mxu0 %v3897
    %4689 = vmatpush1.bf16.msra.mxu0 %v3896
    %4690 = vmatprep.subr.bf16.mxu0 %v3903
    %4691 = vmatpush1.bf16.msra.mxu0 %v3902
    %4692 = vmatprep.subr.bf16.mxu0 %v3909
    %4693 = vmatpush1.bf16.msra.mxu0 %v3908
    %4694 = vmatprep.subr.bf16.mxu0 %v3915
    %4695 = vmatpush1.bf16.msra.mxu0 %v3914
    %4696 = vmatprep.subr.bf16.mxu0 %v3921
    %4697 = vmatpush1.bf16.msra.mxu0 %v3920
    %4698 = vmatprep.subr.bf16.mxu0 %v3927
    %4699 = vmatpush1.bf16.msra.mxu0 %v3926
    %4700 = vmatprep.subr.bf16.mxu0 %v3933
    %4701 = vmatpush1.bf16.msra.mxu0 %v3932
    %4702 = vmatprep.subr.bf16.mxu0 %v3939
    %4703 = vmatpush1.bf16.msra.mxu0 %v3938
    %4704 = vmatprep.subr.bf16.mxu0 %v3945
    %4705 = vmatpush1.bf16.msra.mxu0 %v3944
    %4706 = vmatprep.subr.bf16.mxu0 %v3951
    %4707 = vmatpush1.bf16.msra.mxu0 %v3950
    %4708 = vmatprep.subr.bf16.mxu0 %v3957
    %4709 = vmatpush1.bf16.msra.mxu0 %v3956
    %4710 = vmatprep.subr.bf16.mxu0 %v3963
    %4711 = vmatpush1.bf16.msra.mxu0 %v3962
    %4712 = vmatprep.subr.bf16.mxu0 %v3969
    %4713 = vmatpush1.bf16.msra.mxu0 %v3968
    %4714 = vmatprep.mubr.bf16.mxu0 %v218
    %4715 = vmatmul.mubr.bf16.gmra.mrb[0].mxu0 %v217
    %v4716 = vpop.f32.mrb[0].mxu0
    %v4717 = vadd.f32 %v4664, %v4716
    %v4718 = vpop.f32.mrb[0].mxu0
    %v4719 = vadd.f32 %v4666, %v4718
    %v4720 = vpop.f32.mrb[0].mxu0
    %v4721 = vadd.f32 %v4668, %v4720
    %v4722 = vpop.f32.mrb[0].mxu0
    %v4723 = vadd.f32 %v4670, %v4722
    %4724 = vmatprep.mubr.bf16.mxu0 %v224
    %4725 = vmatmul.mubr.bf16.gmra.mrb[0].mxu0 %v223
    %v4726 = vpop.f32.mrb[0].mxu0
    %v4727 = vadd.f32 %v4674, %v4726
    %v4728 = vpop.f32.mrb[0].mxu0
    %v4729 = vadd.f32 %v4676, %v4728
    %v4730 = vpop.f32.mrb[0].mxu0
    %v4731 = vadd.f32 %v4678, %v4730
    %v4732 = vpop.f32.mrb[0].mxu0
    %v4733 = vadd.f32 %v4680, %v4732
    %4734 = vdwg.mxu0
    %v4735 = vld [vmem:[#allocation11] sm:$0xff]
    %v4736 = vld [vmem:[#allocation11 + $0x8] sm:$0xff]
    %v4737 = vld [vmem:[#allocation11 + $0x10] sm:$0xff]
    %v4738 = vld [vmem:[#allocation11 + $0x18] sm:$0xff]
    %v4739 = vld [vmem:[#allocation11 + $0x20] sm:$0xff]
    %v4740 = vld [vmem:[#allocation11 + $0x28] sm:$0xff]
    %v4741 = vld [vmem:[#allocation11 + $0x30] sm:$0xff]
    %v4742 = vld [vmem:[#allocation11 + $0x38] sm:$0xff]
    %v4743 = vld [vmem:[#allocation11 + $0x40] sm:$0xff]
    %v4744 = vld [vmem:[#allocation11 + $0x48] sm:$0xff]
    %v4745 = vld [vmem:[#allocation11 + $0x50] sm:$0xff]
    %v4746 = vld [vmem:[#allocation11 + $0x58] sm:$0xff]
    %v4747 = vld [vmem:[#allocation11 + $0x60] sm:$0xff]
    %v4748 = vld [vmem:[#allocation11 + $0x68] sm:$0xff]
    %v4749 = vld [vmem:[#allocation11 + $0x70] sm:$0xff]
    %v4750 = vld [vmem:[#allocation11 + $0x78] sm:$0xff]
    %v4751 = vld [vmem:[#allocation11 + $0x80] sm:$0xff]
    %v4752 = vld [vmem:[#allocation11 + $0x88] sm:$0xff]
    %v4753 = vld [vmem:[#allocation11 + $0x90] sm:$0xff]
    %v4754 = vld [vmem:[#allocation11 + $0x98] sm:$0xff]
    %v4755 = vld [vmem:[#allocation11 + $0xa0] sm:$0xff]
    %v4756 = vld [vmem:[#allocation11 + $0xa8] sm:$0xff]
    %v4757 = vld [vmem:[#allocation11 + $0xb0] sm:$0xff]
    %v4758 = vld [vmem:[#allocation11 + $0xb8] sm:$0xff]
    %v4759 = vld [vmem:[#allocation11 + $0xc0] sm:$0xff]
    %v4760 = vld [vmem:[#allocation11 + $0xc8] sm:$0xff]
    %v4761 = vld [vmem:[#allocation11 + $0xd0] sm:$0xff]
    %v4762 = vld [vmem:[#allocation11 + $0xd8] sm:$0xff]
    %v4763 = vld [vmem:[#allocation11 + $0xe0] sm:$0xff]
    %v4764 = vld [vmem:[#allocation11 + $0xe8] sm:$0xff]
    %v4765 = vld [vmem:[#allocation11 + $0xf0] sm:$0xff]
    %v4766 = vld [vmem:[#allocation11 + $0xf8] sm:$0xff]
    %v4767 = vld [vmem:[#allocation11 + $0x100] sm:$0xff]
    %v4768 = vld [vmem:[#allocation11 + $0x108] sm:$0xff]
    %v4769 = vld [vmem:[#allocation11 + $0x110] sm:$0xff]
    %v4770 = vld [vmem:[#allocation11 + $0x118] sm:$0xff]
    %v4771 = vld [vmem:[#allocation11 + $0x120] sm:$0xff]
    %v4772 = vld [vmem:[#allocation11 + $0x128] sm:$0xff]
    %v4773 = vld [vmem:[#allocation11 + $0x130] sm:$0xff]
    %v4774 = vld [vmem:[#allocation11 + $0x138] sm:$0xff]
    %v4775 = vld [vmem:[#allocation11 + $0x140] sm:$0xff]
    %v4776 = vld [vmem:[#allocation11 + $0x148] sm:$0xff]
    %v4777 = vld [vmem:[#allocation11 + $0x150] sm:$0xff]
    %v4778 = vld [vmem:[#allocation11 + $0x158] sm:$0xff]
    %v4779 = vld [vmem:[#allocation11 + $0x160] sm:$0xff]
    %v4780 = vld [vmem:[#allocation11 + $0x168] sm:$0xff]
    %v4781 = vld [vmem:[#allocation11 + $0x170] sm:$0xff]
    %v4782 = vld [vmem:[#allocation11 + $0x178] sm:$0xff]
    %v4783 = vld [vmem:[#allocation11 + $0x180] sm:$0xff]
    %v4784 = vld [vmem:[#allocation11 + $0x188] sm:$0xff]
    %v4785 = vld [vmem:[#allocation11 + $0x190] sm:$0xff]
    %v4786 = vld [vmem:[#allocation11 + $0x198] sm:$0xff]
    %v4787 = vld [vmem:[#allocation11 + $0x1a0] sm:$0xff]
    %v4788 = vld [vmem:[#allocation11 + $0x1a8] sm:$0xff]
    %v4789 = vld [vmem:[#allocation11 + $0x1b0] sm:$0xff]
    %v4790 = vld [vmem:[#allocation11 + $0x1b8] sm:$0xff]
    %v4791 = vld [vmem:[#allocation11 + $0x1c0] sm:$0xff]
    %v4792 = vld [vmem:[#allocation11 + $0x1c8] sm:$0xff]
    %v4793 = vld [vmem:[#allocation11 + $0x1d0] sm:$0xff]
    %v4794 = vld [vmem:[#allocation11 + $0x1d8] sm:$0xff]
    %v4795 = vld [vmem:[#allocation11 + $0x1e0] sm:$0xff]
    %v4796 = vld [vmem:[#allocation11 + $0x1e8] sm:$0xff]
    %v4797 = vld [vmem:[#allocation11 + $0x1f0] sm:$0xff]
    %v4798 = vld [vmem:[#allocation11 + $0x1f8] sm:$0xff]
    %v4799 = vld [vmem:[#allocation11 + $0x200] sm:$0xff]
    %v4800 = vld [vmem:[#allocation11 + $0x208] sm:$0xff]
    %v4801 = vld [vmem:[#allocation11 + $0x210] sm:$0xff]
    %v4802 = vld [vmem:[#allocation11 + $0x218] sm:$0xff]
    %v4803 = vld [vmem:[#allocation11 + $0x220] sm:$0xff]
    %v4804 = vld [vmem:[#allocation11 + $0x228] sm:$0xff]
    %v4805 = vld [vmem:[#allocation11 + $0x230] sm:$0xff]
    %v4806 = vld [vmem:[#allocation11 + $0x238] sm:$0xff]
    %v4807 = vld [vmem:[#allocation11 + $0x240] sm:$0xff]
    %v4808 = vld [vmem:[#allocation11 + $0x248] sm:$0xff]
    %v4809 = vld [vmem:[#allocation11 + $0x250] sm:$0xff]
    %v4810 = vld [vmem:[#allocation11 + $0x258] sm:$0xff]
    %v4811 = vld [vmem:[#allocation11 + $0x260] sm:$0xff]
    %v4812 = vld [vmem:[#allocation11 + $0x268] sm:$0xff]
    %v4813 = vld [vmem:[#allocation11 + $0x270] sm:$0xff]
    %v4814 = vld [vmem:[#allocation11 + $0x278] sm:$0xff]
    %v4815 = vld [vmem:[#allocation11 + $0x280] sm:$0xff]
    %v4816 = vld [vmem:[#allocation11 + $0x288] sm:$0xff]
    %v4817 = vld [vmem:[#allocation11 + $0x290] sm:$0xff]
    %v4818 = vld [vmem:[#allocation11 + $0x298] sm:$0xff]
    %v4819 = vld [vmem:[#allocation11 + $0x2a0] sm:$0xff]
    %v4820 = vld [vmem:[#allocation11 + $0x2a8] sm:$0xff]
    %v4821 = vld [vmem:[#allocation11 + $0x2b0] sm:$0xff]
    %v4822 = vld [vmem:[#allocation11 + $0x2b8] sm:$0xff]
    %v4823 = vld [vmem:[#allocation11 + $0x2c0] sm:$0xff]
    %v4824 = vld [vmem:[#allocation11 + $0x2c8] sm:$0xff]
    %v4825 = vld [vmem:[#allocation11 + $0x2d0] sm:$0xff]
    %v4826 = vld [vmem:[#allocation11 + $0x2d8] sm:$0xff]
    %v4827 = vld [vmem:[#allocation11 + $0x2e0] sm:$0xff]
    %v4828 = vld [vmem:[#allocation11 + $0x2e8] sm:$0xff]
    %v4829 = vld [vmem:[#allocation11 + $0x2f0] sm:$0xff]
    %v4830 = vld [vmem:[#allocation11 + $0x2f8] sm:$0xff]
    %v4831 = vld [vmem:[#allocation11 + $0x300] sm:$0xff]
    %v4832 = vld [vmem:[#allocation11 + $0x308] sm:$0xff]
    %v4833 = vld [vmem:[#allocation11 + $0x310] sm:$0xff]
    %v4834 = vld [vmem:[#allocation11 + $0x318] sm:$0xff]
    %v4835 = vld [vmem:[#allocation11 + $0x320] sm:$0xff]
    %v4836 = vld [vmem:[#allocation11 + $0x328] sm:$0xff]
    %v4837 = vld [vmem:[#allocation11 + $0x330] sm:$0xff]
    %v4838 = vld [vmem:[#allocation11 + $0x338] sm:$0xff]
    %v4839 = vld [vmem:[#allocation11 + $0x340] sm:$0xff]
    %v4840 = vld [vmem:[#allocation11 + $0x348] sm:$0xff]
    %v4841 = vld [vmem:[#allocation11 + $0x350] sm:$0xff]
    %v4842 = vld [vmem:[#allocation11 + $0x358] sm:$0xff]
    %v4843 = vld [vmem:[#allocation11 + $0x360] sm:$0xff]
    %v4844 = vld [vmem:[#allocation11 + $0x368] sm:$0xff]
    %v4845 = vld [vmem:[#allocation11 + $0x370] sm:$0xff]
    %v4846 = vld [vmem:[#allocation11 + $0x378] sm:$0xff]
    %v4847 = vld [vmem:[#allocation11 + $0x380] sm:$0xff]
    %v4848 = vld [vmem:[#allocation11 + $0x388] sm:$0xff]
    %v4849 = vld [vmem:[#allocation11 + $0x390] sm:$0xff]
    %v4850 = vld [vmem:[#allocation11 + $0x398] sm:$0xff]
    %v4851 = vld [vmem:[#allocation11 + $0x3a0] sm:$0xff]
    %v4852 = vld [vmem:[#allocation11 + $0x3a8] sm:$0xff]
    %v4853 = vld [vmem:[#allocation11 + $0x3b0] sm:$0xff]
    %v4854 = vld [vmem:[#allocation11 + $0x3b8] sm:$0xff]
    %v4855 = vld [vmem:[#allocation11 + $0x3c0] sm:$0xff]
    %v4856 = vld [vmem:[#allocation11 + $0x3c8] sm:$0xff]
    %v4857 = vld [vmem:[#allocation11 + $0x3d0] sm:$0xff]
    %v4858 = vld [vmem:[#allocation11 + $0x3d8] sm:$0xff]
    %v4859 = vld [vmem:[#allocation11 + $0x3e0] sm:$0xff]
    %v4860 = vld [vmem:[#allocation11 + $0x3e8] sm:$0xff]
    %v4861 = vld [vmem:[#allocation11 + $0x3f0] sm:$0xff]
    %v4862 = vld [vmem:[#allocation11 + $0x3f8] sm:$0xff]
    %v4863 = vld [vmem:[#allocation11 + $0x400] sm:$0xff]
    %v4864 = vld [vmem:[#allocation11 + $0x408] sm:$0xff]
    %v4865 = vld [vmem:[#allocation11 + $0x410] sm:$0xff]
    %v4866 = vld [vmem:[#allocation11 + $0x418] sm:$0xff]
    %v4867 = vld [vmem:[#allocation11 + $0x420] sm:$0xff]
    %v4868 = vld [vmem:[#allocation11 + $0x428] sm:$0xff]
    %v4869 = vld [vmem:[#allocation11 + $0x430] sm:$0xff]
    %v4870 = vld [vmem:[#allocation11 + $0x438] sm:$0xff]
    %v4871 = vld [vmem:[#allocation11 + $0x440] sm:$0xff]
    %v4872 = vld [vmem:[#allocation11 + $0x448] sm:$0xff]
    %v4873 = vld [vmem:[#allocation11 + $0x450] sm:$0xff]
    %v4874 = vld [vmem:[#allocation11 + $0x458] sm:$0xff]
    %v4875 = vld [vmem:[#allocation11 + $0x460] sm:$0xff]
    %v4876 = vld [vmem:[#allocation11 + $0x468] sm:$0xff]
    %v4877 = vld [vmem:[#allocation11 + $0x470] sm:$0xff]
    %v4878 = vld [vmem:[#allocation11 + $0x478] sm:$0xff]
    %v4879 = vld [vmem:[#allocation11 + $0x480] sm:$0xff]
    %v4880 = vld [vmem:[#allocation11 + $0x488] sm:$0xff]
    %v4881 = vld [vmem:[#allocation11 + $0x490] sm:$0xff]
    %v4882 = vld [vmem:[#allocation11 + $0x498] sm:$0xff]
    %v4883 = vld [vmem:[#allocation11 + $0x4a0] sm:$0xff]
    %v4884 = vld [vmem:[#allocation11 + $0x4a8] sm:$0xff]
    %v4885 = vld [vmem:[#allocation11 + $0x4b0] sm:$0xff]
    %v4886 = vld [vmem:[#allocation11 + $0x4b8] sm:$0xff]
    %v4887 = vld [vmem:[#allocation11 + $0x4c0] sm:$0xff]
    %v4888 = vld [vmem:[#allocation11 + $0x4c8] sm:$0xff]
    %v4889 = vld [vmem:[#allocation11 + $0x4d0] sm:$0xff]
    %v4890 = vld [vmem:[#allocation11 + $0x4d8] sm:$0xff]
    %v4891 = vld [vmem:[#allocation11 + $0x4e0] sm:$0xff]
    %v4892 = vld [vmem:[#allocation11 + $0x4e8] sm:$0xff]
    %v4893 = vld [vmem:[#allocation11 + $0x4f0] sm:$0xff]
    %v4894 = vld [vmem:[#allocation11 + $0x4f8] sm:$0xff]
    %v4895 = vld [vmem:[#allocation11 + $0x500] sm:$0xff]
    %v4896 = vld [vmem:[#allocation11 + $0x508] sm:$0xff]
    %v4897 = vld [vmem:[#allocation11 + $0x510] sm:$0xff]
    %v4898 = vld [vmem:[#allocation11 + $0x518] sm:$0xff]
    %v4899 = vld [vmem:[#allocation11 + $0x520] sm:$0xff]
    %v4900 = vld [vmem:[#allocation11 + $0x528] sm:$0xff]
    %v4901 = vld [vmem:[#allocation11 + $0x530] sm:$0xff]
    %v4902 = vld [vmem:[#allocation11 + $0x538] sm:$0xff]
    %v4903 = vld [vmem:[#allocation11 + $0x540] sm:$0xff]
    %v4904 = vld [vmem:[#allocation11 + $0x548] sm:$0xff]
    %v4905 = vld [vmem:[#allocation11 + $0x550] sm:$0xff]
    %v4906 = vld [vmem:[#allocation11 + $0x558] sm:$0xff]
    %v4907 = vld [vmem:[#allocation11 + $0x560] sm:$0xff]
    %v4908 = vld [vmem:[#allocation11 + $0x568] sm:$0xff]
    %v4909 = vld [vmem:[#allocation11 + $0x570] sm:$0xff]
    %v4910 = vld [vmem:[#allocation11 + $0x578] sm:$0xff]
    %v4911 = vld [vmem:[#allocation11 + $0x580] sm:$0xff]
    %v4912 = vld [vmem:[#allocation11 + $0x588] sm:$0xff]
    %v4913 = vld [vmem:[#allocation11 + $0x590] sm:$0xff]
    %v4914 = vld [vmem:[#allocation11 + $0x598] sm:$0xff]
    %v4915 = vld [vmem:[#allocation11 + $0x5a0] sm:$0xff]
    %v4916 = vld [vmem:[#allocation11 + $0x5a8] sm:$0xff]
    %v4917 = vld [vmem:[#allocation11 + $0x5b0] sm:$0xff]
    %v4918 = vld [vmem:[#allocation11 + $0x5b8] sm:$0xff]
    %v4919 = vld [vmem:[#allocation11 + $0x5c0] sm:$0xff]
    %v4920 = vld [vmem:[#allocation11 + $0x5c8] sm:$0xff]
    %v4921 = vld [vmem:[#allocation11 + $0x5d0] sm:$0xff]
    %v4922 = vld [vmem:[#allocation11 + $0x5d8] sm:$0xff]
    %v4923 = vld [vmem:[#allocation11 + $0x5e0] sm:$0xff]
    %v4924 = vld [vmem:[#allocation11 + $0x5e8] sm:$0xff]
    %v4925 = vld [vmem:[#allocation11 + $0x5f0] sm:$0xff]
    %v4926 = vld [vmem:[#allocation11 + $0x5f8] sm:$0xff]
    %v4927 = vld [vmem:[#allocation11 + $0x600] sm:$0xff]
    %v4928 = vld [vmem:[#allocation11 + $0x608] sm:$0xff]
    %v4929 = vld [vmem:[#allocation11 + $0x610] sm:$0xff]
    %v4930 = vld [vmem:[#allocation11 + $0x618] sm:$0xff]
    %v4931 = vld [vmem:[#allocation11 + $0x620] sm:$0xff]
    %v4932 = vld [vmem:[#allocation11 + $0x628] sm:$0xff]
    %v4933 = vld [vmem:[#allocation11 + $0x630] sm:$0xff]
    %v4934 = vld [vmem:[#allocation11 + $0x638] sm:$0xff]
    %v4935 = vld [vmem:[#allocation11 + $0x640] sm:$0xff]
    %v4936 = vld [vmem:[#allocation11 + $0x648] sm:$0xff]
    %v4937 = vld [vmem:[#allocation11 + $0x650] sm:$0xff]
    %v4938 = vld [vmem:[#allocation11 + $0x658] sm:$0xff]
    %v4939 = vld [vmem:[#allocation11 + $0x660] sm:$0xff]
    %v4940 = vld [vmem:[#allocation11 + $0x668] sm:$0xff]
    %v4941 = vld [vmem:[#allocation11 + $0x670] sm:$0xff]
    %v4942 = vld [vmem:[#allocation11 + $0x678] sm:$0xff]
    %v4943 = vld [vmem:[#allocation11 + $0x680] sm:$0xff]
    %v4944 = vld [vmem:[#allocation11 + $0x688] sm:$0xff]
    %v4945 = vld [vmem:[#allocation11 + $0x690] sm:$0xff]
    %v4946 = vld [vmem:[#allocation11 + $0x698] sm:$0xff]
    %v4947 = vld [vmem:[#allocation11 + $0x6a0] sm:$0xff]
    %v4948 = vld [vmem:[#allocation11 + $0x6a8] sm:$0xff]
    %v4949 = vld [vmem:[#allocation11 + $0x6b0] sm:$0xff]
    %v4950 = vld [vmem:[#allocation11 + $0x6b8] sm:$0xff]
    %v4951 = vld [vmem:[#allocation11 + $0x6c0] sm:$0xff]
    %v4952 = vld [vmem:[#allocation11 + $0x6c8] sm:$0xff]
    %v4953 = vld [vmem:[#allocation11 + $0x6d0] sm:$0xff]
    %v4954 = vld [vmem:[#allocation11 + $0x6d8] sm:$0xff]
    %v4955 = vld [vmem:[#allocation11 + $0x6e0] sm:$0xff]
    %v4956 = vld [vmem:[#allocation11 + $0x6e8] sm:$0xff]
    %v4957 = vld [vmem:[#allocation11 + $0x6f0] sm:$0xff]
    %v4958 = vld [vmem:[#allocation11 + $0x6f8] sm:$0xff]
    %v4959 = vld [vmem:[#allocation11 + $0x700] sm:$0xff]
    %v4960 = vld [vmem:[#allocation11 + $0x708] sm:$0xff]
    %v4961 = vld [vmem:[#allocation11 + $0x710] sm:$0xff]
    %v4962 = vld [vmem:[#allocation11 + $0x718] sm:$0xff]
    %v4963 = vld [vmem:[#allocation11 + $0x720] sm:$0xff]
    %v4964 = vld [vmem:[#allocation11 + $0x728] sm:$0xff]
    %v4965 = vld [vmem:[#allocation11 + $0x730] sm:$0xff]
    %v4966 = vld [vmem:[#allocation11 + $0x738] sm:$0xff]
    %v4967 = vld [vmem:[#allocation11 + $0x740] sm:$0xff]
    %v4968 = vld [vmem:[#allocation11 + $0x748] sm:$0xff]
    %v4969 = vld [vmem:[#allocation11 + $0x750] sm:$0xff]
    %v4970 = vld [vmem:[#allocation11 + $0x758] sm:$0xff]
    %v4971 = vld [vmem:[#allocation11 + $0x760] sm:$0xff]
    %v4972 = vld [vmem:[#allocation11 + $0x768] sm:$0xff]
    %v4973 = vld [vmem:[#allocation11 + $0x770] sm:$0xff]
    %v4974 = vld [vmem:[#allocation11 + $0x778] sm:$0xff]
    %v4975 = vld [vmem:[#allocation11 + $0x780] sm:$0xff]
    %v4976 = vld [vmem:[#allocation11 + $0x788] sm:$0xff]
    %v4977 = vld [vmem:[#allocation11 + $0x790] sm:$0xff]
    %v4978 = vld [vmem:[#allocation11 + $0x798] sm:$0xff]
    %v4979 = vld [vmem:[#allocation11 + $0x7a0] sm:$0xff]
    %v4980 = vld [vmem:[#allocation11 + $0x7a8] sm:$0xff]
    %v4981 = vld [vmem:[#allocation11 + $0x7b0] sm:$0xff]
    %v4982 = vld [vmem:[#allocation11 + $0x7b8] sm:$0xff]
    %v4983 = vld [vmem:[#allocation11 + $0x7c0] sm:$0xff]
    %v4984 = vld [vmem:[#allocation11 + $0x7c8] sm:$0xff]
    %v4985 = vld [vmem:[#allocation11 + $0x7d0] sm:$0xff]
    %v4986 = vld [vmem:[#allocation11 + $0x7d8] sm:$0xff]
    %v4987 = vld [vmem:[#allocation11 + $0x7e0] sm:$0xff]
    %v4988 = vld [vmem:[#allocation11 + $0x7e8] sm:$0xff]
    %v4989 = vld [vmem:[#allocation11 + $0x7f0] sm:$0xff]
    %v4990 = vld [vmem:[#allocation11 + $0x7f8] sm:$0xff]
    %v4991 = vld [vmem:[#allocation11 + $0x800] sm:$0xff]
    %v4992 = vld [vmem:[#allocation11 + $0x808] sm:$0xff]
    %v4993 = vld [vmem:[#allocation11 + $0x810] sm:$0xff]
    %v4994 = vld [vmem:[#allocation11 + $0x818] sm:$0xff]
    %v4995 = vld [vmem:[#allocation11 + $0x820] sm:$0xff]
    %v4996 = vld [vmem:[#allocation11 + $0x828] sm:$0xff]
    %v4997 = vld [vmem:[#allocation11 + $0x830] sm:$0xff]
    %v4998 = vld [vmem:[#allocation11 + $0x838] sm:$0xff]
    %v4999 = vld [vmem:[#allocation11 + $0x840] sm:$0xff]
    %v5000 = vld [vmem:[#allocation11 + $0x848] sm:$0xff]
    %v5001 = vld [vmem:[#allocation11 + $0x850] sm:$0xff]
    %v5002 = vld [vmem:[#allocation11 + $0x858] sm:$0xff]
    %v5003 = vld [vmem:[#allocation11 + $0x860] sm:$0xff]
    %v5004 = vld [vmem:[#allocation11 + $0x868] sm:$0xff]
    %v5005 = vld [vmem:[#allocation11 + $0x870] sm:$0xff]
    %v5006 = vld [vmem:[#allocation11 + $0x878] sm:$0xff]
    %v5007 = vld [vmem:[#allocation11 + $0x880] sm:$0xff]
    %v5008 = vld [vmem:[#allocation11 + $0x888] sm:$0xff]
    %v5009 = vld [vmem:[#allocation11 + $0x890] sm:$0xff]
    %v5010 = vld [vmem:[#allocation11 + $0x898] sm:$0xff]
    %v5011 = vld [vmem:[#allocation11 + $0x8a0] sm:$0xff]
    %v5012 = vld [vmem:[#allocation11 + $0x8a8] sm:$0xff]
    %v5013 = vld [vmem:[#allocation11 + $0x8b0] sm:$0xff]
    %v5014 = vld [vmem:[#allocation11 + $0x8b8] sm:$0xff]
    %v5015 = vld [vmem:[#allocation11 + $0x8c0] sm:$0xff]
    %v5016 = vld [vmem:[#allocation11 + $0x8c8] sm:$0xff]
    %v5017 = vld [vmem:[#allocation11 + $0x8d0] sm:$0xff]
    %v5018 = vld [vmem:[#allocation11 + $0x8d8] sm:$0xff]
    %v5019 = vld [vmem:[#allocation11 + $0x8e0] sm:$0xff]
    %v5020 = vld [vmem:[#allocation11 + $0x8e8] sm:$0xff]
    %v5021 = vld [vmem:[#allocation11 + $0x8f0] sm:$0xff]
    %v5022 = vld [vmem:[#allocation11 + $0x8f8] sm:$0xff]
    %v5023 = vld [vmem:[#allocation16] sm:$0x3f]
    %v5025 = vlaneseq
    %v5026 = vshrl.u32 %v5025, 7
    %v5027 = vsub.s32 0, %v5026
    %v5028 = vrot.slane %v5023, %v5027
    %v5029 = vlaneseq
    %v5030 = vshrl.u32 %v5029, 7
    %v5031 = vsub.s32 1, %v5030
    %v5032 = vrot.slane %v5023, %v5031
    %v5033 = vlaneseq
    %v5034 = vshrl.u32 %v5033, 7
    %v5035 = vsub.s32 2, %v5034
    %v5036 = vrot.slane %v5023, %v5035
    %v5037 = vlaneseq
    %v5038 = vshrl.u32 %v5037, 7
    %v5039 = vsub.s32 3, %v5038
    %v5040 = vrot.slane %v5023, %v5039
    %v5041 = vlaneseq
    %v5042 = vshrl.u32 %v5041, 7
    %v5043 = vsub.s32 4, %v5042
    %v5044 = vrot.slane %v5023, %v5043
    %v5045 = vlaneseq
    %v5046 = vshrl.u32 %v5045, 7
    %v5047 = vsub.s32 5, %v5046
    %v5048 = vrot.slane %v5023, %v5047
    %v5343 = vunpack.c.l.b16 %v4735
    %v5344 = vunpack.c.h.b16 %v4735
    %v5345 = vunpack.c.l.b16 %v4736
    %v5346 = vunpack.c.h.b16 %v4736
    %v5347 = vunpack.c.l.b16 %v4737
    %v5348 = vunpack.c.h.b16 %v4737
    %v5349 = vunpack.c.l.b16 %v4738
    %v5350 = vunpack.c.h.b16 %v4738
    %v5351 = vunpack.c.l.b16 %v4739
    %v5352 = vunpack.c.h.b16 %v4739
    %v5353 = vunpack.c.l.b16 %v4740
    %v5354 = vunpack.c.h.b16 %v4740
    %v5355 = vunpack.c.l.b16 %v4741
    %v5356 = vunpack.c.h.b16 %v4741
    %v5357 = vunpack.c.l.b16 %v4742
    %v5358 = vunpack.c.h.b16 %v4742
    %v5359 = vunpack.c.l.b16 %v4743
    %v5360 = vunpack.c.h.b16 %v4743
    %v5361 = vunpack.c.l.b16 %v4744
    %v5362 = vunpack.c.h.b16 %v4744
    %v5363 = vunpack.c.l.b16 %v4745
    %v5364 = vunpack.c.h.b16 %v4745
    %v5365 = vunpack.c.l.b16 %v4746
    %v5366 = vunpack.c.h.b16 %v4746
    %v5367 = vunpack.c.l.b16 %v4747
    %v5368 = vunpack.c.h.b16 %v4747
    %v5369 = vunpack.c.l.b16 %v4748
    %v5370 = vunpack.c.h.b16 %v4748
    %v5371 = vunpack.c.l.b16 %v4749
    %v5372 = vunpack.c.h.b16 %v4749
    %v5373 = vunpack.c.l.b16 %v4750
    %v5374 = vunpack.c.h.b16 %v4750
    %v5375 = vunpack.c.l.b16 %v4751
    %v5376 = vunpack.c.h.b16 %v4751
    %v5377 = vunpack.c.l.b16 %v4752
    %v5378 = vunpack.c.h.b16 %v4752
    %v5379 = vunpack.c.l.b16 %v4753
    %v5380 = vunpack.c.h.b16 %v4753
    %v5381 = vunpack.c.l.b16 %v4754
    %v5382 = vunpack.c.h.b16 %v4754
    %v5383 = vunpack.c.l.b16 %v4755
    %v5384 = vunpack.c.h.b16 %v4755
    %v5385 = vunpack.c.l.b16 %v4756
    %v5386 = vunpack.c.h.b16 %v4756
    %v5387 = vunpack.c.l.b16 %v4757
    %v5388 = vunpack.c.h.b16 %v4757
    %v5389 = vunpack.c.l.b16 %v4758
    %v5390 = vunpack.c.h.b16 %v4758
    %v5391 = vunpack.c.l.b16 %v4759
    %v5392 = vunpack.c.h.b16 %v4759
    %v5393 = vunpack.c.l.b16 %v4760
    %v5394 = vunpack.c.h.b16 %v4760
    %v5395 = vunpack.c.l.b16 %v4761
    %v5396 = vunpack.c.h.b16 %v4761
    %v5397 = vunpack.c.l.b16 %v4762
    %v5398 = vunpack.c.h.b16 %v4762
    %v5399 = vunpack.c.l.b16 %v4763
    %v5400 = vunpack.c.h.b16 %v4763
    %v5401 = vunpack.c.l.b16 %v4764
    %v5402 = vunpack.c.h.b16 %v4764
    %v5403 = vunpack.c.l.b16 %v4765
    %v5404 = vunpack.c.h.b16 %v4765
    %v5405 = vunpack.c.l.b16 %v4766
    %v5406 = vunpack.c.h.b16 %v4766
    %v5407 = vunpack.c.l.b16 %v4767
    %v5408 = vunpack.c.h.b16 %v4767
    %v5409 = vunpack.c.l.b16 %v4768
    %v5410 = vunpack.c.h.b16 %v4768
    %v5411 = vunpack.c.l.b16 %v4769
    %v5412 = vunpack.c.h.b16 %v4769
    %v5413 = vunpack.c.l.b16 %v4770
    %v5414 = vunpack.c.h.b16 %v4770
    %v5415 = vunpack.c.l.b16 %v4771
    %v5416 = vunpack.c.h.b16 %v4771
    %v5417 = vunpack.c.l.b16 %v4772
    %v5418 = vunpack.c.h.b16 %v4772
    %v5419 = vunpack.c.l.b16 %v4773
    %v5420 = vunpack.c.h.b16 %v4773
    %v5421 = vunpack.c.l.b16 %v4774
    %v5422 = vunpack.c.h.b16 %v4774
    %v5423 = vunpack.c.l.b16 %v4775
    %v5424 = vunpack.c.h.b16 %v4775
    %v5425 = vunpack.c.l.b16 %v4776
    %v5426 = vunpack.c.h.b16 %v4776
    %v5427 = vunpack.c.l.b16 %v4777
    %v5428 = vunpack.c.h.b16 %v4777
    %v5429 = vunpack.c.l.b16 %v4778
    %v5430 = vunpack.c.h.b16 %v4778
    %v5431 = vunpack.c.l.b16 %v4779
    %v5432 = vunpack.c.h.b16 %v4779
    %v5433 = vunpack.c.l.b16 %v4780
    %v5434 = vunpack.c.h.b16 %v4780
    %v5435 = vunpack.c.l.b16 %v4781
    %v5436 = vunpack.c.h.b16 %v4781
    %v5437 = vunpack.c.l.b16 %v4782
    %v5438 = vunpack.c.h.b16 %v4782
    %v5439 = vunpack.c.l.b16 %v4783
    %v5440 = vunpack.c.h.b16 %v4783
    %v5441 = vunpack.c.l.b16 %v4784
    %v5442 = vunpack.c.h.b16 %v4784
    %v5443 = vunpack.c.l.b16 %v4785
    %v5444 = vunpack.c.h.b16 %v4785
    %v5445 = vunpack.c.l.b16 %v4786
    %v5446 = vunpack.c.h.b16 %v4786
    %v5447 = vunpack.c.l.b16 %v4787
    %v5448 = vunpack.c.h.b16 %v4787
    %v5449 = vunpack.c.l.b16 %v4788
    %v5450 = vunpack.c.h.b16 %v4788
    %v5451 = vunpack.c.l.b16 %v4789
    %v5452 = vunpack.c.h.b16 %v4789
    %v5453 = vunpack.c.l.b16 %v4790
    %v5454 = vunpack.c.h.b16 %v4790
    %v5455 = vunpack.c.l.b16 %v4791
    %v5456 = vunpack.c.h.b16 %v4791
    %v5457 = vunpack.c.l.b16 %v4792
    %v5458 = vunpack.c.h.b16 %v4792
    %v5459 = vunpack.c.l.b16 %v4793
    %v5460 = vunpack.c.h.b16 %v4793
    %v5461 = vunpack.c.l.b16 %v4794
    %v5462 = vunpack.c.h.b16 %v4794
    %v5463 = vunpack.c.l.b16 %v4795
    %v5464 = vunpack.c.h.b16 %v4795
    %v5465 = vunpack.c.l.b16 %v4796
    %v5466 = vunpack.c.h.b16 %v4796
    %v5467 = vunpack.c.l.b16 %v4797
    %v5468 = vunpack.c.h.b16 %v4797
    %v5469 = vunpack.c.l.b16 %v4798
    %v5470 = vunpack.c.h.b16 %v4798
    %v5471 = vunpack.c.l.b16 %v4799
    %v5472 = vunpack.c.h.b16 %v4799
    %v5473 = vunpack.c.l.b16 %v4800
    %v5474 = vunpack.c.h.b16 %v4800
    %v5475 = vunpack.c.l.b16 %v4801
    %v5476 = vunpack.c.h.b16 %v4801
    %v5477 = vunpack.c.l.b16 %v4802
    %v5478 = vunpack.c.h.b16 %v4802
    %v5479 = vunpack.c.l.b16 %v4803
    %v5480 = vunpack.c.h.b16 %v4803
    %v5481 = vunpack.c.l.b16 %v4804
    %v5482 = vunpack.c.h.b16 %v4804
    %v5483 = vunpack.c.l.b16 %v4805
    %v5484 = vunpack.c.h.b16 %v4805
    %v5485 = vunpack.c.l.b16 %v4806
    %v5486 = vunpack.c.h.b16 %v4806
    %v5487 = vunpack.c.l.b16 %v4807
    %v5488 = vunpack.c.h.b16 %v4807
    %v5489 = vunpack.c.l.b16 %v4808
    %v5490 = vunpack.c.h.b16 %v4808
    %v5491 = vunpack.c.l.b16 %v4809
    %v5492 = vunpack.c.h.b16 %v4809
    %v5493 = vunpack.c.l.b16 %v4810
    %v5494 = vunpack.c.h.b16 %v4810
    %v5495 = vunpack.c.l.b16 %v4811
    %v5496 = vunpack.c.h.b16 %v4811
    %v5497 = vunpack.c.l.b16 %v4812
    %v5498 = vunpack.c.h.b16 %v4812
    %v5499 = vunpack.c.l.b16 %v4813
    %v5500 = vunpack.c.h.b16 %v4813
    %v5501 = vunpack.c.l.b16 %v4814
    %v5502 = vunpack.c.h.b16 %v4814
    %v5503 = vunpack.c.l.b16 %v4815
    %v5504 = vunpack.c.h.b16 %v4815
    %v5505 = vunpack.c.l.b16 %v4816
    %v5506 = vunpack.c.h.b16 %v4816
    %v5507 = vunpack.c.l.b16 %v4817
    %v5508 = vunpack.c.h.b16 %v4817
    %v5509 = vunpack.c.l.b16 %v4818
    %v5510 = vunpack.c.h.b16 %v4818
    %v5511 = vunpack.c.l.b16 %v4819
    %v5512 = vunpack.c.h.b16 %v4819
    %v5513 = vunpack.c.l.b16 %v4820
    %v5514 = vunpack.c.h.b16 %v4820
    %v5515 = vunpack.c.l.b16 %v4821
    %v5516 = vunpack.c.h.b16 %v4821
    %v5517 = vunpack.c.l.b16 %v4822
    %v5518 = vunpack.c.h.b16 %v4822
    %v5519 = vunpack.c.l.b16 %v4823
    %v5520 = vunpack.c.h.b16 %v4823
    %v5521 = vunpack.c.l.b16 %v4824
    %v5522 = vunpack.c.h.b16 %v4824
    %v5523 = vunpack.c.l.b16 %v4825
    %v5524 = vunpack.c.h.b16 %v4825
    %v5525 = vunpack.c.l.b16 %v4826
    %v5526 = vunpack.c.h.b16 %v4826
    %v5527 = vunpack.c.l.b16 %v4827
    %v5528 = vunpack.c.h.b16 %v4827
    %v5529 = vunpack.c.l.b16 %v4828
    %v5530 = vunpack.c.h.b16 %v4828
    %v5531 = vunpack.c.l.b16 %v4829
    %v5532 = vunpack.c.h.b16 %v4829
    %v5533 = vunpack.c.l.b16 %v4830
    %v5534 = vunpack.c.h.b16 %v4830
    %v5535 = vunpack.c.l.b16 %v4831
    %v5536 = vunpack.c.h.b16 %v4831
    %v5537 = vunpack.c.l.b16 %v4832
    %v5538 = vunpack.c.h.b16 %v4832
    %v5539 = vunpack.c.l.b16 %v4833
    %v5540 = vunpack.c.h.b16 %v4833
    %v5541 = vunpack.c.l.b16 %v4834
    %v5542 = vunpack.c.h.b16 %v4834
    %v5543 = vunpack.c.l.b16 %v4835
    %v5544 = vunpack.c.h.b16 %v4835
    %v5545 = vunpack.c.l.b16 %v4836
    %v5546 = vunpack.c.h.b16 %v4836
    %v5547 = vunpack.c.l.b16 %v4837
    %v5548 = vunpack.c.h.b16 %v4837
    %v5549 = vunpack.c.l.b16 %v4838
    %v5550 = vunpack.c.h.b16 %v4838
    %v5551 = vunpack.c.l.b16 %v4839
    %v5552 = vunpack.c.h.b16 %v4839
    %v5553 = vunpack.c.l.b16 %v4840
    %v5554 = vunpack.c.h.b16 %v4840
    %v5555 = vunpack.c.l.b16 %v4841
    %v5556 = vunpack.c.h.b16 %v4841
    %v5557 = vunpack.c.l.b16 %v4842
    %v5558 = vunpack.c.h.b16 %v4842
    %v5559 = vunpack.c.l.b16 %v4843
    %v5560 = vunpack.c.h.b16 %v4843
    %v5561 = vunpack.c.l.b16 %v4844
    %v5562 = vunpack.c.h.b16 %v4844
    %v5563 = vunpack.c.l.b16 %v4845
    %v5564 = vunpack.c.h.b16 %v4845
    %v5565 = vunpack.c.l.b16 %v4846
    %v5566 = vunpack.c.h.b16 %v4846
    %v5567 = vunpack.c.l.b16 %v4847
    %v5568 = vunpack.c.h.b16 %v4847
    %v5569 = vunpack.c.l.b16 %v4848
    %v5570 = vunpack.c.h.b16 %v4848
    %v5571 = vunpack.c.l.b16 %v4849
    %v5572 = vunpack.c.h.b16 %v4849
    %v5573 = vunpack.c.l.b16 %v4850
    %v5574 = vunpack.c.h.b16 %v4850
    %v5575 = vunpack.c.l.b16 %v4851
    %v5576 = vunpack.c.h.b16 %v4851
    %v5577 = vunpack.c.l.b16 %v4852
    %v5578 = vunpack.c.h.b16 %v4852
    %v5579 = vunpack.c.l.b16 %v4853
    %v5580 = vunpack.c.h.b16 %v4853
    %v5581 = vunpack.c.l.b16 %v4854
    %v5582 = vunpack.c.h.b16 %v4854
    %v5583 = vunpack.c.l.b16 %v4855
    %v5584 = vunpack.c.h.b16 %v4855
    %v5585 = vunpack.c.l.b16 %v4856
    %v5586 = vunpack.c.h.b16 %v4856
    %v5587 = vunpack.c.l.b16 %v4857
    %v5588 = vunpack.c.h.b16 %v4857
    %v5589 = vunpack.c.l.b16 %v4858
    %v5590 = vunpack.c.h.b16 %v4858
    %v5591 = vunpack.c.l.b16 %v4859
    %v5592 = vunpack.c.h.b16 %v4859
    %v5593 = vunpack.c.l.b16 %v4860
    %v5594 = vunpack.c.h.b16 %v4860
    %v5595 = vunpack.c.l.b16 %v4861
    %v5596 = vunpack.c.h.b16 %v4861
    %v5597 = vunpack.c.l.b16 %v4862
    %v5598 = vunpack.c.h.b16 %v4862
    %v5599 = vunpack.c.l.b16 %v4863
    %v5600 = vunpack.c.h.b16 %v4863
    %v5601 = vunpack.c.l.b16 %v4864
    %v5602 = vunpack.c.h.b16 %v4864
    %v5603 = vunpack.c.l.b16 %v4865
    %v5604 = vunpack.c.h.b16 %v4865
    %v5605 = vunpack.c.l.b16 %v4866
    %v5606 = vunpack.c.h.b16 %v4866
    %v5607 = vunpack.c.l.b16 %v4867
    %v5608 = vunpack.c.h.b16 %v4867
    %v5609 = vunpack.c.l.b16 %v4868
    %v5610 = vunpack.c.h.b16 %v4868
    %v5611 = vunpack.c.l.b16 %v4869
    %v5612 = vunpack.c.h.b16 %v4869
    %v5613 = vunpack.c.l.b16 %v4870
    %v5614 = vunpack.c.h.b16 %v4870
    %v5615 = vunpack.c.l.b16 %v4871
    %v5616 = vunpack.c.h.b16 %v4871
    %v5617 = vunpack.c.l.b16 %v4872
    %v5618 = vunpack.c.h.b16 %v4872
    %v5619 = vunpack.c.l.b16 %v4873
    %v5620 = vunpack.c.h.b16 %v4873
    %v5621 = vunpack.c.l.b16 %v4874
    %v5622 = vunpack.c.h.b16 %v4874
    %v5623 = vunpack.c.l.b16 %v4875
    %v5624 = vunpack.c.h.b16 %v4875
    %v5625 = vunpack.c.l.b16 %v4876
    %v5626 = vunpack.c.h.b16 %v4876
    %v5627 = vunpack.c.l.b16 %v4877
    %v5628 = vunpack.c.h.b16 %v4877
    %v5629 = vunpack.c.l.b16 %v4878
    %v5630 = vunpack.c.h.b16 %v4878
    %v5631 = vunpack.c.l.b16 %v4879
    %v5632 = vunpack.c.h.b16 %v4879
    %v5633 = vunpack.c.l.b16 %v4880
    %v5634 = vunpack.c.h.b16 %v4880
    %v5635 = vunpack.c.l.b16 %v4881
    %v5636 = vunpack.c.h.b16 %v4881
    %v5637 = vunpack.c.l.b16 %v4882
    %v5638 = vunpack.c.h.b16 %v4882
    %v5639 = vunpack.c.l.b16 %v4883
    %v5640 = vunpack.c.h.b16 %v4883
    %v5641 = vunpack.c.l.b16 %v4884
    %v5642 = vunpack.c.h.b16 %v4884
    %v5643 = vunpack.c.l.b16 %v4885
    %v5644 = vunpack.c.h.b16 %v4885
    %v5645 = vunpack.c.l.b16 %v4886
    %v5646 = vunpack.c.h.b16 %v4886
    %v5647 = vunpack.c.l.b16 %v4887
    %v5648 = vunpack.c.h.b16 %v4887
    %v5649 = vunpack.c.l.b16 %v4888
    %v5650 = vunpack.c.h.b16 %v4888
    %v5651 = vunpack.c.l.b16 %v4889
    %v5652 = vunpack.c.h.b16 %v4889
    %v5653 = vunpack.c.l.b16 %v4890
    %v5654 = vunpack.c.h.b16 %v4890
    %v5655 = vunpack.c.l.b16 %v4891
    %v5656 = vunpack.c.h.b16 %v4891
    %v5657 = vunpack.c.l.b16 %v4892
    %v5658 = vunpack.c.h.b16 %v4892
    %v5659 = vunpack.c.l.b16 %v4893
    %v5660 = vunpack.c.h.b16 %v4893
    %v5661 = vunpack.c.l.b16 %v4894
    %v5662 = vunpack.c.h.b16 %v4894
    %v5663 = vunpack.c.l.b16 %v4895
    %v5664 = vunpack.c.h.b16 %v4895
    %v5665 = vunpack.c.l.b16 %v4896
    %v5666 = vunpack.c.h.b16 %v4896
    %v5667 = vunpack.c.l.b16 %v4897
    %v5668 = vunpack.c.h.b16 %v4897
    %v5669 = vunpack.c.l.b16 %v4898
    %v5670 = vunpack.c.h.b16 %v4898
    %v5671 = vunpack.c.l.b16 %v4899
    %v5672 = vunpack.c.h.b16 %v4899
    %v5673 = vunpack.c.l.b16 %v4900
    %v5674 = vunpack.c.h.b16 %v4900
    %v5675 = vunpack.c.l.b16 %v4901
    %v5676 = vunpack.c.h.b16 %v4901
    %v5677 = vunpack.c.l.b16 %v4902
    %v5678 = vunpack.c.h.b16 %v4902
    %v5679 = vunpack.c.l.b16 %v4903
    %v5680 = vunpack.c.h.b16 %v4903
    %v5681 = vunpack.c.l.b16 %v4904
    %v5682 = vunpack.c.h.b16 %v4904
    %v5683 = vunpack.c.l.b16 %v4905
    %v5684 = vunpack.c.h.b16 %v4905
    %v5685 = vunpack.c.l.b16 %v4906
    %v5686 = vunpack.c.h.b16 %v4906
    %v5687 = vunpack.c.l.b16 %v4907
    %v5688 = vunpack.c.h.b16 %v4907
    %v5689 = vunpack.c.l.b16 %v4908
    %v5690 = vunpack.c.h.b16 %v4908
    %v5691 = vunpack.c.l.b16 %v4909
    %v5692 = vunpack.c.h.b16 %v4909
    %v5693 = vunpack.c.l.b16 %v4910
    %v5694 = vunpack.c.h.b16 %v4910
    %v5695 = vunpack.c.l.b16 %v4911
    %v5696 = vunpack.c.h.b16 %v4911
    %v5697 = vunpack.c.l.b16 %v4912
    %v5698 = vunpack.c.h.b16 %v4912
    %v5699 = vunpack.c.l.b16 %v4913
    %v5700 = vunpack.c.h.b16 %v4913
    %v5701 = vunpack.c.l.b16 %v4914
    %v5702 = vunpack.c.h.b16 %v4914
    %v5703 = vunpack.c.l.b16 %v4915
    %v5704 = vunpack.c.h.b16 %v4915
    %v5705 = vunpack.c.l.b16 %v4916
    %v5706 = vunpack.c.h.b16 %v4916
    %v5707 = vunpack.c.l.b16 %v4917
    %v5708 = vunpack.c.h.b16 %v4917
    %v5709 = vunpack.c.l.b16 %v4918
    %v5710 = vunpack.c.h.b16 %v4918
    %v5711 = vunpack.c.l.b16 %v4919
    %v5712 = vunpack.c.h.b16 %v4919
    %v5713 = vunpack.c.l.b16 %v4920
    %v5714 = vunpack.c.h.b16 %v4920
    %v5715 = vunpack.c.l.b16 %v4921
    %v5716 = vunpack.c.h.b16 %v4921
    %v5717 = vunpack.c.l.b16 %v4922
    %v5718 = vunpack.c.h.b16 %v4922
    %v5719 = vunpack.c.l.b16 %v4923
    %v5720 = vunpack.c.h.b16 %v4923
    %v5721 = vunpack.c.l.b16 %v4924
    %v5722 = vunpack.c.h.b16 %v4924
    %v5723 = vunpack.c.l.b16 %v4925
    %v5724 = vunpack.c.h.b16 %v4925
    %v5725 = vunpack.c.l.b16 %v4926
    %v5726 = vunpack.c.h.b16 %v4926
    %v5727 = vunpack.c.l.b16 %v4927
    %v5728 = vunpack.c.h.b16 %v4927
    %v5729 = vunpack.c.l.b16 %v4928
    %v5730 = vunpack.c.h.b16 %v4928
    %v5731 = vunpack.c.l.b16 %v4929
    %v5732 = vunpack.c.h.b16 %v4929
    %v5733 = vunpack.c.l.b16 %v4930
    %v5734 = vunpack.c.h.b16 %v4930
    %v5735 = vunpack.c.l.b16 %v4931
    %v5736 = vunpack.c.h.b16 %v4931
    %v5737 = vunpack.c.l.b16 %v4932
    %v5738 = vunpack.c.h.b16 %v4932
    %v5739 = vunpack.c.l.b16 %v4933
    %v5740 = vunpack.c.h.b16 %v4933
    %v5741 = vunpack.c.l.b16 %v4934
    %v5742 = vunpack.c.h.b16 %v4934
    %v5743 = vunpack.c.l.b16 %v4935
    %v5744 = vunpack.c.h.b16 %v4935
    %v5745 = vunpack.c.l.b16 %v4936
    %v5746 = vunpack.c.h.b16 %v4936
    %v5747 = vunpack.c.l.b16 %v4937
    %v5748 = vunpack.c.h.b16 %v4937
    %v5749 = vunpack.c.l.b16 %v4938
    %v5750 = vunpack.c.h.b16 %v4938
    %v5751 = vunpack.c.l.b16 %v4939
    %v5752 = vunpack.c.h.b16 %v4939
    %v5753 = vunpack.c.l.b16 %v4940
    %v5754 = vunpack.c.h.b16 %v4940
    %v5755 = vunpack.c.l.b16 %v4941
    %v5756 = vunpack.c.h.b16 %v4941
    %v5757 = vunpack.c.l.b16 %v4942
    %v5758 = vunpack.c.h.b16 %v4942
    %v5759 = vunpack.c.l.b16 %v4943
    %v5760 = vunpack.c.h.b16 %v4943
    %v5761 = vunpack.c.l.b16 %v4944
    %v5762 = vunpack.c.h.b16 %v4944
    %v5763 = vunpack.c.l.b16 %v4945
    %v5764 = vunpack.c.h.b16 %v4945
    %v5765 = vunpack.c.l.b16 %v4946
    %v5766 = vunpack.c.h.b16 %v4946
    %v5767 = vunpack.c.l.b16 %v4947
    %v5768 = vunpack.c.h.b16 %v4947
    %v5769 = vunpack.c.l.b16 %v4948
    %v5770 = vunpack.c.h.b16 %v4948
    %v5771 = vunpack.c.l.b16 %v4949
    %v5772 = vunpack.c.h.b16 %v4949
    %v5773 = vunpack.c.l.b16 %v4950
    %v5774 = vunpack.c.h.b16 %v4950
    %v5775 = vunpack.c.l.b16 %v4951
    %v5776 = vunpack.c.h.b16 %v4951
    %v5777 = vunpack.c.l.b16 %v4952
    %v5778 = vunpack.c.h.b16 %v4952
    %v5779 = vunpack.c.l.b16 %v4953
    %v5780 = vunpack.c.h.b16 %v4953
    %v5781 = vunpack.c.l.b16 %v4954
    %v5782 = vunpack.c.h.b16 %v4954
    %v5783 = vunpack.c.l.b16 %v4955
    %v5784 = vunpack.c.h.b16 %v4955
    %v5785 = vunpack.c.l.b16 %v4956
    %v5786 = vunpack.c.h.b16 %v4956
    %v5787 = vunpack.c.l.b16 %v4957
    %v5788 = vunpack.c.h.b16 %v4957
    %v5789 = vunpack.c.l.b16 %v4958
    %v5790 = vunpack.c.h.b16 %v4958
    %v5791 = vunpack.c.l.b16 %v4959
    %v5792 = vunpack.c.h.b16 %v4959
    %v5793 = vunpack.c.l.b16 %v4960
    %v5794 = vunpack.c.h.b16 %v4960
    %v5795 = vunpack.c.l.b16 %v4961
    %v5796 = vunpack.c.h.b16 %v4961
    %v5797 = vunpack.c.l.b16 %v4962
    %v5798 = vunpack.c.h.b16 %v4962
    %v5799 = vunpack.c.l.b16 %v4963
    %v5800 = vunpack.c.h.b16 %v4963
    %v5801 = vunpack.c.l.b16 %v4964
    %v5802 = vunpack.c.h.b16 %v4964
    %v5803 = vunpack.c.l.b16 %v4965
    %v5804 = vunpack.c.h.b16 %v4965
    %v5805 = vunpack.c.l.b16 %v4966
    %v5806 = vunpack.c.h.b16 %v4966
    %v5807 = vunpack.c.l.b16 %v4967
    %v5808 = vunpack.c.h.b16 %v4967
    %v5809 = vunpack.c.l.b16 %v4968
    %v5810 = vunpack.c.h.b16 %v4968
    %v5811 = vunpack.c.l.b16 %v4969
    %v5812 = vunpack.c.h.b16 %v4969
    %v5813 = vunpack.c.l.b16 %v4970
    %v5814 = vunpack.c.h.b16 %v4970
    %v5815 = vunpack.c.l.b16 %v4971
    %v5816 = vunpack.c.h.b16 %v4971
    %v5817 = vunpack.c.l.b16 %v4972
    %v5818 = vunpack.c.h.b16 %v4972
    %v5819 = vunpack.c.l.b16 %v4973
    %v5820 = vunpack.c.h.b16 %v4973
    %v5821 = vunpack.c.l.b16 %v4974
    %v5822 = vunpack.c.h.b16 %v4974
    %v5823 = vunpack.c.l.b16 %v4975
    %v5824 = vunpack.c.h.b16 %v4975
    %v5825 = vunpack.c.l.b16 %v4976
    %v5826 = vunpack.c.h.b16 %v4976
    %v5827 = vunpack.c.l.b16 %v4977
    %v5828 = vunpack.c.h.b16 %v4977
    %v5829 = vunpack.c.l.b16 %v4978
    %v5830 = vunpack.c.h.b16 %v4978
    %v5831 = vunpack.c.l.b16 %v4979
    %v5832 = vunpack.c.h.b16 %v4979
    %v5833 = vunpack.c.l.b16 %v4980
    %v5834 = vunpack.c.h.b16 %v4980
    %v5835 = vunpack.c.l.b16 %v4981
    %v5836 = vunpack.c.h.b16 %v4981
    %v5837 = vunpack.c.l.b16 %v4982
    %v5838 = vunpack.c.h.b16 %v4982
    %v5839 = vunpack.c.l.b16 %v4983
    %v5840 = vunpack.c.h.b16 %v4983
    %v5841 = vunpack.c.l.b16 %v4984
    %v5842 = vunpack.c.h.b16 %v4984
    %v5843 = vunpack.c.l.b16 %v4985
    %v5844 = vunpack.c.h.b16 %v4985
    %v5845 = vunpack.c.l.b16 %v4986
    %v5846 = vunpack.c.h.b16 %v4986
    %v5847 = vunpack.c.l.b16 %v4987
    %v5848 = vunpack.c.h.b16 %v4987
    %v5849 = vunpack.c.l.b16 %v4988
    %v5850 = vunpack.c.h.b16 %v4988
    %v5851 = vunpack.c.l.b16 %v4989
    %v5852 = vunpack.c.h.b16 %v4989
    %v5853 = vunpack.c.l.b16 %v4990
    %v5854 = vunpack.c.h.b16 %v4990
    %v5855 = vunpack.c.l.b16 %v4991
    %v5856 = vunpack.c.h.b16 %v4991
    %v5857 = vunpack.c.l.b16 %v4992
    %v5858 = vunpack.c.h.b16 %v4992
    %v5859 = vunpack.c.l.b16 %v4993
    %v5860 = vunpack.c.h.b16 %v4993
    %v5861 = vunpack.c.l.b16 %v4994
    %v5862 = vunpack.c.h.b16 %v4994
    %v5863 = vunpack.c.l.b16 %v4995
    %v5864 = vunpack.c.h.b16 %v4995
    %v5865 = vunpack.c.l.b16 %v4996
    %v5866 = vunpack.c.h.b16 %v4996
    %v5867 = vunpack.c.l.b16 %v4997
    %v5868 = vunpack.c.h.b16 %v4997
    %v5869 = vunpack.c.l.b16 %v4998
    %v5870 = vunpack.c.h.b16 %v4998
    %v5871 = vunpack.c.l.b16 %v4999
    %v5872 = vunpack.c.h.b16 %v4999
    %v5873 = vunpack.c.l.b16 %v5000
    %v5874 = vunpack.c.h.b16 %v5000
    %v5875 = vunpack.c.l.b16 %v5001
    %v5876 = vunpack.c.h.b16 %v5001
    %v5877 = vunpack.c.l.b16 %v5002
    %v5878 = vunpack.c.h.b16 %v5002
    %v5879 = vunpack.c.l.b16 %v5003
    %v5880 = vunpack.c.h.b16 %v5003
    %v5881 = vunpack.c.l.b16 %v5004
    %v5882 = vunpack.c.h.b16 %v5004
    %v5883 = vunpack.c.l.b16 %v5005
    %v5884 = vunpack.c.h.b16 %v5005
    %v5885 = vunpack.c.l.b16 %v5006
    %v5886 = vunpack.c.h.b16 %v5006
    %v5887 = vunpack.c.l.b16 %v5007
    %v5888 = vunpack.c.h.b16 %v5007
    %v5889 = vunpack.c.l.b16 %v5008
    %v5890 = vunpack.c.h.b16 %v5008
    %v5891 = vunpack.c.l.b16 %v5009
    %v5892 = vunpack.c.h.b16 %v5009
    %v5893 = vunpack.c.l.b16 %v5010
    %v5894 = vunpack.c.h.b16 %v5010
    %v5895 = vunpack.c.l.b16 %v5011
    %v5896 = vunpack.c.h.b16 %v5011
    %v5897 = vunpack.c.l.b16 %v5012
    %v5898 = vunpack.c.h.b16 %v5012
    %v5899 = vunpack.c.l.b16 %v5013
    %v5900 = vunpack.c.h.b16 %v5013
    %v5901 = vunpack.c.l.b16 %v5014
    %v5902 = vunpack.c.h.b16 %v5014
    %v5903 = vunpack.c.l.b16 %v5015
    %v5904 = vunpack.c.h.b16 %v5015
    %v5905 = vunpack.c.l.b16 %v5016
    %v5906 = vunpack.c.h.b16 %v5016
    %v5907 = vunpack.c.l.b16 %v5017
    %v5908 = vunpack.c.h.b16 %v5017
    %v5909 = vunpack.c.l.b16 %v5018
    %v5910 = vunpack.c.h.b16 %v5018
    %v5911 = vunpack.c.l.b16 %v5019
    %v5912 = vunpack.c.h.b16 %v5019
    %v5913 = vunpack.c.l.b16 %v5020
    %v5914 = vunpack.c.h.b16 %v5020
    %v5915 = vunpack.c.l.b16 %v5021
    %v5916 = vunpack.c.h.b16 %v5021
    %v5917 = vunpack.c.l.b16 %v5022
    %v5918 = vunpack.c.h.b16 %v5022
    %v5919 = vpack.c.b16 %v5349, %v5343
    %v5920 = vpack.c.b16 %v5350, %v5344
    %v5921 = vpack.c.b16 %v5351, %v5345
    %v5922 = vpack.c.b16 %v5352, %v5346
    %v5923 = vpack.c.b16 %v5353, %v5347
    %v5924 = vpack.c.b16 %v5354, %v5348
    %v5925 = vpack.c.b16 %v5361, %v5355
    %v5926 = vpack.c.b16 %v5362, %v5356
    %v5927 = vpack.c.b16 %v5363, %v5357
    %v5928 = vpack.c.b16 %v5364, %v5358
    %v5929 = vpack.c.b16 %v5365, %v5359
    %v5930 = vpack.c.b16 %v5366, %v5360
    %v5931 = vpack.c.b16 %v5373, %v5367
    %v5932 = vpack.c.b16 %v5374, %v5368
    %v5933 = vpack.c.b16 %v5375, %v5369
    %v5934 = vpack.c.b16 %v5376, %v5370
    %v5935 = vpack.c.b16 %v5377, %v5371
    %v5936 = vpack.c.b16 %v5378, %v5372
    %v5937 = vpack.c.b16 %v5385, %v5379
    %v5938 = vpack.c.b16 %v5386, %v5380
    %v5939 = vpack.c.b16 %v5387, %v5381
    %v5940 = vpack.c.b16 %v5388, %v5382
    %v5941 = vpack.c.b16 %v5389, %v5383
    %v5942 = vpack.c.b16 %v5390, %v5384
    %v5943 = vpack.c.b16 %v5397, %v5391
    %v5944 = vpack.c.b16 %v5398, %v5392
    %v5945 = vpack.c.b16 %v5399, %v5393
    %v5946 = vpack.c.b16 %v5400, %v5394
    %v5947 = vpack.c.b16 %v5401, %v5395
    %v5948 = vpack.c.b16 %v5402, %v5396
    %v5949 = vpack.c.b16 %v5409, %v5403
    %v5950 = vpack.c.b16 %v5410, %v5404
    %v5951 = vpack.c.b16 %v5411, %v5405
    %v5952 = vpack.c.b16 %v5412, %v5406
    %v5953 = vpack.c.b16 %v5413, %v5407
    %v5954 = vpack.c.b16 %v5414, %v5408
    %v5955 = vpack.c.b16 %v5421, %v5415
    %v5956 = vpack.c.b16 %v5422, %v5416
    %v5957 = vpack.c.b16 %v5423, %v5417
    %v5958 = vpack.c.b16 %v5424, %v5418
    %v5959 = vpack.c.b16 %v5425, %v5419
    %v5960 = vpack.c.b16 %v5426, %v5420
    %v5961 = vpack.c.b16 %v5433, %v5427
    %v5962 = vpack.c.b16 %v5434, %v5428
    %v5963 = vpack.c.b16 %v5435, %v5429
    %v5964 = vpack.c.b16 %v5436, %v5430
    %v5965 = vpack.c.b16 %v5437, %v5431
    %v5966 = vpack.c.b16 %v5438, %v5432
    %v5967 = vpack.c.b16 %v5445, %v5439
    %v5968 = vpack.c.b16 %v5446, %v5440
    %v5969 = vpack.c.b16 %v5447, %v5441
    %v5970 = vpack.c.b16 %v5448, %v5442
    %v5971 = vpack.c.b16 %v5449, %v5443
    %v5972 = vpack.c.b16 %v5450, %v5444
    %v5973 = vpack.c.b16 %v5457, %v5451
    %v5974 = vpack.c.b16 %v5458, %v5452
    %v5975 = vpack.c.b16 %v5459, %v5453
    %v5976 = vpack.c.b16 %v5460, %v5454
    %v5977 = vpack.c.b16 %v5461, %v5455
    %v5978 = vpack.c.b16 %v5462, %v5456
    %v5979 = vpack.c.b16 %v5469, %v5463
    %v5980 = vpack.c.b16 %v5470, %v5464
    %v5981 = vpack.c.b16 %v5471, %v5465
    %v5982 = vpack.c.b16 %v5472, %v5466
    %v5983 = vpack.c.b16 %v5473, %v5467
    %v5984 = vpack.c.b16 %v5474, %v5468
    %v5985 = vpack.c.b16 %v5481, %v5475
    %v5986 = vpack.c.b16 %v5482, %v5476
    %v5987 = vpack.c.b16 %v5483, %v5477
    %v5988 = vpack.c.b16 %v5484, %v5478
    %v5989 = vpack.c.b16 %v5485, %v5479
    %v5990 = vpack.c.b16 %v5486, %v5480
    %v5991 = vpack.c.b16 %v5493, %v5487
    %v5992 = vpack.c.b16 %v5494, %v5488
    %v5993 = vpack.c.b16 %v5495, %v5489
    %v5994 = vpack.c.b16 %v5496, %v5490
    %v5995 = vpack.c.b16 %v5497, %v5491
    %v5996 = vpack.c.b16 %v5498, %v5492
    %v5997 = vpack.c.b16 %v5505, %v5499
    %v5998 = vpack.c.b16 %v5506, %v5500
    %v5999 = vpack.c.b16 %v5507, %v5501
    %v6000 = vpack.c.b16 %v5508, %v5502
    %v6001 = vpack.c.b16 %v5509, %v5503
    %v6002 = vpack.c.b16 %v5510, %v5504
    %v6003 = vpack.c.b16 %v5517, %v5511
    %v6004 = vpack.c.b16 %v5518, %v5512
    %v6005 = vpack.c.b16 %v5519, %v5513
    %v6006 = vpack.c.b16 %v5520, %v5514
    %v6007 = vpack.c.b16 %v5521, %v5515
    %v6008 = vpack.c.b16 %v5522, %v5516
    %v6009 = vpack.c.b16 %v5529, %v5523
    %v6010 = vpack.c.b16 %v5530, %v5524
    %v6011 = vpack.c.b16 %v5531, %v5525
    %v6012 = vpack.c.b16 %v5532, %v5526
    %v6013 = vpack.c.b16 %v5533, %v5527
    %v6014 = vpack.c.b16 %v5534, %v5528
    %v6015 = vpack.c.b16 %v5541, %v5535
    %v6016 = vpack.c.b16 %v5542, %v5536
    %v6017 = vpack.c.b16 %v5543, %v5537
    %v6018 = vpack.c.b16 %v5544, %v5538
    %v6019 = vpack.c.b16 %v5545, %v5539
    %v6020 = vpack.c.b16 %v5546, %v5540
    %v6021 = vpack.c.b16 %v5553, %v5547
    %v6022 = vpack.c.b16 %v5554, %v5548
    %v6023 = vpack.c.b16 %v5555, %v5549
    %v6024 = vpack.c.b16 %v5556, %v5550
    %v6025 = vpack.c.b16 %v5557, %v5551
    %v6026 = vpack.c.b16 %v5558, %v5552
    %v6027 = vpack.c.b16 %v5565, %v5559
    %v6028 = vpack.c.b16 %v5566, %v5560
    %v6029 = vpack.c.b16 %v5567, %v5561
    %v6030 = vpack.c.b16 %v5568, %v5562
    %v6031 = vpack.c.b16 %v5569, %v5563
    %v6032 = vpack.c.b16 %v5570, %v5564
    %v6033 = vpack.c.b16 %v5577, %v5571
    %v6034 = vpack.c.b16 %v5578, %v5572
    %v6035 = vpack.c.b16 %v5579, %v5573
    %v6036 = vpack.c.b16 %v5580, %v5574
    %v6037 = vpack.c.b16 %v5581, %v5575
    %v6038 = vpack.c.b16 %v5582, %v5576
    %v6039 = vpack.c.b16 %v5589, %v5583
    %v6040 = vpack.c.b16 %v5590, %v5584
    %v6041 = vpack.c.b16 %v5591, %v5585
    %v6042 = vpack.c.b16 %v5592, %v5586
    %v6043 = vpack.c.b16 %v5593, %v5587
    %v6044 = vpack.c.b16 %v5594, %v5588
    %v6045 = vpack.c.b16 %v5601, %v5595
    %v6046 = vpack.c.b16 %v5602, %v5596
    %v6047 = vpack.c.b16 %v5603, %v5597
    %v6048 = vpack.c.b16 %v5604, %v5598
    %v6049 = vpack.c.b16 %v5605, %v5599
    %v6050 = vpack.c.b16 %v5606, %v5600
    %v6051 = vpack.c.b16 %v5613, %v5607
    %v6052 = vpack.c.b16 %v5614, %v5608
    %v6053 = vpack.c.b16 %v5615, %v5609
    %v6054 = vpack.c.b16 %v5616, %v5610
    %v6055 = vpack.c.b16 %v5617, %v5611
    %v6056 = vpack.c.b16 %v5618, %v5612
    %v6057 = vpack.c.b16 %v5625, %v5619
    %v6058 = vpack.c.b16 %v5626, %v5620
    %v6059 = vpack.c.b16 %v5627, %v5621
    %v6060 = vpack.c.b16 %v5628, %v5622
    %v6061 = vpack.c.b16 %v5629, %v5623
    %v6062 = vpack.c.b16 %v5630, %v5624
    %v6063 = vpack.c.b16 %v5637, %v5631
    %v6064 = vpack.c.b16 %v5638, %v5632
    %v6065 = vpack.c.b16 %v5639, %v5633
    %v6066 = vpack.c.b16 %v5640, %v5634
    %v6067 = vpack.c.b16 %v5641, %v5635
    %v6068 = vpack.c.b16 %v5642, %v5636
    %v6069 = vpack.c.b16 %v5649, %v5643
    %v6070 = vpack.c.b16 %v5650, %v5644
    %v6071 = vpack.c.b16 %v5651, %v5645
    %v6072 = vpack.c.b16 %v5652, %v5646
    %v6073 = vpack.c.b16 %v5653, %v5647
    %v6074 = vpack.c.b16 %v5654, %v5648
    %v6075 = vpack.c.b16 %v5661, %v5655
    %v6076 = vpack.c.b16 %v5662, %v5656
    %v6077 = vpack.c.b16 %v5663, %v5657
    %v6078 = vpack.c.b16 %v5664, %v5658
    %v6079 = vpack.c.b16 %v5665, %v5659
    %v6080 = vpack.c.b16 %v5666, %v5660
    %v6081 = vpack.c.b16 %v5673, %v5667
    %v6082 = vpack.c.b16 %v5674, %v5668
    %v6083 = vpack.c.b16 %v5675, %v5669
    %v6084 = vpack.c.b16 %v5676, %v5670
    %v6085 = vpack.c.b16 %v5677, %v5671
    %v6086 = vpack.c.b16 %v5678, %v5672
    %v6087 = vpack.c.b16 %v5685, %v5679
    %v6088 = vpack.c.b16 %v5686, %v5680
    %v6089 = vpack.c.b16 %v5687, %v5681
    %v6090 = vpack.c.b16 %v5688, %v5682
    %v6091 = vpack.c.b16 %v5689, %v5683
    %v6092 = vpack.c.b16 %v5690, %v5684
    %v6093 = vpack.c.b16 %v5697, %v5691
    %v6094 = vpack.c.b16 %v5698, %v5692
    %v6095 = vpack.c.b16 %v5699, %v5693
    %v6096 = vpack.c.b16 %v5700, %v5694
    %v6097 = vpack.c.b16 %v5701, %v5695
    %v6098 = vpack.c.b16 %v5702, %v5696
    %v6099 = vpack.c.b16 %v5709, %v5703
    %v6100 = vpack.c.b16 %v5710, %v5704
    %v6101 = vpack.c.b16 %v5711, %v5705
    %v6102 = vpack.c.b16 %v5712, %v5706
    %v6103 = vpack.c.b16 %v5713, %v5707
    %v6104 = vpack.c.b16 %v5714, %v5708
    %v6105 = vpack.c.b16 %v5721, %v5715
    %v6106 = vpack.c.b16 %v5722, %v5716
    %v6107 = vpack.c.b16 %v5723, %v5717
    %v6108 = vpack.c.b16 %v5724, %v5718
    %v6109 = vpack.c.b16 %v5725, %v5719
    %v6110 = vpack.c.b16 %v5726, %v5720
    %v6111 = vpack.c.b16 %v5733, %v5727
    %v6112 = vpack.c.b16 %v5734, %v5728
    %v6113 = vpack.c.b16 %v5735, %v5729
    %v6114 = vpack.c.b16 %v5736, %v5730
    %v6115 = vpack.c.b16 %v5737, %v5731
    %v6116 = vpack.c.b16 %v5738, %v5732
    %v6117 = vpack.c.b16 %v5745, %v5739
    %v6118 = vpack.c.b16 %v5746, %v5740
    %v6119 = vpack.c.b16 %v5747, %v5741
    %v6120 = vpack.c.b16 %v5748, %v5742
    %v6121 = vpack.c.b16 %v5749, %v5743
    %v6122 = vpack.c.b16 %v5750, %v5744
    %v6123 = vpack.c.b16 %v5757, %v5751
    %v6124 = vpack.c.b16 %v5758, %v5752
    %v6125 = vpack.c.b16 %v5759, %v5753
    %v6126 = vpack.c.b16 %v5760, %v5754
    %v6127 = vpack.c.b16 %v5761, %v5755
    %v6128 = vpack.c.b16 %v5762, %v5756
    %v6129 = vpack.c.b16 %v5769, %v5763
    %v6130 = vpack.c.b16 %v5770, %v5764
    %v6131 = vpack.c.b16 %v5771, %v5765
    %v6132 = vpack.c.b16 %v5772, %v5766
    %v6133 = vpack.c.b16 %v5773, %v5767
    %v6134 = vpack.c.b16 %v5774, %v5768
    %v6135 = vpack.c.b16 %v5781, %v5775
    %v6136 = vpack.c.b16 %v5782, %v5776
    %v6137 = vpack.c.b16 %v5783, %v5777
    %v6138 = vpack.c.b16 %v5784, %v5778
    %v6139 = vpack.c.b16 %v5785, %v5779
    %v6140 = vpack.c.b16 %v5786, %v5780
    %v6141 = vpack.c.b16 %v5793, %v5787
    %v6142 = vpack.c.b16 %v5794, %v5788
    %v6143 = vpack.c.b16 %v5795, %v5789
    %v6144 = vpack.c.b16 %v5796, %v5790
    %v6145 = vpack.c.b16 %v5797, %v5791
    %v6146 = vpack.c.b16 %v5798, %v5792
    %v6147 = vpack.c.b16 %v5805, %v5799
    %v6148 = vpack.c.b16 %v5806, %v5800
    %v6149 = vpack.c.b16 %v5807, %v5801
    %v6150 = vpack.c.b16 %v5808, %v5802
    %v6151 = vpack.c.b16 %v5809, %v5803
    %v6152 = vpack.c.b16 %v5810, %v5804
    %v6153 = vpack.c.b16 %v5817, %v5811
    %v6154 = vpack.c.b16 %v5818, %v5812
    %v6155 = vpack.c.b16 %v5819, %v5813
    %v6156 = vpack.c.b16 %v5820, %v5814
    %v6157 = vpack.c.b16 %v5821, %v5815
    %v6158 = vpack.c.b16 %v5822, %v5816
    %v6159 = vpack.c.b16 %v5829, %v5823
    %v6160 = vpack.c.b16 %v5830, %v5824
    %v6161 = vpack.c.b16 %v5831, %v5825
    %v6162 = vpack.c.b16 %v5832, %v5826
    %v6163 = vpack.c.b16 %v5833, %v5827
    %v6164 = vpack.c.b16 %v5834, %v5828
    %v6165 = vpack.c.b16 %v5841, %v5835
    %v6166 = vpack.c.b16 %v5842, %v5836
    %v6167 = vpack.c.b16 %v5843, %v5837
    %v6168 = vpack.c.b16 %v5844, %v5838
    %v6169 = vpack.c.b16 %v5845, %v5839
    %v6170 = vpack.c.b16 %v5846, %v5840
    %v6171 = vpack.c.b16 %v5853, %v5847
    %v6172 = vpack.c.b16 %v5854, %v5848
    %v6173 = vpack.c.b16 %v5855, %v5849
    %v6174 = vpack.c.b16 %v5856, %v5850
    %v6175 = vpack.c.b16 %v5857, %v5851
    %v6176 = vpack.c.b16 %v5858, %v5852
    %v6177 = vpack.c.b16 %v5865, %v5859
    %v6178 = vpack.c.b16 %v5866, %v5860
    %v6179 = vpack.c.b16 %v5867, %v5861
    %v6180 = vpack.c.b16 %v5868, %v5862
    %v6181 = vpack.c.b16 %v5869, %v5863
    %v6182 = vpack.c.b16 %v5870, %v5864
    %v6183 = vpack.c.b16 %v5877, %v5871
    %v6184 = vpack.c.b16 %v5878, %v5872
    %v6185 = vpack.c.b16 %v5879, %v5873
    %v6186 = vpack.c.b16 %v5880, %v5874
    %v6187 = vpack.c.b16 %v5881, %v5875
    %v6188 = vpack.c.b16 %v5882, %v5876
    %v6189 = vpack.c.b16 %v5889, %v5883
    %v6190 = vpack.c.b16 %v5890, %v5884
    %v6191 = vpack.c.b16 %v5891, %v5885
    %v6192 = vpack.c.b16 %v5892, %v5886
    %v6193 = vpack.c.b16 %v5893, %v5887
    %v6194 = vpack.c.b16 %v5894, %v5888
    %v6195 = vpack.c.b16 %v5901, %v5895
    %v6196 = vpack.c.b16 %v5902, %v5896
    %v6197 = vpack.c.b16 %v5903, %v5897
    %v6198 = vpack.c.b16 %v5904, %v5898
    %v6199 = vpack.c.b16 %v5905, %v5899
    %v6200 = vpack.c.b16 %v5906, %v5900
    %v6201 = vpack.c.b16 %v5913, %v5907
    %v6202 = vpack.c.b16 %v5914, %v5908
    %v6203 = vpack.c.b16 %v5915, %v5909
    %v6204 = vpack.c.b16 %v5916, %v5910
    %v6205 = vpack.c.b16 %v5917, %v5911
    %v6206 = vpack.c.b16 %v5918, %v5912
    %6495 = vmatprep.subr.bf16.mxu0 %v5920
    %6496 = vmatpush1.bf16.msra.mxu0 %v5919
    %6497 = vmatprep.subr.bf16.mxu0 %v5926
    %6498 = vmatpush1.bf16.msra.mxu0 %v5925
    %6499 = vmatprep.subr.bf16.mxu0 %v5932
    %6500 = vmatpush1.bf16.msra.mxu0 %v5931
    %6501 = vmatprep.subr.bf16.mxu0 %v5938
    %6502 = vmatpush1.bf16.msra.mxu0 %v5937
    %6503 = vmatprep.subr.bf16.mxu0 %v5944
    %6504 = vmatpush1.bf16.msra.mxu0 %v5943
    %6505 = vmatprep.subr.bf16.mxu0 %v5950
    %6506 = vmatpush1.bf16.msra.mxu0 %v5949
    %6507 = vmatprep.subr.bf16.mxu0 %v5956
    %6508 = vmatpush1.bf16.msra.mxu0 %v5955
    %6509 = vmatprep.subr.bf16.mxu0 %v5962
    %6510 = vmatpush1.bf16.msra.mxu0 %v5961
    %6511 = vmatprep.subr.bf16.mxu0 %v5968
    %6512 = vmatpush1.bf16.msra.mxu0 %v5967
    %6513 = vmatprep.subr.bf16.mxu0 %v5974
    %6514 = vmatpush1.bf16.msra.mxu0 %v5973
    %6515 = vmatprep.subr.bf16.mxu0 %v5980
    %6516 = vmatpush1.bf16.msra.mxu0 %v5979
    %6517 = vmatprep.subr.bf16.mxu0 %v5986
    %6518 = vmatpush1.bf16.msra.mxu0 %v5985
    %6519 = vmatprep.subr.bf16.mxu0 %v5992
    %6520 = vmatpush1.bf16.msra.mxu0 %v5991
    %6521 = vmatprep.subr.bf16.mxu0 %v5998
    %6522 = vmatpush1.bf16.msra.mxu0 %v5997
    %6523 = vmatprep.subr.bf16.mxu0 %v6004
    %6524 = vmatpush1.bf16.msra.mxu0 %v6003
    %6525 = vmatprep.subr.bf16.mxu0 %v6010
    %6526 = vmatpush1.bf16.msra.mxu0 %v6009
    %6527 = vmatprep.mubr.bf16.mxu0 %v250
    %6528 = vmatmul.mubr.bf16.gmra.mrb[0].mxu0 %v249
    %v6529 = vpop.f32.mrb[0].mxu0
    %v6530 = vadd.f32 %v5028, %v6529
    %v6531 = vpop.f32.mrb[0].mxu0
    %v6532 = vadd.f32 %v5032, %v6531
    %v6533 = vpop.f32.mrb[0].mxu0
    %v6534 = vadd.f32 %v5028, %v6533
    %v6535 = vpop.f32.mrb[0].mxu0
    %v6536 = vadd.f32 %v5032, %v6535
    %6537 = vmatprep.mubr.bf16.mxu0 %v256
    %6538 = vmatmul.mubr.bf16.gmra.mrb[0].mxu0 %v255
    %v6539 = vpop.f32.mrb[0].mxu0
    %v6540 = vadd.f32 %v5028, %v6539
    %v6541 = vpop.f32.mrb[0].mxu0
    %v6542 = vadd.f32 %v5032, %v6541
    %v6543 = vpop.f32.mrb[0].mxu0
    %v6544 = vadd.f32 %v5028, %v6543
    %v6545 = vpop.f32.mrb[0].mxu0
    %v6546 = vadd.f32 %v5032, %v6545
    %6547 = vdwg.mxu0
    %6548 = vmatprep.subr.bf16.mxu0 %v6016
    %6549 = vmatpush1.bf16.msra.mxu0 %v6015
    %6550 = vmatprep.subr.bf16.mxu0 %v6022
    %6551 = vmatpush1.bf16.msra.mxu0 %v6021
    %6552 = vmatprep.subr.bf16.mxu0 %v6028
    %6553 = vmatpush1.bf16.msra.mxu0 %v6027
    %6554 = vmatprep.subr.bf16.mxu0 %v6034
    %6555 = vmatpush1.bf16.msra.mxu0 %v6033
    %6556 = vmatprep.subr.bf16.mxu0 %v6040
    %6557 = vmatpush1.bf16.msra.mxu0 %v6039
    %6558 = vmatprep.subr.bf16.mxu0 %v6046
    %6559 = vmatpush1.bf16.msra.mxu0 %v6045
    %6560 = vmatprep.subr.bf16.mxu0 %v6052
    %6561 = vmatpush1.bf16.msra.mxu0 %v6051
    %6562 = vmatprep.subr.bf16.mxu0 %v6058
    %6563 = vmatpush1.bf16.msra.mxu0 %v6057
    %6564 = vmatprep.subr.bf16.mxu0 %v6064
    %6565 = vmatpush1.bf16.msra.mxu0 %v6063
    %6566 = vmatprep.subr.bf16.mxu0 %v6070
    %6567 = vmatpush1.bf16.msra.mxu0 %v6069
    %6568 = vmatprep.subr.bf16.mxu0 %v6076
    %6569 = vmatpush1.bf16.msra.mxu0 %v6075
    %6570 = vmatprep.subr.bf16.mxu0 %v6082
    %6571 = vmatpush1.bf16.msra.mxu0 %v6081
    %6572 = vmatprep.subr.bf16.mxu0 %v6088
    %6573 = vmatpush1.bf16.msra.mxu0 %v6087
    %6574 = vmatprep.subr.bf16.mxu0 %v6094
    %6575 = vmatpush1.bf16.msra.mxu0 %v6093
    %6576 = vmatprep.subr.bf16.mxu0 %v6100
    %6577 = vmatpush1.bf16.msra.mxu0 %v6099
    %6578 = vmatprep.subr.bf16.mxu0 %v6106
    %6579 = vmatpush1.bf16.msra.mxu0 %v6105
    %6580 = vmatprep.mubr.bf16.mxu0 %v252
    %6581 = vmatmul.mubr.bf16.gmra.mrb[0].mxu0 %v251
    %v6582 = vpop.f32.mrb[0].mxu0
    %v6583 = vadd.f32 %v6530, %v6582
    %v6584 = vpop.f32.mrb[0].mxu0
    %v6585 = vadd.f32 %v6532, %v6584
    %v6586 = vpop.f32.mrb[0].mxu0
    %v6587 = vadd.f32 %v6534, %v6586
    %v6588 = vpop.f32.mrb[0].mxu0
    %v6589 = vadd.f32 %v6536, %v6588
    %6590 = vmatprep.mubr.bf16.mxu0 %v258
    %6591 = vmatmul.mubr.bf16.gmra.mrb[0].mxu0 %v257
    %v6592 = vpop.f32.mrb[0].mxu0
    %v6593 = vadd.f32 %v6540, %v6592
    %v6594 = vpop.f32.mrb[0].mxu0
    %v6595 = vadd.f32 %v6542, %v6594
    %v6596 = vpop.f32.mrb[0].mxu0
    %v6597 = vadd.f32 %v6544, %v6596
    %v6598 = vpop.f32.mrb[0].mxu0
    %v6599 = vadd.f32 %v6546, %v6598
    %6600 = vdwg.mxu0
    %6601 = vmatprep.subr.bf16.mxu0 %v6112
    %6602 = vmatpush1.bf16.msra.mxu0 %v6111
    %6603 = vmatprep.subr.bf16.mxu0 %v6118
    %6604 = vmatpush1.bf16.msra.mxu0 %v6117
    %6605 = vmatprep.subr.bf16.mxu0 %v6124
    %6606 = vmatpush1.bf16.msra.mxu0 %v6123
    %6607 = vmatprep.subr.bf16.mxu0 %v6130
    %6608 = vmatpush1.bf16.msra.mxu0 %v6129
    %6609 = vmatprep.subr.bf16.mxu0 %v6136
    %6610 = vmatpush1.bf16.msra.mxu0 %v6135
    %6611 = vmatprep.subr.bf16.mxu0 %v6142
    %6612 = vmatpush1.bf16.msra.mxu0 %v6141
    %6613 = vmatprep.subr.bf16.mxu0 %v6148
    %6614 = vmatpush1.bf16.msra.mxu0 %v6147
    %6615 = vmatprep.subr.bf16.mxu0 %v6154
    %6616 = vmatpush1.bf16.msra.mxu0 %v6153
    %6617 = vmatprep.subr.bf16.mxu0 %v6160
    %6618 = vmatpush1.bf16.msra.mxu0 %v6159
    %6619 = vmatprep.subr.bf16.mxu0 %v6166
    %6620 = vmatpush1.bf16.msra.mxu0 %v6165
    %6621 = vmatprep.subr.bf16.mxu0 %v6172
    %6622 = vmatpush1.bf16.msra.mxu0 %v6171
    %6623 = vmatprep.subr.bf16.mxu0 %v6178
    %6624 = vmatpush1.bf16.msra.mxu0 %v6177
    %6625 = vmatprep.subr.bf16.mxu0 %v6184
    %6626 = vmatpush1.bf16.msra.mxu0 %v6183
    %6627 = vmatprep.subr.bf16.mxu0 %v6190
    %6628 = vmatpush1.bf16.msra.mxu0 %v6189
    %6629 = vmatprep.subr.bf16.mxu0 %v6196
    %6630 = vmatpush1.bf16.msra.mxu0 %v6195
    %6631 = vmatprep.subr.bf16.mxu0 %v6202
    %6632 = vmatpush1.bf16.msra.mxu0 %v6201
    %6633 = vmatprep.mubr.bf16.mxu0 %v254
    %6634 = vmatmul.mubr.bf16.gmra.mrb[0].mxu0 %v253
    %v6635 = vpop.f32.mrb[0].mxu0
    %v6636 = vadd.f32 %v6583, %v6635
    %v6637 = vpop.f32.mrb[0].mxu0
    %v6638 = vadd.f32 %v6585, %v6637
    %v6639 = vpop.f32.mrb[0].mxu0
    %v6640 = vadd.f32 %v6587, %v6639
    %v6641 = vpop.f32.mrb[0].mxu0
    %v6642 = vadd.f32 %v6589, %v6641
    %6643 = vmatprep.mubr.bf16.mxu0 %v260
    %6644 = vmatmul.mubr.bf16.gmra.mrb[0].mxu0 %v259
    %v6645 = vpop.f32.mrb[0].mxu0
    %v6646 = vadd.f32 %v6593, %v6645
    %v6647 = vpop.f32.mrb[0].mxu0
    %v6648 = vadd.f32 %v6595, %v6647
    %v6649 = vpop.f32.mrb[0].mxu0
    %v6650 = vadd.f32 %v6597, %v6649
    %v6651 = vpop.f32.mrb[0].mxu0
    %v6652 = vadd.f32 %v6599, %v6651
    %6653 = vdwg.mxu0
    %6654 = vmatprep.subr.bf16.mxu0 %v5922
    %6655 = vmatpush1.bf16.msra.mxu0 %v5921
    %6656 = vmatprep.subr.bf16.mxu0 %v5928
    %6657 = vmatpush1.bf16.msra.mxu0 %v5927
    %6658 = vmatprep.subr.bf16.mxu0 %v5934
    %6659 = vmatpush1.bf16.msra.mxu0 %v5933
    %6660 = vmatprep.subr.bf16.mxu0 %v5940
    %6661 = vmatpush1.bf16.msra.mxu0 %v5939
    %6662 = vmatprep.subr.bf16.mxu0 %v5946
    %6663 = vmatpush1.bf16.msra.mxu0 %v5945
    %6664 = vmatprep.subr.bf16.mxu0 %v5952
    %6665 = vmatpush1.bf16.msra.mxu0 %v5951
    %6666 = vmatprep.subr.bf16.mxu0 %v5958
    %6667 = vmatpush1.bf16.msra.mxu0 %v5957
    %6668 = vmatprep.subr.bf16.mxu0 %v5964
    %6669 = vmatpush1.bf16.msra.mxu0 %v5963
    %6670 = vmatprep.subr.bf16.mxu0 %v5970
    %6671 = vmatpush1.bf16.msra.mxu0 %v5969
    %6672 = vmatprep.subr.bf16.mxu0 %v5976
    %6673 = vmatpush1.bf16.msra.mxu0 %v5975
    %6674 = vmatprep.subr.bf16.mxu0 %v5982
    %6675 = vmatpush1.bf16.msra.mxu0 %v5981
    %6676 = vmatprep.subr.bf16.mxu0 %v5988
    %6677 = vmatpush1.bf16.msra.mxu0 %v5987
    %6678 = vmatprep.subr.bf16.mxu0 %v5994
    %6679 = vmatpush1.bf16.msra.mxu0 %v5993
    %6680 = vmatprep.subr.bf16.mxu0 %v6000
    %6681 = vmatpush1.bf16.msra.mxu0 %v5999
    %6682 = vmatprep.subr.bf16.mxu0 %v6006
    %6683 = vmatpush1.bf16.msra.mxu0 %v6005
    %6684 = vmatprep.subr.bf16.mxu0 %v6012
    %6685 = vmatpush1.bf16.msra.mxu0 %v6011
    %6686 = vmatprep.mubr.bf16.mxu0 %v250
    %6687 = vmatmul.mubr.bf16.gmra.mrb[0].mxu0 %v249
    %v6688 = vpop.f32.mrb[0].mxu0
    %v6689 = vadd.f32 %v5036, %v6688
    %v6690 = vpop.f32.mrb[0].mxu0
    %v6691 = vadd.f32 %v5040, %v6690
    %v6692 = vpop.f32.mrb[0].mxu0
    %v6693 = vadd.f32 %v5036, %v6692
    %v6694 = vpop.f32.mrb[0].mxu0
    %v6695 = vadd.f32 %v5040, %v6694
    %6696 = vmatprep.mubr.bf16.mxu0 %v256
    %6697 = vmatmul.mubr.bf16.gmra.mrb[0].mxu0 %v255
    %v6698 = vpop.f32.mrb[0].mxu0
    %v6699 = vadd.f32 %v5036, %v6698
    %v6700 = vpop.f32.mrb[0].mxu0
    %v6701 = vadd.f32 %v5040, %v6700
    %v6702 = vpop.f32.mrb[0].mxu0
    %v6703 = vadd.f32 %v5036, %v6702
    %v6704 = vpop.f32.mrb[0].mxu0
    %v6705 = vadd.f32 %v5040, %v6704
    %6706 = vdwg.mxu0
    %6707 = vmatprep.subr.bf16.mxu0 %v6018
    %6708 = vmatpush1.bf16.msra.mxu0 %v6017
    %6709 = vmatprep.subr.bf16.mxu0 %v6024
    %6710 = vmatpush1.bf16.msra.mxu0 %v6023
    %6711 = vmatprep.subr.bf16.mxu0 %v6030
    %6712 = vmatpush1.bf16.msra.mxu0 %v6029
    %6713 = vmatprep.subr.bf16.mxu0 %v6036
    %6714 = vmatpush1.bf16.msra.mxu0 %v6035
    %6715 = vmatprep.subr.bf16.mxu0 %v6042
    %6716 = vmatpush1.bf16.msra.mxu0 %v6041
    %6717 = vmatprep.subr.bf16.mxu0 %v6048
    %6718 = vmatpush1.bf16.msra.mxu0 %v6047
    %6719 = vmatprep.subr.bf16.mxu0 %v6054
    %6720 = vmatpush1.bf16.msra.mxu0 %v6053
    %6721 = vmatprep.subr.bf16.mxu0 %v6060
    %6722 = vmatpush1.bf16.msra.mxu0 %v6059
    %6723 = vmatprep.subr.bf16.mxu0 %v6066
    %6724 = vmatpush1.bf16.msra.mxu0 %v6065
    %6725 = vmatprep.subr.bf16.mxu0 %v6072
    %6726 = vmatpush1.bf16.msra.mxu0 %v6071
    %6727 = vmatprep.subr.bf16.mxu0 %v6078
    %6728 = vmatpush1.bf16.msra.mxu0 %v6077
    %6729 = vmatprep.subr.bf16.mxu0 %v6084
    %6730 = vmatpush1.bf16.msra.mxu0 %v6083
    %6731 = vmatprep.subr.bf16.mxu0 %v6090
    %6732 = vmatpush1.bf16.msra.mxu0 %v6089
    %6733 = vmatprep.subr.bf16.mxu0 %v6096
    %6734 = vmatpush1.bf16.msra.mxu0 %v6095
    %6735 = vmatprep.subr.bf16.mxu0 %v6102
    %6736 = vmatpush1.bf16.msra.mxu0 %v6101
    %6737 = vmatprep.subr.bf16.mxu0 %v6108
    %6738 = vmatpush1.bf16.msra.mxu0 %v6107
    %6739 = vmatprep.mubr.bf16.mxu0 %v252
    %6740 = vmatmul.mubr.bf16.gmra.mrb[0].mxu0 %v251
    %v6741 = vpop.f32.mrb[0].mxu0
    %v6742 = vadd.f32 %v6689, %v6741
    %v6743 = vpop.f32.mrb[0].mxu0
    %v6744 = vadd.f32 %v6691, %v6743
    %v6745 = vpop.f32.mrb[0].mxu0
    %v6746 = vadd.f32 %v6693, %v6745
    %v6747 = vpop.f32.mrb[0].mxu0
    %v6748 = vadd.f32 %v6695, %v6747
    %6749 = vmatprep.mubr.bf16.mxu0 %v258
    %6750 = vmatmul.mubr.bf16.gmra.mrb[0].mxu0 %v257
    %v6751 = vpop.f32.mrb[0].mxu0
    %v6752 = vadd.f32 %v6699, %v6751
    %v6753 = vpop.f32.mrb[0].mxu0
    %v6754 = vadd.f32 %v6701, %v6753
    %v6755 = vpop.f32.mrb[0].mxu0
    %v6756 = vadd.f32 %v6703, %v6755
    %v6757 = vpop.f32.mrb[0].mxu0
    %v6758 = vadd.f32 %v6705, %v6757
    %6759 = vdwg.mxu0
    %6760 = vmatprep.subr.bf16.mxu0 %v6114
    %6761 = vmatpush1.bf16.msra.mxu0 %v6113
    %6762 = vmatprep.subr.bf16.mxu0 %v6120
    %6763 = vmatpush1.bf16.msra.mxu0 %v6119
    %6764 = vmatprep.subr.bf16.mxu0 %v6126
    %6765 = vmatpush1.bf16.msra.mxu0 %v6125
    %6766 = vmatprep.subr.bf16.mxu0 %v6132
    %6767 = vmatpush1.bf16.msra.mxu0 %v6131
    %6768 = vmatprep.subr.bf16.mxu0 %v6138
    %6769 = vmatpush1.bf16.msra.mxu0 %v6137
    %6770 = vmatprep.subr.bf16.mxu0 %v6144
    %6771 = vmatpush1.bf16.msra.mxu0 %v6143
    %6772 = vmatprep.subr.bf16.mxu0 %v6150
    %6773 = vmatpush1.bf16.msra.mxu0 %v6149
    %6774 = vmatprep.subr.bf16.mxu0 %v6156
    %6775 = vmatpush1.bf16.msra.mxu0 %v6155
    %6776 = vmatprep.subr.bf16.mxu0 %v6162
    %6777 = vmatpush1.bf16.msra.mxu0 %v6161
    %6778 = vmatprep.subr.bf16.mxu0 %v6168
    %6779 = vmatpush1.bf16.msra.mxu0 %v6167
    %6780 = vmatprep.subr.bf16.mxu0 %v6174
    %6781 = vmatpush1.bf16.msra.mxu0 %v6173
    %6782 = vmatprep.subr.bf16.mxu0 %v6180
    %6783 = vmatpush1.bf16.msra.mxu0 %v6179
    %6784 = vmatprep.subr.bf16.mxu0 %v6186
    %6785 = vmatpush1.bf16.msra.mxu0 %v6185
    %6786 = vmatprep.subr.bf16.mxu0 %v6192
    %6787 = vmatpush1.bf16.msra.mxu0 %v6191
    %6788 = vmatprep.subr.bf16.mxu0 %v6198
    %6789 = vmatpush1.bf16.msra.mxu0 %v6197
    %6790 = vmatprep.subr.bf16.mxu0 %v6204
    %6791 = vmatpush1.bf16.msra.mxu0 %v6203
    %6792 = vmatprep.mubr.bf16.mxu0 %v254
    %6793 = vmatmul.mubr.bf16.gmra.mrb[0].mxu0 %v253
    %v6794 = vpop.f32.mrb[0].mxu0
    %v6795 = vadd.f32 %v6742, %v6794
    %v6796 = vpop.f32.mrb[0].mxu0
    %v6797 = vadd.f32 %v6744, %v6796
    %v6798 = vpop.f32.mrb[0].mxu0
    %v6799 = vadd.f32 %v6746, %v6798
    %v6800 = vpop.f32.mrb[0].mxu0
    %v6801 = vadd.f32 %v6748, %v6800
    %6802 = vmatprep.mubr.bf16.mxu0 %v260
    %6803 = vmatmul.mubr.bf16.gmra.mrb[0].mxu0 %v259
    %v6804 = vpop.f32.mrb[0].mxu0
    %v6805 = vadd.f32 %v6752, %v6804
    %v6806 = vpop.f32.mrb[0].mxu0
    %v6807 = vadd.f32 %v6754, %v6806
    %v6808 = vpop.f32.mrb[0].mxu0
    %v6809 = vadd.f32 %v6756, %v6808
    %v6810 = vpop.f32.mrb[0].mxu0
    %v6811 = vadd.f32 %v6758, %v6810
    %6812 = vdwg.mxu0
    %6813 = vmatprep.subr.bf16.mxu0 %v5924
    %6814 = vmatpush1.bf16.msra.mxu0 %v5923
    %6815 = vmatprep.subr.bf16.mxu0 %v5930
    %6816 = vmatpush1.bf16.msra.mxu0 %v5929
    %6817 = vmatprep.subr.bf16.mxu0 %v5936
    %6818 = vmatpush1.bf16.msra.mxu0 %v5935
    %6819 = vmatprep.subr.bf16.mxu0 %v5942
    %6820 = vmatpush1.bf16.msra.mxu0 %v5941
    %6821 = vmatprep.subr.bf16.mxu0 %v5948
    %6822 = vmatpush1.bf16.msra.mxu0 %v5947
    %6823 = vmatprep.subr.bf16.mxu0 %v5954
    %6824 = vmatpush1.bf16.msra.mxu0 %v5953
    %6825 = vmatprep.subr.bf16.mxu0 %v5960
    %6826 = vmatpush1.bf16.msra.mxu0 %v5959
    %6827 = vmatprep.subr.bf16.mxu0 %v5966
    %6828 = vmatpush1.bf16.msra.mxu0 %v5965
    %6829 = vmatprep.subr.bf16.mxu0 %v5972
    %6830 = vmatpush1.bf16.msra.mxu0 %v5971
    %6831 = vmatprep.subr.bf16.mxu0 %v5978
    %6832 = vmatpush1.bf16.msra.mxu0 %v5977
    %6833 = vmatprep.subr.bf16.mxu0 %v5984
    %6834 = vmatpush1.bf16.msra.mxu0 %v5983
    %6835 = vmatprep.subr.bf16.mxu0 %v5990
    %6836 = vmatpush1.bf16.msra.mxu0 %v5989
    %6837 = vmatprep.subr.bf16.mxu0 %v5996
    %6838 = vmatpush1.bf16.msra.mxu0 %v5995
    %6839 = vmatprep.subr.bf16.mxu0 %v6002
    %6840 = vmatpush1.bf16.msra.mxu0 %v6001
    %6841 = vmatprep.subr.bf16.mxu0 %v6008
    %6842 = vmatpush1.bf16.msra.mxu0 %v6007
    %6843 = vmatprep.subr.bf16.mxu0 %v6014
    %6844 = vmatpush1.bf16.msra.mxu0 %v6013
    %6845 = vmatprep.mubr.bf16.mxu0 %v250
    %6846 = vmatmul.mubr.bf16.gmra.mrb[0].mxu0 %v249
    %v6847 = vpop.f32.mrb[0].mxu0
    %v6848 = vadd.f32 %v5044, %v6847
    %v6849 = vpop.f32.mrb[0].mxu0
    %v6850 = vadd.f32 %v5048, %v6849
    %v6851 = vpop.f32.mrb[0].mxu0
    %v6852 = vadd.f32 %v5044, %v6851
    %v6853 = vpop.f32.mrb[0].mxu0
    %v6854 = vadd.f32 %v5048, %v6853
    %6855 = vmatprep.mubr.bf16.mxu0 %v256
    %6856 = vmatmul.mubr.bf16.gmra.mrb[0].mxu0 %v255
    %v6857 = vpop.f32.mrb[0].mxu0
    %v6858 = vadd.f32 %v5044, %v6857
    %v6859 = vpop.f32.mrb[0].mxu0
    %v6860 = vadd.f32 %v5048, %v6859
    %v6861 = vpop.f32.mrb[0].mxu0
    %v6862 = vadd.f32 %v5044, %v6861
    %v6863 = vpop.f32.mrb[0].mxu0
    %v6864 = vadd.f32 %v5048, %v6863
    %6865 = vdwg.mxu0
    %6866 = vmatprep.subr.bf16.mxu0 %v6020
    %6867 = vmatpush1.bf16.msra.mxu0 %v6019
    %6868 = vmatprep.subr.bf16.mxu0 %v6026
    %6869 = vmatpush1.bf16.msra.mxu0 %v6025
    %6870 = vmatprep.subr.bf16.mxu0 %v6032
    %6871 = vmatpush1.bf16.msra.mxu0 %v6031
    %6872 = vmatprep.subr.bf16.mxu0 %v6038
    %6873 = vmatpush1.bf16.msra.mxu0 %v6037
    %6874 = vmatprep.subr.bf16.mxu0 %v6044
    %6875 = vmatpush1.bf16.msra.mxu0 %v6043
    %6876 = vmatprep.subr.bf16.mxu0 %v6050
    %6877 = vmatpush1.bf16.msra.mxu0 %v6049
    %6878 = vmatprep.subr.bf16.mxu0 %v6056
    %6879 = vmatpush1.bf16.msra.mxu0 %v6055
    %6880 = vmatprep.subr.bf16.mxu0 %v6062
    %6881 = vmatpush1.bf16.msra.mxu0 %v6061
    %6882 = vmatprep.subr.bf16.mxu0 %v6068
    %6883 = vmatpush1.bf16.msra.mxu0 %v6067
    %6884 = vmatprep.subr.bf16.mxu0 %v6074
    %6885 = vmatpush1.bf16.msra.mxu0 %v6073
    %6886 = vmatprep.subr.bf16.mxu0 %v6080
    %6887 = vmatpush1.bf16.msra.mxu0 %v6079
    %6888 = vmatprep.subr.bf16.mxu0 %v6086
    %6889 = vmatpush1.bf16.msra.mxu0 %v6085
    %6890 = vmatprep.subr.bf16.mxu0 %v6092
    %6891 = vmatpush1.bf16.msra.mxu0 %v6091
    %6892 = vmatprep.subr.bf16.mxu0 %v6098
    %6893 = vmatpush1.bf16.msra.mxu0 %v6097
    %6894 = vmatprep.subr.bf16.mxu0 %v6104
    %6895 = vmatpush1.bf16.msra.mxu0 %v6103
    %6896 = vmatprep.subr.bf16.mxu0 %v6110
    %6897 = vmatpush1.bf16.msra.mxu0 %v6109
    %6898 = vmatprep.mubr.bf16.mxu0 %v252
    %6899 = vmatmul.mubr.bf16.gmra.mrb[0].mxu0 %v251
    %v6900 = vpop.f32.mrb[0].mxu0
    %v6901 = vadd.f32 %v6848, %v6900
    %v6902 = vpop.f32.mrb[0].mxu0
    %v6903 = vadd.f32 %v6850, %v6902
    %v6904 = vpop.f32.mrb[0].mxu0
    %v6905 = vadd.f32 %v6852, %v6904
    %v6906 = vpop.f32.mrb[0].mxu0
    %v6907 = vadd.f32 %v6854, %v6906
    %6908 = vmatprep.mubr.bf16.mxu0 %v258
    %6909 = vmatmul.mubr.bf16.gmra.mrb[0].mxu0 %v257
    %v6910 = vpop.f32.mrb[0].mxu0
    %v6911 = vadd.f32 %v6858, %v6910
    %v6912 = vpop.f32.mrb[0].mxu0
    %v6913 = vadd.f32 %v6860, %v6912
    %v6914 = vpop.f32.mrb[0].mxu0
    %v6915 = vadd.f32 %v6862, %v6914
    %v6916 = vpop.f32.mrb[0].mxu0
    %v6917 = vadd.f32 %v6864, %v6916
    %6918 = vdwg.mxu0
    %6919 = vmatprep.subr.bf16.mxu0 %v6116
    %6920 = vmatpush1.bf16.msra.mxu0 %v6115
    %6921 = vmatprep.subr.bf16.mxu0 %v6122
    %6922 = vmatpush1.bf16.msra.mxu0 %v6121
    %6923 = vmatprep.subr.bf16.mxu0 %v6128
    %6924 = vmatpush1.bf16.msra.mxu0 %v6127
    %6925 = vmatprep.subr.bf16.mxu0 %v6134
    %6926 = vmatpush1.bf16.msra.mxu0 %v6133
    %6927 = vmatprep.subr.bf16.mxu0 %v6140
    %6928 = vmatpush1.bf16.msra.mxu0 %v6139
    %6929 = vmatprep.subr.bf16.mxu0 %v6146
    %6930 = vmatpush1.bf16.msra.mxu0 %v6145
    %6931 = vmatprep.subr.bf16.mxu0 %v6152
    %6932 = vmatpush1.bf16.msra.mxu0 %v6151
    %6933 = vmatprep.subr.bf16.mxu0 %v6158
    %6934 = vmatpush1.bf16.msra.mxu0 %v6157
    %6935 = vmatprep.subr.bf16.mxu0 %v6164
    %6936 = vmatpush1.bf16.msra.mxu0 %v6163
    %6937 = vmatprep.subr.bf16.mxu0 %v6170
    %6938 = vmatpush1.bf16.msra.mxu0 %v6169
    %6939 = vmatprep.subr.bf16.mxu0 %v6176
    %6940 = vmatpush1.bf16.msra.mxu0 %v6175
    %6941 = vmatprep.subr.bf16.mxu0 %v6182
    %6942 = vmatpush1.bf16.msra.mxu0 %v6181
    %6943 = vmatprep.subr.bf16.mxu0 %v6188
    %6944 = vmatpush1.bf16.msra.mxu0 %v6187
    %6945 = vmatprep.subr.bf16.mxu0 %v6194
    %6946 = vmatpush1.bf16.msra.mxu0 %v6193
    %6947 = vmatprep.subr.bf16.mxu0 %v6200
    %6948 = vmatpush1.bf16.msra.mxu0 %v6199
    %6949 = vmatprep.subr.bf16.mxu0 %v6206
    %6950 = vmatpush1.bf16.msra.mxu0 %v6205
    %6951 = vmatprep.mubr.bf16.mxu0 %v254
    %6952 = vmatmul.mubr.bf16.gmra.mrb[0].mxu0 %v253
    %v6953 = vpop.f32.mrb[0].mxu0
    %v6954 = vadd.f32 %v6901, %v6953
    %v6955 = vpop.f32.mrb[0].mxu0
    %v6956 = vadd.f32 %v6903, %v6955
    %v6957 = vpop.f32.mrb[0].mxu0
    %v6958 = vadd.f32 %v6905, %v6957
    %v6959 = vpop.f32.mrb[0].mxu0
    %v6960 = vadd.f32 %v6907, %v6959
    %6961 = vmatprep.mubr.bf16.mxu0 %v260
    %6962 = vmatmul.mubr.bf16.gmra.mrb[0].mxu0 %v259
    %v6963 = vpop.f32.mrb[0].mxu0
    %v6964 = vadd.f32 %v6911, %v6963
    %v6965 = vpop.f32.mrb[0].mxu0
    %v6966 = vadd.f32 %v6913, %v6965
    %v6967 = vpop.f32.mrb[0].mxu0
    %v6968 = vadd.f32 %v6915, %v6967
    %v6969 = vpop.f32.mrb[0].mxu0
    %v6970 = vadd.f32 %v6917, %v6969
    %6971 = vdwg.mxu0
    %v6972 = vmul.f32 %v2162, 0.125
    %v6973 = vmul.f32 %v2164, 0.125
    %v6974 = vmul.f32 %v2321, 0.125
    %v6975 = vmul.f32 %v2323, 0.125
    %v6976 = vmul.f32 %v2480, 0.125
    %v6977 = vmul.f32 %v2482, 0.125
    %v6978 = vmul.f32 %v2166, 0.125
    %v6979 = vmul.f32 %v2168, 0.125
    %v6980 = vmul.f32 %v2325, 0.125
    %v6981 = vmul.f32 %v2327, 0.125
    %v6982 = vmul.f32 %v2484, 0.125
    %v6983 = vmul.f32 %v2486, 0.125
    %v6984 = vmul.f32 %v2172, 0.125
    %v6985 = vmul.f32 %v2174, 0.125
    %v6986 = vmul.f32 %v2331, 0.125
    %v6987 = vmul.f32 %v2333, 0.125
    %v6988 = vmul.f32 %v2490, 0.125
    %v6989 = vmul.f32 %v2492, 0.125
    %v6990 = vmul.f32 %v2176, 0.125
    %v6991 = vmul.f32 %v2178, 0.125
    %v6992 = vmul.f32 %v2335, 0.125
    %v6993 = vmul.f32 %v2337, 0.125
    %v6994 = vmul.f32 %v2494, 0.125
    %v6995 = vmul.f32 %v2496, 0.125
    %v6996 = vpack.c.bf16 %v6978, %v6972
    %v6997 = vpack.c.bf16 %v6979, %v6973
    %v6998 = vpack.c.bf16 %v6980, %v6974
    %v6999 = vpack.c.bf16 %v6981, %v6975
    %v7000 = vpack.c.bf16 %v6982, %v6976
    %v7001 = vpack.c.bf16 %v6983, %v6977
    %v7002 = vpack.c.bf16 %v6990, %v6984
    %v7003 = vpack.c.bf16 %v6991, %v6985
    %v7004 = vpack.c.bf16 %v6992, %v6986
    %v7005 = vpack.c.bf16 %v6993, %v6987
    %v7006 = vpack.c.bf16 %v6994, %v6988
    %v7007 = vpack.c.bf16 %v6995, %v6989
    %v7020 = vunpack.c.l.b16 %v6996
    %v7021 = vunpack.c.l.b16 %v6997
    %v7022 = vunpack.c.l.b16 %v6998
    %v7023 = vunpack.c.l.b16 %v6999
    %v7024 = vunpack.c.l.b16 %v7000
    %v7025 = vunpack.c.l.b16 %v7001
    %v7026 = vunpack.c.h.b16 %v6996
    %v7027 = vunpack.c.h.b16 %v6997
    %v7028 = vunpack.c.h.b16 %v6998
    %v7029 = vunpack.c.h.b16 %v6999
    %v7030 = vunpack.c.h.b16 %v7000
    %v7031 = vunpack.c.h.b16 %v7001
    %v7032 = vunpack.c.l.b16 %v7002
    %v7033 = vunpack.c.l.b16 %v7003
    %v7034 = vunpack.c.l.b16 %v7004
    %v7035 = vunpack.c.l.b16 %v7005
    %v7036 = vunpack.c.l.b16 %v7006
    %v7037 = vunpack.c.l.b16 %v7007
    %v7038 = vunpack.c.h.b16 %v7002
    %v7039 = vunpack.c.h.b16 %v7003
    %v7040 = vunpack.c.h.b16 %v7004
    %v7041 = vunpack.c.h.b16 %v7005
    %v7042 = vunpack.c.h.b16 %v7006
    %v7043 = vunpack.c.h.b16 %v7007
    %v7044 = vpack.c.b16 %v7021, %v7020
    %v7045 = vpack.c.b16 %v7023, %v7022
    %v7046 = vpack.c.b16 %v7025, %v7024
    %v7047 = vpack.c.b16 %v7027, %v7026
    %v7048 = vpack.c.b16 %v7029, %v7028
    %v7049 = vpack.c.b16 %v7031, %v7030
    %v7050 = vpack.c.b16 %v7033, %v7032
    %v7051 = vpack.c.b16 %v7035, %v7034
    %v7052 = vpack.c.b16 %v7037, %v7036
    %v7053 = vpack.c.b16 %v7039, %v7038
    %v7054 = vpack.c.b16 %v7041, %v7040
    %v7055 = vpack.c.b16 %v7043, %v7042
    %7068 = vst [vmem:[#allocation17] sm:$0xff] %v7044
    %7069 = vst [vmem:[#allocation17 + $0x8] sm:$0xff] %v7045
    %7070 = vst [vmem:[#allocation17 + $0x10] sm:$0xff] %v7046
    %7071 = vst [vmem:[#allocation17 + $0x18] sm:$0xff] %v7047
    %7072 = vst [vmem:[#allocation17 + $0x20] sm:$0xff] %v7048
    %7073 = vst [vmem:[#allocation17 + $0x28] sm:$0xff] %v7049
    %7074 = vst [vmem:[#allocation17 + $0x30] sm:$0xff] %v7050
    %7075 = vst [vmem:[#allocation17 + $0x38] sm:$0xff] %v7051
    %7076 = vst [vmem:[#allocation17 + $0x40] sm:$0xff] %v7052
    %7077 = vst [vmem:[#allocation17 + $0x48] sm:$0xff] %v7053
    %7078 = vst [vmem:[#allocation17 + $0x50] sm:$0xff] %v7054
    %7079 = vst [vmem:[#allocation17 + $0x58] sm:$0xff] %v7055
    %v7080 = vpack.c.bf16 %v4403, %v4399
    %v7081 = vpack.c.bf16 %v4405, %v4401
    %v7082 = vpack.c.bf16 %v4562, %v4558
    %v7083 = vpack.c.bf16 %v4564, %v4560
    %v7084 = vpack.c.bf16 %v4721, %v4717
    %v7085 = vpack.c.bf16 %v4723, %v4719
    %v7086 = vpack.c.bf16 %v4413, %v4409
    %v7087 = vpack.c.bf16 %v4415, %v4411
    %v7088 = vpack.c.bf16 %v4572, %v4568
    %v7089 = vpack.c.bf16 %v4574, %v4570
    %v7090 = vpack.c.bf16 %v4731, %v4727
    %v7091 = vpack.c.bf16 %v4733, %v4729
    %v7104 = vunpack.c.l.b16 %v7080
    %v7105 = vunpack.c.l.b16 %v7081
    %v7106 = vunpack.c.l.b16 %v7082
    %v7107 = vunpack.c.l.b16 %v7083
    %v7108 = vunpack.c.l.b16 %v7084
    %v7109 = vunpack.c.l.b16 %v7085
    %v7110 = vunpack.c.h.b16 %v7080
    %v7111 = vunpack.c.h.b16 %v7081
    %v7112 = vunpack.c.h.b16 %v7082
    %v7113 = vunpack.c.h.b16 %v7083
    %v7114 = vunpack.c.h.b16 %v7084
    %v7115 = vunpack.c.h.b16 %v7085
    %v7116 = vunpack.c.l.b16 %v7086
    %v7117 = vunpack.c.l.b16 %v7087
    %v7118 = vunpack.c.l.b16 %v7088
    %v7119 = vunpack.c.l.b16 %v7089
    %v7120 = vunpack.c.l.b16 %v7090
    %v7121 = vunpack.c.l.b16 %v7091
    %v7122 = vunpack.c.h.b16 %v7086
    %v7123 = vunpack.c.h.b16 %v7087
    %v7124 = vunpack.c.h.b16 %v7088
    %v7125 = vunpack.c.h.b16 %v7089
    %v7126 = vunpack.c.h.b16 %v7090
    %v7127 = vunpack.c.h.b16 %v7091
    %v7128 = vpack.c.b16 %v7105, %v7104
    %v7129 = vpack.c.b16 %v7107, %v7106
    %v7130 = vpack.c.b16 %v7109, %v7108
    %v7131 = vpack.c.b16 %v7111, %v7110
    %v7132 = vpack.c.b16 %v7113, %v7112
    %v7133 = vpack.c.b16 %v7115, %v7114
    %v7134 = vpack.c.b16 %v7117, %v7116
    %v7135 = vpack.c.b16 %v7119, %v7118
    %v7136 = vpack.c.b16 %v7121, %v7120
    %v7137 = vpack.c.b16 %v7123, %v7122
    %v7138 = vpack.c.b16 %v7125, %v7124
    %v7139 = vpack.c.b16 %v7127, %v7126
    %7152 = vst [vmem:[#allocation18] sm:$0xff] %v7128
    %7153 = vst [vmem:[#allocation18 + $0x8] sm:$0xff] %v7129
    %7154 = vst [vmem:[#allocation18 + $0x10] sm:$0xff] %v7130
    %7155 = vst [vmem:[#allocation18 + $0x18] sm:$0xff] %v7131
    %7156 = vst [vmem:[#allocation18 + $0x20] sm:$0xff] %v7132
    %7157 = vst [vmem:[#allocation18 + $0x28] sm:$0xff] %v7133
    %7158 = vst [vmem:[#allocation18 + $0x30] sm:$0xff] %v7134
    %7159 = vst [vmem:[#allocation18 + $0x38] sm:$0xff] %v7135
    %7160 = vst [vmem:[#allocation18 + $0x40] sm:$0xff] %v7136
    %7161 = vst [vmem:[#allocation18 + $0x48] sm:$0xff] %v7137
    %7162 = vst [vmem:[#allocation18 + $0x50] sm:$0xff] %v7138
    %7163 = vst [vmem:[#allocation18 + $0x58] sm:$0xff] %v7139
    %v7164 = vpack.c.bf16 %v6640, %v6636
    %v7165 = vpack.c.bf16 %v6642, %v6638
    %v7166 = vpack.c.bf16 %v6799, %v6795
    %v7167 = vpack.c.bf16 %v6801, %v6797
    %v7168 = vpack.c.bf16 %v6958, %v6954
    %v7169 = vpack.c.bf16 %v6960, %v6956
    %v7170 = vpack.c.bf16 %v6650, %v6646
    %v7171 = vpack.c.bf16 %v6652, %v6648
    %v7172 = vpack.c.bf16 %v6809, %v6805
    %v7173 = vpack.c.bf16 %v6811, %v6807
    %v7174 = vpack.c.bf16 %v6968, %v6964
    %v7175 = vpack.c.bf16 %v6970, %v6966
    %v7188 = vunpack.c.l.b16 %v7164
    %v7189 = vunpack.c.l.b16 %v7165
    %v7190 = vunpack.c.l.b16 %v7166
    %v7191 = vunpack.c.l.b16 %v7167
    %v7192 = vunpack.c.l.b16 %v7168
    %v7193 = vunpack.c.l.b16 %v7169
    %v7194 = vunpack.c.h.b16 %v7164
    %v7195 = vunpack.c.h.b16 %v7165
    %v7196 = vunpack.c.h.b16 %v7166
    %v7197 = vunpack.c.h.b16 %v7167
    %v7198 = vunpack.c.h.b16 %v7168
    %v7199 = vunpack.c.h.b16 %v7169
    %v7200 = vunpack.c.l.b16 %v7170
    %v7201 = vunpack.c.l.b16 %v7171
    %v7202 = vunpack.c.l.b16 %v7172
    %v7203 = vunpack.c.l.b16 %v7173
    %v7204 = vunpack.c.l.b16 %v7174
    %v7205 = vunpack.c.l.b16 %v7175
    %v7206 = vunpack.c.h.b16 %v7170
    %v7207 = vunpack.c.h.b16 %v7171
    %v7208 = vunpack.c.h.b16 %v7172
    %v7209 = vunpack.c.h.b16 %v7173
    %v7210 = vunpack.c.h.b16 %v7174
    %v7211 = vunpack.c.h.b16 %v7175
    %v7212 = vpack.c.b16 %v7189, %v7188
    %v7213 = vpack.c.b16 %v7191, %v7190
    %v7214 = vpack.c.b16 %v7193, %v7192
    %v7215 = vpack.c.b16 %v7195, %v7194
    %v7216 = vpack.c.b16 %v7197, %v7196
    %v7217 = vpack.c.b16 %v7199, %v7198
    %v7218 = vpack.c.b16 %v7201, %v7200
    %v7219 = vpack.c.b16 %v7203, %v7202
    %v7220 = vpack.c.b16 %v7205, %v7204
    %v7221 = vpack.c.b16 %v7207, %v7206
    %v7222 = vpack.c.b16 %v7209, %v7208
    %v7223 = vpack.c.b16 %v7211, %v7210
    %7236 = vst [vmem:[#allocation20] sm:$0xff] %v7212
    %7237 = vst [vmem:[#allocation20 + $0x8] sm:$0xff] %v7213
    %7238 = vst [vmem:[#allocation20 + $0x10] sm:$0xff] %v7214
    %7239 = vst [vmem:[#allocation20 + $0x18] sm:$0xff] %v7215
    %7240 = vst [vmem:[#allocation20 + $0x20] sm:$0xff] %v7216
    %7241 = vst [vmem:[#allocation20 + $0x28] sm:$0xff] %v7217
    %7242 = vst [vmem:[#allocation20 + $0x30] sm:$0xff] %v7218
    %7243 = vst [vmem:[#allocation20 + $0x38] sm:$0xff] %v7219
    %7244 = vst [vmem:[#allocation20 + $0x40] sm:$0xff] %v7220
    %7245 = vst [vmem:[#allocation20 + $0x48] sm:$0xff] %v7221
    %7246 = vst [vmem:[#allocation20 + $0x50] sm:$0xff] %v7222
    %7247 = vst [vmem:[#allocation20 + $0x58] sm:$0xff] %v7223
    // Predicated region
    $region74: #{tpu_custom_call.1} parent=1 // pred_check
      _
    $region75: #{tpu_custom_call.1} parent=1 // pred_check_branch
      %7249 = sbr.rel (0) target = $region77
    $region76: #{tpu_custom_call.1} parent=1 // pred_region
      %s7251 = ssub.s32 1536, 1536
      %7252 = vsyncadd [#allocation4], %s7251
      %s7253 = sshll.u32 [#allocation17], 4
      %s7254 = int_to_ptr.vmem [resolvable:$true] %s7253
      %7259 = dma.vmem_to_hbm [thread:$0]  %s7254, 1536, %s9, [#allocation4], 384, 384, 24
    $region77: #{tpu_custom_call.1} parent=1 // pred_fallthru
      _
    // Predicated region
    $region78: #{tpu_custom_call.1} parent=1 // pred_check
      _
    $region79: #{tpu_custom_call.1} parent=1 // pred_check_branch
      %7261 = sbr.rel (0) target = $region81
    $region80: #{tpu_custom_call.1} parent=1 // pred_region
      %s7263 = ssub.s32 1536, 1536
      %7264 = vsyncadd [#allocation19], %s7263
      %s7265 = sshll.u32 [#allocation18], 4
      %s7266 = int_to_ptr.vmem [resolvable:$true] %s7265
      %7271 = dma.vmem_to_hbm [thread:$0]  %s7266, 1536, %s10, [#allocation19], 384, 384, 24
    $region81: #{tpu_custom_call.1} parent=1 // pred_fallthru
      _
    // Predicated region
    $region82: #{tpu_custom_call.1} parent=1 // pred_check
      _
    $region83: #{tpu_custom_call.1} parent=1 // pred_check_branch
      %7273 = sbr.rel (0) target = $region85
    $region84: #{tpu_custom_call.1} parent=1 // pred_region
      %s7275 = ssub.s32 1536, 1536
      %7276 = vsyncadd [#allocation19], %s7275
      %s7277 = sshll.u32 [#allocation20], 4
      %s7278 = int_to_ptr.vmem [resolvable:$true] %s7277
      %7283 = dma.vmem_to_hbm [thread:$0]  %s7278, 1536, %s11, [#allocation19], 384, 384, 24
    $region85: #{tpu_custom_call.1} parent=1 // pred_fallthru
      _
    // Predicated region
    $region86: #{tpu_custom_call.1} parent=1 // pred_check
      _
    $region87: #{tpu_custom_call.1} parent=1 // pred_check_branch
      %7285 = sbr.rel (0) target = $region89
    $region88: #{tpu_custom_call.1} parent=1 // pred_region
      %7286 = dma.done [#allocation4], 1536
    $region89: #{tpu_custom_call.1} parent=1 // pred_fallthru
      _
    // Predicated region
    $region90: #{tpu_custom_call.1} parent=1 // pred_check
      _
    $region91: #{tpu_custom_call.1} parent=1 // pred_check_branch
      %7288 = sbr.rel (0) target = $region93
    $region92: #{tpu_custom_call.1} parent=1 // pred_region
      %7289 = dma.done [#allocation19], 1536
    $region93: #{tpu_custom_call.1} parent=1 // pred_fallthru
      _
    // Predicated region
    $region94: #{tpu_custom_call.1} parent=1 // pred_check
      _
    $region95: #{tpu_custom_call.1} parent=1 // pred_check_branch
      %7291 = sbr.rel (0) target = $region97
    $region96: #{tpu_custom_call.1} parent=1 // pred_region
      %7292 = dma.done [#allocation19], 1536
    $region97: #{tpu_custom_call.1} parent=1 // pred_fallthru
      _
    %7293 = vsyncpa [#allocation3], 1
    %7294 = vsyncpa [#allocation6], 1
    %7295 = vsyncpa [#allocation9], 1
    %7296 = vsyncpa [#allocation12], 1
    %7297 = vsyncpa [#allocation15], 1
    %7298 = vsyncpa [#allocation4], 1
    %7299 = vsyncpa [#allocation19], 1

</llo_original>
